<compile_context>
chip_gen: v7x
topology: tpu7x:2x2x1
jax: 0.10.0
libtpu: 0.0.40
codegen_flags: <defaults>
</compile_context>

<pallas_src>
import functools

import jax
import jax.numpy as jnp
from jax.experimental import pallas as pl
from jax.experimental.pallas import tpu as pltpu

# ---------------- config (small shapes consistent with CAViT.__init__) -------
B = 2
IN_CH = 16            # in_channels
OUT_CH = 32           # out_channels (== embed_dim so global + local can be added)
EMBED = 32            # embed_dim
IMG = 16              # img_size  (H = W = IMG)
RED = 8               # reduction inside LocalContextExtractor
MLP_HID = 4 * EMBED   # 128
N_TOK = IMG * IMG     # 256
PAD = 32              # lane padding for the shifted-slice im2col (>= 17)


# ============================ fused Pallas kernel =============================

def _cavit_kernel(x_ref, weff_ref, bmap_ref, mask_ref, fc1_ref, fc2t_ref,
                  pew_ref, csf_ref, csi_ref, kr_ref, ki_ref,
                  mw1_ref, mb1_ref, mw2_ref, vcol_ref, clw_ref,
                  o_ref,
                  im1_ref, im2_ref,
                  *, h, w, cin, cemb):
    n = h * w

    def col(i):                                      # (cemb, 1) bias/scale column
        return vcol_ref[:, i:i + 1]

    def layer_norm(t, gi, bi):                       # t: (cemb, n); per-token over channels
        mu = jnp.mean(t, axis=0, keepdims=True)
        var = jnp.mean((t - mu) ** 2, axis=0, keepdims=True)
        return (t - mu) * jax.lax.rsqrt(var + 1e-5) * col(gi) + col(bi)

    def build_im2col(tc, ci, dst_ref):
        # tc: (ci, n) f32 channel-first tokens (row-major y*w + x).
        # Static lane shift + per-tap validity mask == zero-padded 3x3
        # neighborhood; store bf16 tap blocks (sublane-aligned) into dst_ref.
        zpad = jnp.zeros((ci, PAD), jnp.float32)
        tp = jnp.concatenate([zpad, tc, zpad], axis=1)          # (ci, n + 2*PAD)
        for t in range(9):
            dy, dx = divmod(t, 3)
            s = (dy - 1) * w + (dx - 1)
            blk = tp[:, PAD + s:PAD + s + n] * mask_ref[t:t + 1, :]
            dst_ref[t * ci:(t + 1) * ci, :] = blk.astype(jnp.bfloat16)

    # ---------------- global branch (representative SpectFormer block) -------
    xb = x_ref[0].astype(jnp.bfloat16)                                  # (cin, n)
    tok = jnp.dot(pew_ref[...], xb,
                  preferred_element_type=jnp.float32) + col(0)          # patch embed
    hn = layer_norm(tok, 1, 2)
    # rfft2 -> complex gate -> irfft2 as two fused DFT matmuls:
    #   [fr | fi] = hn @ [C2 | S2]   ;   gate = [yr | yi] @ [C2 ; S2]
    f = jnp.dot(hn.astype(jnp.bfloat16), csf_ref[...],
                preferred_element_type=jnp.float32)                     # (cemb, 2n)
    fr = f[:, :n]
    fi = f[:, n:]
    yr = fr * kr_ref[...] - fi * ki_ref[...]
    yi = fr * ki_ref[...] + fi * kr_ref[...]
    ystack = jnp.concatenate([yr, yi], axis=1).astype(jnp.bfloat16)     # (cemb, 2n)
    gate = jnp.dot(ystack, csi_ref[...], preferred_element_type=jnp.float32)
    tok = tok + gate
    hm = layer_norm(tok, 3, 4)
    hm = jnp.dot(mw1_ref[...], hm.astype(jnp.bfloat16),
                 preferred_element_type=jnp.float32) + mb1_ref[...]     # (hid, n)
    # TODO(synk): PyTorch nn.GELU default is exact erf; tanh-approx GELU kept
    # here (erf lowering in Mosaic is not guaranteed); difference is ~1e-3.
    hm = jax.nn.gelu(hm).astype(jnp.bfloat16)                           # drop f32 hidden early
    hm = jnp.dot(mw2_ref[...], hm, preferred_element_type=jnp.float32) + col(5)
    tok = tok + hm
    tok = layer_norm(tok, 6, 7)                                         # (cemb, n)

    # ---------------- local branch: composed conv chain + channel SE ---------
    build_im2col(x_ref[0], cin, im1_ref)
    conv = jnp.dot(weff_ref[...], im1_ref[...],
                   preferred_element_type=jnp.float32) + bmap_ref[...]  # (cemb, n)
    conv = jnp.where(conv >= 0.0, conv, 0.2 * conv)                     # LeakyReLU(0.2)
    # squeeze-excite on the VPU/XLU only (serial dependence chain, keep off MXU)
    pooled = jnp.mean(conv, axis=1, keepdims=True)                      # (cemb, 1)
    s1 = jnp.maximum(jnp.sum(fc1_ref[...] * pooled, axis=0, keepdims=True), 0.0)
    s2 = jnp.sum(fc2t_ref[...] * s1, axis=1, keepdims=True)             # (cemb, 1)
    local = conv * jax.nn.sigmoid(s2)

    # ---------------- fuse branches + conv_last (lane-dense output) ----------
    feat = tok + local                                                  # (cemb, n)
    build_im2col(feat, cemb, im2_ref)
    out = jnp.dot(clw_ref[...], im2_ref[...],
                  preferred_element_type=jnp.float32) + col(8)          # (32, n)
    o_ref[0] = out.astype(o_ref.dtype)


# ============================ wrapper =========================================

def _const_spec(shape):
    nd = len(shape)
    return pl.BlockSpec(shape, lambda i, _nd=nd: (0,) * _nd)


def cavit_forward(x_nchw, c):
    b = x_nchw.shape[0]
    x = x_nchw.reshape(b, IN_CH, N_TOK).astype(jnp.float32)   # NCHW -> (b, C, H*W), free
    bf = lambda a: a.astype(jnp.bfloat16)
    consts = [bf(c["w_eff"]), c["bias_map"], c["mask"], c["fc1_w"], c["fc2t"],
              bf(c["pe_wT"]), bf(c["CS_fwd"]), bf(c["CS_inv"]), c["Kr"], c["Ki"],
              bf(c["mw1T"]), c["mb1"], bf(c["mw2T"]), c["vcol"], bf(c["cl_w"])]
    in_specs = [pl.BlockSpec((1, IN_CH, N_TOK), lambda i: (i, 0, 0))]
    in_specs += [_const_spec(a.shape) for a in consts]
    # NOTE: when IMG/EMBED scale up, mark the constant specs pipeline_mode=
    # pl.Buffered(1) (same block every step) to avoid double-buffering them.
    kernel = functools.partial(_cavit_kernel, h=IMG, w=IMG, cin=IN_CH, cemb=EMBED)
    out = pl.pallas_call(
        kernel,
        out_shape=jax.ShapeDtypeStruct((b, 32, N_TOK), jnp.float32),
        grid_spec=pltpu.PrefetchScalarGridSpec(
            num_scalar_prefetch=0,
            grid=(b,),                                   # 2 even steps -> one per TC on v7x
            in_specs=in_specs,
            out_specs=pl.BlockSpec((1, 32, N_TOK), lambda i: (i, 0, 0)),
            scratch_shapes=[
                pltpu.VMEM((9 * IN_CH, N_TOK), jnp.bfloat16),   # im2col, local conv
                pltpu.VMEM((9 * EMBED, N_TOK), jnp.bfloat16),   # im2col, conv_last
            ]),
        compiler_params=pltpu.CompilerParams(
            dimension_semantics=("parallel",)),
    )(x, *consts)
    return out.reshape(b, 32, IMG, IMG)                 # lane-dense (32, 256) -> NCHW, free


# ============================ params & init-time fusion ======================

def init_params(key):
    ks = jax.random.split(key, 16)

    def w(k, shape, scale=0.1):
        return scale * jax.random.normal(k, shape, dtype=jnp.float32)

    cr = IN_CH // RED         # 2
    fr = OUT_CH // RED        # 4
    p = {}
    # LocalContextExtractor
    p["c1_w"] = w(ks[0], (IN_CH, cr), 0.5);    p["c1_b"] = w(ks[1], (cr,), 0.5)
    p["c2_w"] = w(ks[2], (3, 3, cr, cr), 0.5).reshape(9 * cr, cr)   # tap-major (ky, kx)
    p["c2_b"] = w(ks[3], (cr,), 0.5)
    p["c3_w"] = w(ks[4], (cr, OUT_CH), 0.5);   p["c3_b"] = w(ks[5], (OUT_CH,), 0.5)
    p["fc1_w"] = w(ks[6], (OUT_CH, fr), 0.3);  p["fc2_w"] = w(ks[7], (fr, OUT_CH), 0.3)
    # SpectFormer (representative single spectral block)
    # TODO(synk): SpectFormer source was not provided; this block (patch-embed +
    # spectral gating + MLP + norms) matches the (B, embed_dim, H, W) contract.
    p["pe_w"] = w(ks[8], (IN_CH, EMBED), 0.25); p["pe_b"] = w(ks[9], (EMBED,), 0.1)
    p["n1_g"] = jnp.ones((EMBED,), jnp.float32); p["n1_b"] = jnp.zeros((EMBED,), jnp.float32)
    p["filt_r"] = w(ks[10], (IMG, IMG // 2 + 1, EMBED), 0.2)
    p["filt_i"] = w(ks[11], (IMG, IMG // 2 + 1, EMBED), 0.2)
    p["n2_g"] = jnp.ones((EMBED,), jnp.float32); p["n2_b"] = jnp.zeros((EMBED,), jnp.float32)
    p["mlp_w1"] = w(ks[12], (EMBED, MLP_HID), 0.1)
    p["mlp_b1"] = jnp.zeros((MLP_HID,), jnp.float32)
    p["mlp_w2"] = w(ks[13], (MLP_HID, EMBED), 0.1)
    p["mlp_b2"] = jnp.zeros((EMBED,), jnp.float32)
    p["nf_g"] = jnp.ones((EMBED,), jnp.float32); p["nf_b"] = jnp.zeros((EMBED,), jnp.float32)
    # conv_last: Conv2d(embed_dim, 32, 3, 1, 1)
    p["cl_w"] = w(ks[14], (3, 3, EMBED, 32), 0.1).reshape(9 * EMBED, 32)    # tap-major
    p["cl_b"] = w(ks[15], (32,), 0.1)
    return p


def prepare_constants(p):
    """Init-time fusion (f32 masters; matmul weights are cast to bf16 in the wrapper):
    compose the 1x1->3x3->1x1 chain into one channel-first 3x3 weight plus an exact
    boundary-aware bias map, build the stacked DFT matrices, Hermitian-extend the
    half-spectrum filter, build the 3x3 validity masks, and pack the small vectors."""
    cr = IN_CH // RED
    c3 = p["c3_w"]                                   # (cr, OUT_CH)
    w2 = p["c2_w"]                                   # (9*cr, cr) tap-major
    taps_w, taps_b = [], []
    for t in range(9):
        w2t = w2[t * cr:(t + 1) * cr]                # (cr, cr)
        taps_w.append((p["c1_w"] @ w2t @ c3).T)      # (OUT_CH, IN_CH) channel-first
        taps_b.append(p["c1_b"] @ w2t @ c3)          # (OUT_CH,)
    w_eff = jnp.concatenate(taps_w, axis=1)          # (OUT_CH, 9*IN_CH)
    tap_b = jnp.stack(taps_b, 0)                     # (9, OUT_CH)

    # per-tap validity masks (zero padding) + exact boundary-aware bias
    # (conv1's bias only contributes for in-bounds taps -- padding is after conv1)
    ii, jj = jnp.meshgrid(jnp.arange(IMG), jnp.arange(IMG), indexing="ij")
    masks = []
    bias_map = jnp.broadcast_to(p["c2_b"] @ c3 + p["c3_b"], (IMG, IMG, OUT_CH))
    for t in range(9):
        dy, dx = divmod(t, 3)
        valid = ((ii + dy - 1 >= 0) & (ii + dy - 1 < IMG) &
                 (jj + dx - 1 >= 0) & (jj + dx - 1 < IMG)).astype(jnp.float32)
        masks.append(valid.reshape(N_TOK))
        bias_map = bias_map + valid[:, :, None] * tap_b[t][None, None, :]
    mask = jnp.stack(masks, 0)                       # (9, N_TOK)
    bias_map = bias_map.reshape(N_TOK, OUT_CH).T     # (OUT_CH, N_TOK) channel-first

    # orthonormal 2-D 16-point DFT; C2/S2 are symmetric so channel-first right-
    # multiplication is exact.  Stacked forms fuse the two matmul pairs into one each.
    idx = jnp.arange(IMG)
    f1 = jnp.exp(-2j * jnp.pi * jnp.outer(idx, idx) / IMG) / jnp.sqrt(jnp.float32(IMG))
    f2 = jnp.kron(f1, f1)
    C2 = jnp.real(f2).astype(jnp.float32)
    S2 = jnp.imag(f2).astype(jnp.float32)
    CS_fwd = jnp.concatenate([C2, S2], axis=1)       # (N_TOK, 2*N_TOK)
    CS_inv = jnp.concatenate([C2, S2], axis=0)       # (2*N_TOK, N_TOK)

    # Hermitian-extend the half-spectrum filter -> full spectrum (reproduces
    # rfft2 -> multiply -> irfft2 with norm="ortho")
    kh = p["filt_r"] + 1j * p["filt_i"]              # (IMG, IMG//2+1, EMBED)
    kfull = jnp.zeros((IMG, IMG, EMBED), jnp.complex64)
    kfull = kfull.at[:, :IMG // 2 + 1, :].set(kh)
    w_idx = jnp.arange(1, IMG // 2)
    h_idx = (-jnp.arange(IMG)) % IMG
    kfull = kfull.at[:, IMG - w_idx, :].set(jnp.conj(kh[h_idx][:, w_idx, :]))
    Kr = jnp.real(kfull).reshape(N_TOK, EMBED).T.astype(jnp.float32)   # (EMBED, N_TOK)
    Ki = jnp.imag(kfull).reshape(N_TOK, EMBED).T.astype(jnp.float32)

    # pack per-channel (32,) vectors as columns:
    # [pe_b, n1_g, n1_b, n2_g, n2_b, mlp_b2, nf_g, nf_b, cl_b]
    vcol = jnp.stack([p["pe_b"], p["n1_g"], p["n1_b"], p["n2_g"], p["n2_b"],
                      p["mlp_b2"], p["nf_g"], p["nf_b"], p["cl_b"]], axis=1)

    return dict(w_eff=w_eff, bias_map=bias_map, mask=mask,
                fc1_w=p["fc1_w"], fc2t=p["fc2_w"].T,
                pe_wT=p["pe_w"].T, CS_fwd=CS_fwd, CS_inv=CS_inv,
                C2=C2, S2=S2, Kr=Kr, Ki=Ki,
                mw1T=p["mlp_w1"].T, mb1=p["mlp_b1"].reshape(MLP_HID, 1),
                mw2T=p["mlp_w2"].T, vcol=vcol, cl_w=p["cl_w"].T)


# ============================ pure-JAX f32 reference ==========================

def reference_forward(x_nchw, c):
    """Independent f32 reference (2-D zero-padded convs, token-first global branch)."""
    def im2col2d(t2d, ci):
        tp = jnp.pad(t2d, ((0, 0), (1, 1), (1, 1)))
        taps = []
        for t in range(9):
            dy, dx = divmod(t, 3)
            taps.append(tp[:, dy:dy + IMG, dx:dx + IMG].reshape(ci, N_TOK))
        return jnp.concatenate(taps, axis=0)

    def one(xc):                                             # (cin, h, w)
        conv = c["w_eff"] @ im2col2d(xc, IN_CH) + c["bias_map"]
        conv = jnp.where(conv >= 0.0, conv, 0.2 * conv)
        pooled = conv.mean(axis=1)
        s1 = jnp.maximum(pooled @ c["fc1_w"], 0.0)
        s2 = jax.nn.sigmoid(c["fc2t"] @ s1)
        local = conv * s2[:, None]

        def ln(t, gi, bi):                                   # token-first (n, emb)
            mu = t.mean(-1, keepdims=True)
            var = ((t - mu) ** 2).mean(-1, keepdims=True)
            return ((t - mu) * jax.lax.rsqrt(var + 1e-5) * c["vcol"][:, gi][None, :]
                    + c["vcol"][:, bi][None, :])

        xt = xc.reshape(IN_CH, N_TOK).T
        tok = xt @ c["pe_wT"].T + c["vcol"][:, 0][None, :]
        hn = ln(tok, 1, 2)
        fr = c["C2"] @ hn
        fi = c["S2"] @ hn
        krt, kit = c["Kr"].T, c["Ki"].T
        yr = fr * krt - fi * kit
        yi = fr * kit + fi * krt
        tok = tok + c["C2"] @ yr + c["S2"] @ yi
        hm = ln(tok, 3, 4) @ c["mw1T"].T + c["mb1"][:, 0][None, :]
        hm = jax.nn.gelu(hm)                                 # same (tanh) GELU as kernel
        hm = hm @ c["mw2T"].T + c["vcol"][:, 5][None, :]
        tok = tok + hm
        tok = ln(tok, 6, 7)

        feat = tok.T + local                                 # (32, 256)
        col2 = im2col2d(feat.reshape(EMBED, IMG, IMG), EMBED)
        return c["cl_w"] @ col2 + c["vcol"][:, 8][:, None]   # (32, 256)

    outs = jnp.stack([one(x_nchw[i]) for i in range(x_nchw.shape[0])])
    return outs.reshape(x_nchw.shape[0], 32, IMG, IMG)


# ============================ main ===========================================

if __name__ == "__main__":
    key = jax.random.PRNGKey(0)
    k_x, k_p = jax.random.split(key)
    x = jax.random.normal(k_x, (B, IN_CH, IMG, IMG), dtype=jnp.float32)   # NCHW input
    params = init_params(k_p)
    consts = prepare_constants(params)

    fwd = jax.jit(lambda xx: cavit_forward(xx, consts))
    out = fwd(x)
    jax.block_until_ready(out)

    assert out.shape == (B, 32, IMG, IMG), out.shape
    assert bool(jnp.all(jnp.isfinite(out)))

    # semantics check vs the independent f32 reference (bf16 MXU -> relaxed tol)
    ref = reference_forward(x, consts)
    scale = float(jnp.max(jnp.abs(ref))) + 1e-6
    rel = float(jnp.max(jnp.abs(out - ref))) / scale
    assert rel < 0.15, f"kernel/reference mismatch: rel-to-scale error {rel:.4f}"

    print("KERNEL_OK")
</pallas_src>

<mosaic_0001>
module attributes {stable_mosaic.version = 11 : i64} {
  func.func @_cavit_kernel(%arg0: i32, %arg1: memref<1x16x256xf32, #tpu.memory_space<vmem>>, %arg2: memref<32x144xbf16, #tpu.memory_space<vmem>>, %arg3: memref<32x256xf32, #tpu.memory_space<vmem>>, %arg4: memref<9x256xf32, #tpu.memory_space<vmem>>, %arg5: memref<32x4xf32, #tpu.memory_space<vmem>>, %arg6: memref<32x4xf32, #tpu.memory_space<vmem>>, %arg7: memref<32x16xbf16, #tpu.memory_space<vmem>>, %arg8: memref<256x512xbf16, #tpu.memory_space<vmem>>, %arg9: memref<512x256xbf16, #tpu.memory_space<vmem>>, %arg10: memref<32x256xf32, #tpu.memory_space<vmem>>, %arg11: memref<32x256xf32, #tpu.memory_space<vmem>>, %arg12: memref<128x32xbf16, #tpu.memory_space<vmem>>, %arg13: memref<128x1xf32, #tpu.memory_space<vmem>>, %arg14: memref<32x128xbf16, #tpu.memory_space<vmem>>, %arg15: memref<32x9xf32, #tpu.memory_space<vmem>>, %arg16: memref<32x288xbf16, #tpu.memory_space<vmem>>, %arg17: memref<1x32x256xf32, #tpu.memory_space<vmem>>, %arg18: memref<144x256xbf16, #tpu.memory_space<vmem>>, %arg19: memref<288x256xbf16, #tpu.memory_space<vmem>>) attributes {dimension_semantics = [#tpu.dimension_semantics<parallel>], iteration_bounds = array<i64: 2>, scalar_prefetch = 0 : i64, scratch_operands = 2 : i64, tpu.core_type = #tpu.core_type<tc>, window_params = [{transform_indices = @transform_0, window_bounds = array<i64: 1, 16, 256>}, {pipeline_mode = #tpu.pipeline_mode<synchronous>, transform_indices = @transform_1, window_bounds = array<i64: 32, 144>}, {pipeline_mode = #tpu.pipeline_mode<synchronous>, transform_indices = @transform_2, window_bounds = array<i64: 32, 256>}, {pipeline_mode = #tpu.pipeline_mode<synchronous>, transform_indices = @transform_3, window_bounds = array<i64: 9, 256>}, {pipeline_mode = #tpu.pipeline_mode<synchronous>, transform_indices = @transform_4, window_bounds = array<i64: 32, 4>}, {pipeline_mode = #tpu.pipeline_mode<synchronous>, transform_indices = @transform_5, window_bounds = array<i64: 32, 4>}, {pipeline_mode = #tpu.pipeline_mode<synchronous>, transform_indices = @transform_6, window_bounds = array<i64: 32, 16>}, {pipeline_mode = #tpu.pipeline_mode<synchronous>, transform_indices = @transform_7, window_bounds = array<i64: 256, 512>}, {pipeline_mode = #tpu.pipeline_mode<synchronous>, transform_indices = @transform_8, window_bounds = array<i64: 512, 256>}, {pipeline_mode = #tpu.pipeline_mode<synchronous>, transform_indices = @transform_9, window_bounds = array<i64: 32, 256>}, {pipeline_mode = #tpu.pipeline_mode<synchronous>, transform_indices = @transform_10, window_bounds = array<i64: 32, 256>}, {pipeline_mode = #tpu.pipeline_mode<synchronous>, transform_indices = @transform_11, window_bounds = array<i64: 128, 32>}, {pipeline_mode = #tpu.pipeline_mode<synchronous>, transform_indices = @transform_12, window_bounds = array<i64: 128, 1>}, {pipeline_mode = #tpu.pipeline_mode<synchronous>, transform_indices = @transform_13, window_bounds = array<i64: 32, 128>}, {pipeline_mode = #tpu.pipeline_mode<synchronous>, transform_indices = @transform_14, window_bounds = array<i64: 32, 9>}, {pipeline_mode = #tpu.pipeline_mode<synchronous>, transform_indices = @transform_15, window_bounds = array<i64: 32, 288>}, {transform_indices = @transform_16, window_bounds = array<i64: 1, 32, 256>}]} {
    %c0 = arith.constant 0 : index
    %c0_0 = arith.constant 0 : index
    %c0_1 = arith.constant 0 : index
    %0 = vector.load %arg1[%c0, %c0_0, %c0_1] : memref<1x16x256xf32, #tpu.memory_space<vmem>>, vector<1x16x256xf32>
    %1 = vector.shape_cast %0 : vector<1x16x256xf32> to vector<16x256xf32>
    %2 = arith.truncf %1 : vector<16x256xf32> to vector<16x256xbf16>
    %c0_2 = arith.constant 0 : index
    %c0_3 = arith.constant 0 : index
    %3 = vector.load %arg7[%c0_2, %c0_3] : memref<32x16xbf16, #tpu.memory_space<vmem>>, vector<32x16xbf16>
    %cst = arith.constant dense<0.000000e+00> : vector<32x256xf32>
    %4 = tpu.matmul %3, %2, %cst {dimension_numbers = #tpu.dot_dimension_numbers<[1], [0], [0], [1], [0, 0, 1, 1], [], []>} : vector<32x16xbf16>, vector<16x256xbf16>, vector<32x256xf32> -> vector<32x256xf32>
    %c0_4 = arith.constant 0 : index
    %c0_5 = arith.constant 0 : index
    %5 = vector.load %arg15[%c0_4, %c0_5] : memref<32x9xf32, #tpu.memory_space<vmem>>, vector<32x1xf32>
    %6 = vector.broadcast %5 : vector<32x1xf32> to vector<32x256xf32>
    %7 = arith.addf %4, %6 : vector<32x256xf32>
    %cst_6 = arith.constant dense<0.000000e+00> : vector<256xf32>
    %8 = vector.multi_reduction <add>, %7, %cst_6 [0] : vector<32x256xf32> to vector<256xf32>
    %9 = vector.shape_cast %8 : vector<256xf32> to vector<1x256xf32>
    %cst_7 = arith.constant 3.200000e+01 : f32
    %10 = vector.broadcast %cst_7 : f32 to vector<1x256xf32>
    %11 = arith.divf %9, %10 : vector<1x256xf32>
    %12 = vector.broadcast %11 : vector<1x256xf32> to vector<32x256xf32>
    %13 = arith.subf %7, %12 : vector<32x256xf32>
    %14 = arith.mulf %13, %13 : vector<32x256xf32>
    %cst_8 = arith.constant dense<0.000000e+00> : vector<256xf32>
    %15 = vector.multi_reduction <add>, %14, %cst_8 [0] : vector<32x256xf32> to vector<256xf32>
    %16 = vector.shape_cast %15 : vector<256xf32> to vector<1x256xf32>
    %cst_9 = arith.constant 3.200000e+01 : f32
    %17 = vector.broadcast %cst_9 : f32 to vector<1x256xf32>
    %18 = arith.divf %16, %17 : vector<1x256xf32>
    %19 = vector.broadcast %11 : vector<1x256xf32> to vector<32x256xf32>
    %20 = arith.subf %7, %19 : vector<32x256xf32>
    %cst_10 = arith.constant 9.99999974E-6 : f32
    %21 = vector.broadcast %cst_10 : f32 to vector<1x256xf32>
    %22 = arith.addf %18, %21 : vector<1x256xf32>
    %23 = math.rsqrt %22 : vector<1x256xf32>
    %24 = vector.broadcast %23 : vector<1x256xf32> to vector<32x256xf32>
    %25 = arith.mulf %20, %24 : vector<32x256xf32>
    %c0_11 = arith.constant 0 : index
    %c1 = arith.constant 1 : index
    %26 = vector.load %arg15[%c0_11, %c1] : memref<32x9xf32, #tpu.memory_space<vmem>>, vector<32x1xf32>
    %27 = vector.broadcast %26 : vector<32x1xf32> to vector<32x256xf32>
    %28 = arith.mulf %25, %27 : vector<32x256xf32>
    %c0_12 = arith.constant 0 : index
    %c2 = arith.constant 2 : index
    %29 = vector.load %arg15[%c0_12, %c2] : memref<32x9xf32, #tpu.memory_space<vmem>>, vector<32x1xf32>
    %30 = vector.broadcast %29 : vector<32x1xf32> to vector<32x256xf32>
    %31 = arith.addf %28, %30 : vector<32x256xf32>
    %32 = arith.truncf %31 : vector<32x256xf32> to vector<32x256xbf16>
    %c0_13 = arith.constant 0 : index
    %c0_14 = arith.constant 0 : index
    %33 = vector.load %arg8[%c0_13, %c0_14] : memref<256x512xbf16, #tpu.memory_space<vmem>>, vector<256x512xbf16>
    %cst_15 = arith.constant dense<0.000000e+00> : vector<32x512xf32>
    %34 = tpu.matmul %32, %33, %cst_15 {dimension_numbers = #tpu.dot_dimension_numbers<[1], [0], [0], [1], [0, 0, 1, 1], [], []>} : vector<32x256xbf16>, vector<256x512xbf16>, vector<32x512xf32> -> vector<32x512xf32>
    %35 = vector.extract_strided_slice %34 {offsets = [0, 0], sizes = [32, 256], strides = [1, 1]} : vector<32x512xf32> to vector<32x256xf32>
    %36 = vector.extract_strided_slice %34 {offsets = [0, 256], sizes = [32, 256], strides = [1, 1]} : vector<32x512xf32> to vector<32x256xf32>
    %c0_16 = arith.constant 0 : index
    %c0_17 = arith.constant 0 : index
    %37 = vector.load %arg10[%c0_16, %c0_17] : memref<32x256xf32, #tpu.memory_space<vmem>>, vector<32x256xf32>
    %38 = arith.mulf %35, %37 : vector<32x256xf32>
    %c0_18 = arith.constant 0 : index
    %c0_19 = arith.constant 0 : index
    %39 = vector.load %arg11[%c0_18, %c0_19] : memref<32x256xf32, #tpu.memory_space<vmem>>, vector<32x256xf32>
    %40 = arith.mulf %36, %39 : vector<32x256xf32>
    %41 = arith.subf %38, %40 : vector<32x256xf32>
    %c0_20 = arith.constant 0 : index
    %c0_21 = arith.constant 0 : index
    %42 = vector.load %arg11[%c0_20, %c0_21] : memref<32x256xf32, #tpu.memory_space<vmem>>, vector<32x256xf32>
    %43 = arith.mulf %35, %42 : vector<32x256xf32>
    %c0_22 = arith.constant 0 : index
    %c0_23 = arith.constant 0 : index
    %44 = vector.load %arg10[%c0_22, %c0_23] : memref<32x256xf32, #tpu.memory_space<vmem>>, vector<32x256xf32>
    %45 = arith.mulf %36, %44 : vector<32x256xf32>
    %46 = arith.addf %43, %45 : vector<32x256xf32>
    %47 = tpu.concatenate %41, %46 in 1 : vector<32x256xf32>, vector<32x256xf32> -> vector<32x512xf32>
    %48 = arith.truncf %47 : vector<32x512xf32> to vector<32x512xbf16>
    %c0_24 = arith.constant 0 : index
    %c0_25 = arith.constant 0 : index
    %49 = vector.load %arg9[%c0_24, %c0_25] : memref<512x256xbf16, #tpu.memory_space<vmem>>, vector<512x256xbf16>
    %cst_26 = arith.constant dense<0.000000e+00> : vector<32x256xf32>
    %50 = tpu.matmul %48, %49, %cst_26 {dimension_numbers = #tpu.dot_dimension_numbers<[1], [0], [0], [1], [0, 0, 1, 1], [], []>} : vector<32x512xbf16>, vector<512x256xbf16>, vector<32x256xf32> -> vector<32x256xf32>
    %51 = arith.addf %7, %50 : vector<32x256xf32>
    %cst_27 = arith.constant dense<0.000000e+00> : vector<256xf32>
    %52 = vector.multi_reduction <add>, %51, %cst_27 [0] : vector<32x256xf32> to vector<256xf32>
    %53 = vector.shape_cast %52 : vector<256xf32> to vector<1x256xf32>
    %cst_28 = arith.constant 3.200000e+01 : f32
    %54 = vector.broadcast %cst_28 : f32 to vector<1x256xf32>
    %55 = arith.divf %53, %54 : vector<1x256xf32>
    %56 = vector.broadcast %55 : vector<1x256xf32> to vector<32x256xf32>
    %57 = arith.subf %51, %56 : vector<32x256xf32>
    %58 = arith.mulf %57, %57 : vector<32x256xf32>
    %cst_29 = arith.constant dense<0.000000e+00> : vector<256xf32>
    %59 = vector.multi_reduction <add>, %58, %cst_29 [0] : vector<32x256xf32> to vector<256xf32>
    %60 = vector.shape_cast %59 : vector<256xf32> to vector<1x256xf32>
    %cst_30 = arith.constant 3.200000e+01 : f32
    %61 = vector.broadcast %cst_30 : f32 to vector<1x256xf32>
    %62 = arith.divf %60, %61 : vector<1x256xf32>
    %63 = vector.broadcast %55 : vector<1x256xf32> to vector<32x256xf32>
    %64 = arith.subf %51, %63 : vector<32x256xf32>
    %cst_31 = arith.constant 9.99999974E-6 : f32
    %65 = vector.broadcast %cst_31 : f32 to vector<1x256xf32>
    %66 = arith.addf %62, %65 : vector<1x256xf32>
    %67 = math.rsqrt %66 : vector<1x256xf32>
    %68 = vector.broadcast %67 : vector<1x256xf32> to vector<32x256xf32>
    %69 = arith.mulf %64, %68 : vector<32x256xf32>
    %c0_32 = arith.constant 0 : index
    %c3 = arith.constant 3 : index
    %70 = vector.load %arg15[%c0_32, %c3] : memref<32x9xf32, #tpu.memory_space<vmem>>, vector<32x1xf32>
    %71 = vector.broadcast %70 : vector<32x1xf32> to vector<32x256xf32>
    %72 = arith.mulf %69, %71 : vector<32x256xf32>
    %c0_33 = arith.constant 0 : index
    %c4 = arith.constant 4 : index
    %73 = vector.load %arg15[%c0_33, %c4] : memref<32x9xf32, #tpu.memory_space<vmem>>, vector<32x1xf32>
    %74 = vector.broadcast %73 : vector<32x1xf32> to vector<32x256xf32>
    %75 = arith.addf %72, %74 : vector<32x256xf32>
    %c0_34 = arith.constant 0 : index
    %c0_35 = arith.constant 0 : index
    %76 = vector.load %arg12[%c0_34, %c0_35] : memref<128x32xbf16, #tpu.memory_space<vmem>>, vector<128x32xbf16>
    %77 = arith.truncf %75 : vector<32x256xf32> to vector<32x256xbf16>
    %cst_36 = arith.constant dense<0.000000e+00> : vector<128x256xf32>
    %78 = tpu.matmul %76, %77, %cst_36 {dimension_numbers = #tpu.dot_dimension_numbers<[1], [0], [0], [1], [0, 0, 1, 1], [], []>} : vector<128x32xbf16>, vector<32x256xbf16>, vector<128x256xf32> -> vector<128x256xf32>
    %c0_37 = arith.constant 0 : index
    %c0_38 = arith.constant 0 : index
    %79 = vector.load %arg13[%c0_37, %c0_38] : memref<128x1xf32, #tpu.memory_space<vmem>>, vector<128x1xf32>
    %80 = vector.broadcast %79 : vector<128x1xf32> to vector<128x256xf32>
    %81 = arith.addf %78, %80 : vector<128x256xf32>
    %82 = arith.mulf %81, %81 : vector<128x256xf32>
    %83 = arith.mulf %81, %82 : vector<128x256xf32>
    %cst_39 = arith.constant 4.471500e-02 : f32
    %84 = vector.broadcast %cst_39 : f32 to vector<128x256xf32>
    %85 = arith.mulf %84, %83 : vector<128x256xf32>
    %86 = arith.addf %81, %85 : vector<128x256xf32>
    %cst_40 = arith.constant 0.797884583 : f32
    %87 = vector.broadcast %cst_40 : f32 to vector<128x256xf32>
    %88 = arith.mulf %87, %86 : vector<128x256xf32>
    %89 = math.tanh %88 : vector<128x256xf32>
    %cst_41 = arith.constant 1.000000e+00 : f32
    %90 = vector.broadcast %cst_41 : f32 to vector<128x256xf32>
    %91 = arith.addf %90, %89 : vector<128x256xf32>
    %cst_42 = arith.constant 5.000000e-01 : f32
    %92 = vector.broadcast %cst_42 : f32 to vector<128x256xf32>
    %93 = arith.mulf %92, %91 : vector<128x256xf32>
    %94 = arith.mulf %81, %93 : vector<128x256xf32>
    %95 = arith.truncf %94 : vector<128x256xf32> to vector<128x256xbf16>
    %c0_43 = arith.constant 0 : index
    %c0_44 = arith.constant 0 : index
    %96 = vector.load %arg14[%c0_43, %c0_44] : memref<32x128xbf16, #tpu.memory_space<vmem>>, vector<32x128xbf16>
    %cst_45 = arith.constant dense<0.000000e+00> : vector<32x256xf32>
    %97 = tpu.matmul %96, %95, %cst_45 {dimension_numbers = #tpu.dot_dimension_numbers<[1], [0], [0], [1], [0, 0, 1, 1], [], []>} : vector<32x128xbf16>, vector<128x256xbf16>, vector<32x256xf32> -> vector<32x256xf32>
    %c0_46 = arith.constant 0 : index
    %c5 = arith.constant 5 : index
    %98 = vector.load %arg15[%c0_46, %c5] : memref<32x9xf32, #tpu.memory_space<vmem>>, vector<32x1xf32>
    %99 = vector.broadcast %98 : vector<32x1xf32> to vector<32x256xf32>
    %100 = arith.addf %97, %99 : vector<32x256xf32>
    %101 = arith.addf %51, %100 : vector<32x256xf32>
    %cst_47 = arith.constant dense<0.000000e+00> : vector<256xf32>
    %102 = vector.multi_reduction <add>, %101, %cst_47 [0] : vector<32x256xf32> to vector<256xf32>
    %103 = vector.shape_cast %102 : vector<256xf32> to vector<1x256xf32>
    %cst_48 = arith.constant 3.200000e+01 : f32
    %104 = vector.broadcast %cst_48 : f32 to vector<1x256xf32>
    %105 = arith.divf %103, %104 : vector<1x256xf32>
    %106 = vector.broadcast %105 : vector<1x256xf32> to vector<32x256xf32>
    %107 = arith.subf %101, %106 : vector<32x256xf32>
    %108 = arith.mulf %107, %107 : vector<32x256xf32>
    %cst_49 = arith.constant dense<0.000000e+00> : vector<256xf32>
    %109 = vector.multi_reduction <add>, %108, %cst_49 [0] : vector<32x256xf32> to vector<256xf32>
    %110 = vector.shape_cast %109 : vector<256xf32> to vector<1x256xf32>
    %cst_50 = arith.constant 3.200000e+01 : f32
    %111 = vector.broadcast %cst_50 : f32 to vector<1x256xf32>
    %112 = arith.divf %110, %111 : vector<1x256xf32>
    %113 = vector.broadcast %105 : vector<1x256xf32> to vector<32x256xf32>
    %114 = arith.subf %101, %113 : vector<32x256xf32>
    %cst_51 = arith.constant 9.99999974E-6 : f32
    %115 = vector.broadcast %cst_51 : f32 to vector<1x256xf32>
    %116 = arith.addf %112, %115 : vector<1x256xf32>
    %117 = math.rsqrt %116 : vector<1x256xf32>
    %118 = vector.broadcast %117 : vector<1x256xf32> to vector<32x256xf32>
    %119 = arith.mulf %114, %118 : vector<32x256xf32>
    %c0_52 = arith.constant 0 : index
    %c6 = arith.constant 6 : index
    %120 = vector.load %arg15[%c0_52, %c6] : memref<32x9xf32, #tpu.memory_space<vmem>>, vector<32x1xf32>
    %121 = vector.broadcast %120 : vector<32x1xf32> to vector<32x256xf32>
    %122 = arith.mulf %119, %121 : vector<32x256xf32>
    %c0_53 = arith.constant 0 : index
    %c7 = arith.constant 7 : index
    %123 = vector.load %arg15[%c0_53, %c7] : memref<32x9xf32, #tpu.memory_space<vmem>>, vector<32x1xf32>
    %124 = vector.broadcast %123 : vector<32x1xf32> to vector<32x256xf32>
    %125 = arith.addf %122, %124 : vector<32x256xf32>
    %c0_54 = arith.constant 0 : index
    %c0_55 = arith.constant 0 : index
    %c0_56 = arith.constant 0 : index
    %126 = vector.load %arg1[%c0_54, %c0_55, %c0_56] : memref<1x16x256xf32, #tpu.memory_space<vmem>>, vector<1x16x256xf32>
    %127 = vector.shape_cast %126 : vector<1x16x256xf32> to vector<16x256xf32>
    %cst_57 = arith.constant 0.000000e+00 : f32
    %128 = vector.broadcast %cst_57 : f32 to vector<16x32xf32>
    %129 = tpu.concatenate %128, %127, %128 in 1 : vector<16x32xf32>, vector<16x256xf32>, vector<16x32xf32> -> vector<16x320xf32>
    %130 = vector.extract_strided_slice %129 {offsets = [0, 15], sizes = [16, 256], strides = [1, 1]} : vector<16x320xf32> to vector<16x256xf32>
    %c0_58 = arith.constant 0 : index
    %c0_59 = arith.constant 0 : index
    %131 = vector.load %arg4[%c0_58, %c0_59] : memref<9x256xf32, #tpu.memory_space<vmem>>, vector<1x256xf32>
    %132 = vector.broadcast %131 : vector<1x256xf32> to vector<16x256xf32>
    %133 = arith.mulf %130, %132 : vector<16x256xf32>
    %134 = arith.truncf %133 : vector<16x256xf32> to vector<16x256xbf16>
    %c0_60 = arith.constant 0 : index
    %c0_61 = arith.constant 0 : index
    %135 = vector.load %arg18[%c0_60, %c0_61] : memref<144x256xbf16, #tpu.memory_space<vmem>>, vector<16x256xbf16>
    tpu.vector_store %arg18[%c0_60, %c0_61], %134 {strides = array<i32>} : memref<144x256xbf16, #tpu.memory_space<vmem>>, vector<16x256xbf16>,
    %136 = vector.extract_strided_slice %129 {offsets = [0, 16], sizes = [16, 256], strides = [1, 1]} : vector<16x320xf32> to vector<16x256xf32>
    %c1_62 = arith.constant 1 : index
    %c0_63 = arith.constant 0 : index
    %137 = vector.load %arg4[%c1_62, %c0_63] : memref<9x256xf32, #tpu.memory_space<vmem>>, vector<1x256xf32>
    %138 = vector.broadcast %137 : vector<1x256xf32> to vector<16x256xf32>
    %139 = arith.mulf %136, %138 : vector<16x256xf32>
    %140 = arith.truncf %139 : vector<16x256xf32> to vector<16x256xbf16>
    %c16 = arith.constant 16 : index
    %c0_64 = arith.constant 0 : index
    %141 = vector.load %arg18[%c16, %c0_64] : memref<144x256xbf16, #tpu.memory_space<vmem>>, vector<16x256xbf16>
    tpu.vector_store %arg18[%c16, %c0_64], %140 {strides = array<i32>} : memref<144x256xbf16, #tpu.memory_space<vmem>>, vector<16x256xbf16>,
    %142 = vector.extract_strided_slice %129 {offsets = [0, 17], sizes = [16, 256], strides = [1, 1]} : vector<16x320xf32> to vector<16x256xf32>
    %c2_65 = arith.constant 2 : index
    %c0_66 = arith.constant 0 : index
    %143 = vector.load %arg4[%c2_65, %c0_66] : memref<9x256xf32, #tpu.memory_space<vmem>>, vector<1x256xf32>
    %144 = vector.broadcast %143 : vector<1x256xf32> to vector<16x256xf32>
    %145 = arith.mulf %142, %144 : vector<16x256xf32>
    %146 = arith.truncf %145 : vector<16x256xf32> to vector<16x256xbf16>
    %c32 = arith.constant 32 : index
    %c0_67 = arith.constant 0 : index
    %147 = vector.load %arg18[%c32, %c0_67] : memref<144x256xbf16, #tpu.memory_space<vmem>>, vector<16x256xbf16>
    tpu.vector_store %arg18[%c32, %c0_67], %146 {strides = array<i32>} : memref<144x256xbf16, #tpu.memory_space<vmem>>, vector<16x256xbf16>,
    %148 = vector.extract_strided_slice %129 {offsets = [0, 31], sizes = [16, 256], strides = [1, 1]} : vector<16x320xf32> to vector<16x256xf32>
    %c3_68 = arith.constant 3 : index
    %c0_69 = arith.constant 0 : index
    %149 = vector.load %arg4[%c3_68, %c0_69] : memref<9x256xf32, #tpu.memory_space<vmem>>, vector<1x256xf32>
    %150 = vector.broadcast %149 : vector<1x256xf32> to vector<16x256xf32>
    %151 = arith.mulf %148, %150 : vector<16x256xf32>
    %152 = arith.truncf %151 : vector<16x256xf32> to vector<16x256xbf16>
    %c48 = arith.constant 48 : index
    %c0_70 = arith.constant 0 : index
    %153 = vector.load %arg18[%c48, %c0_70] : memref<144x256xbf16, #tpu.memory_space<vmem>>, vector<16x256xbf16>
    tpu.vector_store %arg18[%c48, %c0_70], %152 {strides = array<i32>} : memref<144x256xbf16, #tpu.memory_space<vmem>>, vector<16x256xbf16>,
    %154 = vector.extract_strided_slice %129 {offsets = [0, 32], sizes = [16, 256], strides = [1, 1]} : vector<16x320xf32> to vector<16x256xf32>
    %c4_71 = arith.constant 4 : index
    %c0_72 = arith.constant 0 : index
    %155 = vector.load %arg4[%c4_71, %c0_72] : memref<9x256xf32, #tpu.memory_space<vmem>>, vector<1x256xf32>
    %156 = vector.broadcast %155 : vector<1x256xf32> to vector<16x256xf32>
    %157 = arith.mulf %154, %156 : vector<16x256xf32>
    %158 = arith.truncf %157 : vector<16x256xf32> to vector<16x256xbf16>
    %c64 = arith.constant 64 : index
    %c0_73 = arith.constant 0 : index
    %159 = vector.load %arg18[%c64, %c0_73] : memref<144x256xbf16, #tpu.memory_space<vmem>>, vector<16x256xbf16>
    tpu.vector_store %arg18[%c64, %c0_73], %158 {strides = array<i32>} : memref<144x256xbf16, #tpu.memory_space<vmem>>, vector<16x256xbf16>,
    %160 = vector.extract_strided_slice %129 {offsets = [0, 33], sizes = [16, 256], strides = [1, 1]} : vector<16x320xf32> to vector<16x256xf32>
    %c5_74 = arith.constant 5 : index
    %c0_75 = arith.constant 0 : index
    %161 = vector.load %arg4[%c5_74, %c0_75] : memref<9x256xf32, #tpu.memory_space<vmem>>, vector<1x256xf32>
    %162 = vector.broadcast %161 : vector<1x256xf32> to vector<16x256xf32>
    %163 = arith.mulf %160, %162 : vector<16x256xf32>
    %164 = arith.truncf %163 : vector<16x256xf32> to vector<16x256xbf16>
    %c80 = arith.constant 80 : index
    %c0_76 = arith.constant 0 : index
    %165 = vector.load %arg18[%c80, %c0_76] : memref<144x256xbf16, #tpu.memory_space<vmem>>, vector<16x256xbf16>
    tpu.vector_store %arg18[%c80, %c0_76], %164 {strides = array<i32>} : memref<144x256xbf16, #tpu.memory_space<vmem>>, vector<16x256xbf16>,
    %166 = vector.extract_strided_slice %129 {offsets = [0, 47], sizes = [16, 256], strides = [1, 1]} : vector<16x320xf32> to vector<16x256xf32>
    %c6_77 = arith.constant 6 : index
    %c0_78 = arith.constant 0 : index
    %167 = vector.load %arg4[%c6_77, %c0_78] : memref<9x256xf32, #tpu.memory_space<vmem>>, vector<1x256xf32>
    %168 = vector.broadcast %167 : vector<1x256xf32> to vector<16x256xf32>
    %169 = arith.mulf %166, %168 : vector<16x256xf32>
    %170 = arith.truncf %169 : vector<16x256xf32> to vector<16x256xbf16>
    %c96 = arith.constant 96 : index
    %c0_79 = arith.constant 0 : index
    %171 = vector.load %arg18[%c96, %c0_79] : memref<144x256xbf16, #tpu.memory_space<vmem>>, vector<16x256xbf16>
    tpu.vector_store %arg18[%c96, %c0_79], %170 {strides = array<i32>} : memref<144x256xbf16, #tpu.memory_space<vmem>>, vector<16x256xbf16>,
    %172 = vector.extract_strided_slice %129 {offsets = [0, 48], sizes = [16, 256], strides = [1, 1]} : vector<16x320xf32> to vector<16x256xf32>
    %c7_80 = arith.constant 7 : index
    %c0_81 = arith.constant 0 : index
    %173 = vector.load %arg4[%c7_80, %c0_81] : memref<9x256xf32, #tpu.memory_space<vmem>>, vector<1x256xf32>
    %174 = vector.broadcast %173 : vector<1x256xf32> to vector<16x256xf32>
    %175 = arith.mulf %172, %174 : vector<16x256xf32>
    %176 = arith.truncf %175 : vector<16x256xf32> to vector<16x256xbf16>
    %c112 = arith.constant 112 : index
    %c0_82 = arith.constant 0 : index
    %177 = vector.load %arg18[%c112, %c0_82] : memref<144x256xbf16, #tpu.memory_space<vmem>>, vector<16x256xbf16>
    tpu.vector_store %arg18[%c112, %c0_82], %176 {strides = array<i32>} : memref<144x256xbf16, #tpu.memory_space<vmem>>, vector<16x256xbf16>,
    %178 = vector.extract_strided_slice %129 {offsets = [0, 49], sizes = [16, 256], strides = [1, 1]} : vector<16x320xf32> to vector<16x256xf32>
    %c8 = arith.constant 8 : index
    %c0_83 = arith.constant 0 : index
    %179 = vector.load %arg4[%c8, %c0_83] : memref<9x256xf32, #tpu.memory_space<vmem>>, vector<1x256xf32>
    %180 = vector.broadcast %179 : vector<1x256xf32> to vector<16x256xf32>
    %181 = arith.mulf %178, %180 : vector<16x256xf32>
    %182 = arith.truncf %181 : vector<16x256xf32> to vector<16x256xbf16>
    %c128 = arith.constant 128 : index
    %c0_84 = arith.constant 0 : index
    %183 = vector.load %arg18[%c128, %c0_84] : memref<144x256xbf16, #tpu.memory_space<vmem>>, vector<16x256xbf16>
    tpu.vector_store %arg18[%c128, %c0_84], %182 {strides = array<i32>} : memref<144x256xbf16, #tpu.memory_space<vmem>>, vector<16x256xbf16>,
    %c0_85 = arith.constant 0 : index
    %c0_86 = arith.constant 0 : index
    %184 = vector.load %arg2[%c0_85, %c0_86] : memref<32x144xbf16, #tpu.memory_space<vmem>>, vector<32x144xbf16>
    %c0_87 = arith.constant 0 : index
    %c0_88 = arith.constant 0 : index
    %185 = vector.load %arg18[%c0_87, %c0_88] : memref<144x256xbf16, #tpu.memory_space<vmem>>, vector<144x256xbf16>
    %cst_89 = arith.constant dense<0.000000e+00> : vector<32x256xf32>
    %186 = tpu.matmul %184, %185, %cst_89 {dimension_numbers = #tpu.dot_dimension_numbers<[1], [0], [0], [1], [0, 0, 1, 1], [], []>} : vector<32x144xbf16>, vector<144x256xbf16>, vector<32x256xf32> -> vector<32x256xf32>
    %c0_90 = arith.constant 0 : index
    %c0_91 = arith.constant 0 : index
    %187 = vector.load %arg3[%c0_90, %c0_91] : memref<32x256xf32, #tpu.memory_space<vmem>>, vector<32x256xf32>
    %188 = arith.addf %186, %187 : vector<32x256xf32>
    %cst_92 = arith.constant 0.000000e+00 : f32
    %189 = vector.broadcast %cst_92 : f32 to vector<32x256xf32>
    %190 = arith.cmpf oge, %188, %189 : vector<32x256xf32>
    %cst_93 = arith.constant 2.000000e-01 : f32
    %191 = vector.broadcast %cst_93 : f32 to vector<32x256xf32>
    %192 = arith.mulf %191, %188 : vector<32x256xf32>
    %193 = arith.select %190, %188, %192 : vector<32x256xi1>, vector<32x256xf32>
    %cst_94 = arith.constant dense<0.000000e+00> : vector<32xf32>
    %194 = vector.multi_reduction <add>, %193, %cst_94 [1] : vector<32x256xf32> to vector<32xf32>
    %195 = vector.shape_cast %194 : vector<32xf32> to vector<32x1xf32>
    %cst_95 = arith.constant 2.560000e+02 : f32
    %196 = vector.broadcast %cst_95 : f32 to vector<32x1xf32>
    %197 = arith.divf %195, %196 : vector<32x1xf32>
    %c0_96 = arith.constant 0 : index
    %c0_97 = arith.constant 0 : index
    %198 = vector.load %arg5[%c0_96, %c0_97] : memref<32x4xf32, #tpu.memory_space<vmem>>, vector<32x4xf32>
    %199 = vector.broadcast %197 : vector<32x1xf32> to vector<32x4xf32>
    %200 = arith.mulf %198, %199 : vector<32x4xf32>
    %cst_98 = arith.constant dense<0.000000e+00> : vector<4xf32>
    %201 = vector.multi_reduction <add>, %200, %cst_98 [0] : vector<32x4xf32> to vector<4xf32>
    %202 = vector.shape_cast %201 : vector<4xf32> to vector<1x4xf32>
    %cst_99 = arith.constant 0.000000e+00 : f32
    %203 = vector.broadcast %cst_99 : f32 to vector<1x4xf32>
    %204 = arith.maximumf %202, %203 : vector<1x4xf32>
    %c0_100 = arith.constant 0 : index
    %c0_101 = arith.constant 0 : index
    %205 = vector.load %arg6[%c0_100, %c0_101] : memref<32x4xf32, #tpu.memory_space<vmem>>, vector<32x4xf32>
    %206 = vector.broadcast %204 : vector<1x4xf32> to vector<32x4xf32>
    %207 = arith.mulf %205, %206 : vector<32x4xf32>
    %cst_102 = arith.constant dense<0.000000e+00> : vector<32xf32>
    %208 = vector.multi_reduction <add>, %207, %cst_102 [1] : vector<32x4xf32> to vector<32xf32>
    %209 = vector.shape_cast %208 : vector<32xf32> to vector<32x1xf32>
    %210 = arith.negf %209 : vector<32x1xf32>
    %211 = math.exp %210 : vector<32x1xf32>
    %cst_103 = arith.constant 1.000000e+00 : f32
    %212 = vector.broadcast %cst_103 : f32 to vector<32x1xf32>
    %213 = arith.addf %212, %211 : vector<32x1xf32>
    %214 = arith.divf %212, %213 : vector<32x1xf32>
    %215 = vector.broadcast %214 : vector<32x1xf32> to vector<32x256xf32>
    %216 = arith.mulf %193, %215 : vector<32x256xf32>
    %217 = arith.addf %125, %216 : vector<32x256xf32>
    %cst_104 = arith.constant 0.000000e+00 : f32
    %218 = vector.broadcast %cst_104 : f32 to vector<32x32xf32>
    %219 = tpu.concatenate %218, %217, %218 in 1 : vector<32x32xf32>, vector<32x256xf32>, vector<32x32xf32> -> vector<32x320xf32>
    %220 = vector.extract_strided_slice %219 {offsets = [0, 15], sizes = [32, 256], strides = [1, 1]} : vector<32x320xf32> to vector<32x256xf32>
    %c0_105 = arith.constant 0 : index
    %c0_106 = arith.constant 0 : index
    %221 = vector.load %arg4[%c0_105, %c0_106] : memref<9x256xf32, #tpu.memory_space<vmem>>, vector<1x256xf32>
    %222 = vector.broadcast %221 : vector<1x256xf32> to vector<32x256xf32>
    %223 = arith.mulf %220, %222 : vector<32x256xf32>
    %224 = arith.truncf %223 : vector<32x256xf32> to vector<32x256xbf16>
    %c0_107 = arith.constant 0 : index
    %c0_108 = arith.constant 0 : index
    %225 = vector.load %arg19[%c0_107, %c0_108] : memref<288x256xbf16, #tpu.memory_space<vmem>>, vector<32x256xbf16>
    tpu.vector_store %arg19[%c0_107, %c0_108], %224 {strides = array<i32>} : memref<288x256xbf16, #tpu.memory_space<vmem>>, vector<32x256xbf16>,
    %226 = vector.extract_strided_slice %219 {offsets = [0, 16], sizes = [32, 256], strides = [1, 1]} : vector<32x320xf32> to vector<32x256xf32>
    %c1_109 = arith.constant 1 : index
    %c0_110 = arith.constant 0 : index
    %227 = vector.load %arg4[%c1_109, %c0_110] : memref<9x256xf32, #tpu.memory_space<vmem>>, vector<1x256xf32>
    %228 = vector.broadcast %227 : vector<1x256xf32> to vector<32x256xf32>
    %229 = arith.mulf %226, %228 : vector<32x256xf32>
    %230 = arith.truncf %229 : vector<32x256xf32> to vector<32x256xbf16>
    %c32_111 = arith.constant 32 : index
    %c0_112 = arith.constant 0 : index
    %231 = vector.load %arg19[%c32_111, %c0_112] : memref<288x256xbf16, #tpu.memory_space<vmem>>, vector<32x256xbf16>
    tpu.vector_store %arg19[%c32_111, %c0_112], %230 {strides = array<i32>} : memref<288x256xbf16, #tpu.memory_space<vmem>>, vector<32x256xbf16>,
    %232 = vector.extract_strided_slice %219 {offsets = [0, 17], sizes = [32, 256], strides = [1, 1]} : vector<32x320xf32> to vector<32x256xf32>
    %c2_113 = arith.constant 2 : index
    %c0_114 = arith.constant 0 : index
    %233 = vector.load %arg4[%c2_113, %c0_114] : memref<9x256xf32, #tpu.memory_space<vmem>>, vector<1x256xf32>
    %234 = vector.broadcast %233 : vector<1x256xf32> to vector<32x256xf32>
    %235 = arith.mulf %232, %234 : vector<32x256xf32>
    %236 = arith.truncf %235 : vector<32x256xf32> to vector<32x256xbf16>
    %c64_115 = arith.constant 64 : index
    %c0_116 = arith.constant 0 : index
    %237 = vector.load %arg19[%c64_115, %c0_116] : memref<288x256xbf16, #tpu.memory_space<vmem>>, vector<32x256xbf16>
    tpu.vector_store %arg19[%c64_115, %c0_116], %236 {strides = array<i32>} : memref<288x256xbf16, #tpu.memory_space<vmem>>, vector<32x256xbf16>,
    %238 = vector.extract_strided_slice %219 {offsets = [0, 31], sizes = [32, 256], strides = [1, 1]} : vector<32x320xf32> to vector<32x256xf32>
    %c3_117 = arith.constant 3 : index
    %c0_118 = arith.constant 0 : index
    %239 = vector.load %arg4[%c3_117, %c0_118] : memref<9x256xf32, #tpu.memory_space<vmem>>, vector<1x256xf32>
    %240 = vector.broadcast %239 : vector<1x256xf32> to vector<32x256xf32>
    %241 = arith.mulf %238, %240 : vector<32x256xf32>
    %242 = arith.truncf %241 : vector<32x256xf32> to vector<32x256xbf16>
    %c96_119 = arith.constant 96 : index
    %c0_120 = arith.constant 0 : index
    %243 = vector.load %arg19[%c96_119, %c0_120] : memref<288x256xbf16, #tpu.memory_space<vmem>>, vector<32x256xbf16>
    tpu.vector_store %arg19[%c96_119, %c0_120], %242 {strides = array<i32>} : memref<288x256xbf16, #tpu.memory_space<vmem>>, vector<32x256xbf16>,
    %244 = vector.extract_strided_slice %219 {offsets = [0, 32], sizes = [32, 256], strides = [1, 1]} : vector<32x320xf32> to vector<32x256xf32>
    %c4_121 = arith.constant 4 : index
    %c0_122 = arith.constant 0 : index
    %245 = vector.load %arg4[%c4_121, %c0_122] : memref<9x256xf32, #tpu.memory_space<vmem>>, vector<1x256xf32>
    %246 = vector.broadcast %245 : vector<1x256xf32> to vector<32x256xf32>
    %247 = arith.mulf %244, %246 : vector<32x256xf32>
    %248 = arith.truncf %247 : vector<32x256xf32> to vector<32x256xbf16>
    %c128_123 = arith.constant 128 : index
    %c0_124 = arith.constant 0 : index
    %249 = vector.load %arg19[%c128_123, %c0_124] : memref<288x256xbf16, #tpu.memory_space<vmem>>, vector<32x256xbf16>
    tpu.vector_store %arg19[%c128_123, %c0_124], %248 {strides = array<i32>} : memref<288x256xbf16, #tpu.memory_space<vmem>>, vector<32x256xbf16>,
    %250 = vector.extract_strided_slice %219 {offsets = [0, 33], sizes = [32, 256], strides = [1, 1]} : vector<32x320xf32> to vector<32x256xf32>
    %c5_125 = arith.constant 5 : index
    %c0_126 = arith.constant 0 : index
    %251 = vector.load %arg4[%c5_125, %c0_126] : memref<9x256xf32, #tpu.memory_space<vmem>>, vector<1x256xf32>
    %252 = vector.broadcast %251 : vector<1x256xf32> to vector<32x256xf32>
    %253 = arith.mulf %250, %252 : vector<32x256xf32>
    %254 = arith.truncf %253 : vector<32x256xf32> to vector<32x256xbf16>
    %c160 = arith.constant 160 : index
    %c0_127 = arith.constant 0 : index
    %255 = vector.load %arg19[%c160, %c0_127] : memref<288x256xbf16, #tpu.memory_space<vmem>>, vector<32x256xbf16>
    tpu.vector_store %arg19[%c160, %c0_127], %254 {strides = array<i32>} : memref<288x256xbf16, #tpu.memory_space<vmem>>, vector<32x256xbf16>,
    %256 = vector.extract_strided_slice %219 {offsets = [0, 47], sizes = [32, 256], strides = [1, 1]} : vector<32x320xf32> to vector<32x256xf32>
    %c6_128 = arith.constant 6 : index
    %c0_129 = arith.constant 0 : index
    %257 = vector.load %arg4[%c6_128, %c0_129] : memref<9x256xf32, #tpu.memory_space<vmem>>, vector<1x256xf32>
    %258 = vector.broadcast %257 : vector<1x256xf32> to vector<32x256xf32>
    %259 = arith.mulf %256, %258 : vector<32x256xf32>
    %260 = arith.truncf %259 : vector<32x256xf32> to vector<32x256xbf16>
    %c192 = arith.constant 192 : index
    %c0_130 = arith.constant 0 : index
    %261 = vector.load %arg19[%c192, %c0_130] : memref<288x256xbf16, #tpu.memory_space<vmem>>, vector<32x256xbf16>
    tpu.vector_store %arg19[%c192, %c0_130], %260 {strides = array<i32>} : memref<288x256xbf16, #tpu.memory_space<vmem>>, vector<32x256xbf16>,
    %262 = vector.extract_strided_slice %219 {offsets = [0, 48], sizes = [32, 256], strides = [1, 1]} : vector<32x320xf32> to vector<32x256xf32>
    %c7_131 = arith.constant 7 : index
    %c0_132 = arith.constant 0 : index
    %263 = vector.load %arg4[%c7_131, %c0_132] : memref<9x256xf32, #tpu.memory_space<vmem>>, vector<1x256xf32>
    %264 = vector.broadcast %263 : vector<1x256xf32> to vector<32x256xf32>
    %265 = arith.mulf %262, %264 : vector<32x256xf32>
    %266 = arith.truncf %265 : vector<32x256xf32> to vector<32x256xbf16>
    %c224 = arith.constant 224 : index
    %c0_133 = arith.constant 0 : index
    %267 = vector.load %arg19[%c224, %c0_133] : memref<288x256xbf16, #tpu.memory_space<vmem>>, vector<32x256xbf16>
    tpu.vector_store %arg19[%c224, %c0_133], %266 {strides = array<i32>} : memref<288x256xbf16, #tpu.memory_space<vmem>>, vector<32x256xbf16>,
    %268 = vector.extract_strided_slice %219 {offsets = [0, 49], sizes = [32, 256], strides = [1, 1]} : vector<32x320xf32> to vector<32x256xf32>
    %c8_134 = arith.constant 8 : index
    %c0_135 = arith.constant 0 : index
    %269 = vector.load %arg4[%c8_134, %c0_135] : memref<9x256xf32, #tpu.memory_space<vmem>>, vector<1x256xf32>
    %270 = vector.broadcast %269 : vector<1x256xf32> to vector<32x256xf32>
    %271 = arith.mulf %268, %270 : vector<32x256xf32>
    %272 = arith.truncf %271 : vector<32x256xf32> to vector<32x256xbf16>
    %c256 = arith.constant 256 : index
    %c0_136 = arith.constant 0 : index
    %273 = vector.load %arg19[%c256, %c0_136] : memref<288x256xbf16, #tpu.memory_space<vmem>>, vector<32x256xbf16>
    tpu.vector_store %arg19[%c256, %c0_136], %272 {strides = array<i32>} : memref<288x256xbf16, #tpu.memory_space<vmem>>, vector<32x256xbf16>,
    %c0_137 = arith.constant 0 : index
    %c0_138 = arith.constant 0 : index
    %274 = vector.load %arg16[%c0_137, %c0_138] : memref<32x288xbf16, #tpu.memory_space<vmem>>, vector<32x288xbf16>
    %c0_139 = arith.constant 0 : index
    %c0_140 = arith.constant 0 : index
    %275 = vector.load %arg19[%c0_139, %c0_140] : memref<288x256xbf16, #tpu.memory_space<vmem>>, vector<288x256xbf16>
    %cst_141 = arith.constant dense<0.000000e+00> : vector<32x256xf32>
    %276 = tpu.matmul %274, %275, %cst_141 {dimension_numbers = #tpu.dot_dimension_numbers<[1], [0], [0], [1], [0, 0, 1, 1], [], []>} : vector<32x288xbf16>, vector<288x256xbf16>, vector<32x256xf32> -> vector<32x256xf32>
    %c0_142 = arith.constant 0 : index
    %c8_143 = arith.constant 8 : index
    %277 = vector.load %arg15[%c0_142, %c8_143] : memref<32x9xf32, #tpu.memory_space<vmem>>, vector<32x1xf32>
    %278 = vector.broadcast %277 : vector<32x1xf32> to vector<32x256xf32>
    %279 = arith.addf %276, %278 : vector<32x256xf32>
    %c0_144 = arith.constant 0 : index
    %c0_145 = arith.constant 0 : index
    %c0_146 = arith.constant 0 : index
    %280 = vector.load %arg17[%c0_144, %c0_145, %c0_146] : memref<1x32x256xf32, #tpu.memory_space<vmem>>, vector<1x32x256xf32>
    %281 = vector.shape_cast %280 : vector<1x32x256xf32> to vector<32x256xf32>
    %282 = vector.shape_cast %279 : vector<32x256xf32> to vector<1x32x256xf32>
    tpu.vector_store %arg17[%c0_144, %c0_145, %c0_146], %282 {strides = array<i32>} : memref<1x32x256xf32, #tpu.memory_space<vmem>>, vector<1x32x256xf32>,
    return
  }
  func.func @transform_0(%arg0: i32) -> (i32, i32, i32) {
    %c0_i32 = arith.constant 0 : i32
    %c0_i32_0 = arith.constant 0 : i32
    %c0_i32_1 = arith.constant 0 : i32
    return %arg0, %c0_i32, %c0_i32_0 : i32, i32, i32
  }
  func.func @transform_1(%arg0: i32) -> (i32, i32) {
    %c0_i32 = arith.constant 0 : i32
    %c0_i32_0 = arith.constant 0 : i32
    %c0_i32_1 = arith.constant 0 : i32
    return %c0_i32, %c0_i32_0 : i32, i32
  }
  func.func @transform_2(%arg0: i32) -> (i32, i32) {
    %c0_i32 = arith.constant 0 : i32
    %c0_i32_0 = arith.constant 0 : i32
    %c0_i32_1 = arith.constant 0 : i32
    return %c0_i32, %c0_i32_0 : i32, i32
  }
  func.func @transform_3(%arg0: i32) -> (i32, i32) {
    %c0_i32 = arith.constant 0 : i32
    %c0_i32_0 = arith.constant 0 : i32
    %c0_i32_1 = arith.constant 0 : i32
    return %c0_i32, %c0_i32_0 : i32, i32
  }
  func.func @transform_4(%arg0: i32) -> (i32, i32) {
    %c0_i32 = arith.constant 0 : i32
    %c0_i32_0 = arith.constant 0 : i32
    %c0_i32_1 = arith.constant 0 : i32
    return %c0_i32, %c0_i32_0 : i32, i32
  }
  func.func @transform_5(%arg0: i32) -> (i32, i32) {
    %c0_i32 = arith.constant 0 : i32
    %c0_i32_0 = arith.constant 0 : i32
    %c0_i32_1 = arith.constant 0 : i32
    return %c0_i32, %c0_i32_0 : i32, i32
  }
  func.func @transform_6(%arg0: i32) -> (i32, i32) {
    %c0_i32 = arith.constant 0 : i32
    %c0_i32_0 = arith.constant 0 : i32
    %c0_i32_1 = arith.constant 0 : i32
    return %c0_i32, %c0_i32_0 : i32, i32
  }
  func.func @transform_7(%arg0: i32) -> (i32, i32) {
    %c0_i32 = arith.constant 0 : i32
    %c0_i32_0 = arith.constant 0 : i32
    %c0_i32_1 = arith.constant 0 : i32
    return %c0_i32, %c0_i32_0 : i32, i32
  }
  func.func @transform_8(%arg0: i32) -> (i32, i32) {
    %c0_i32 = arith.constant 0 : i32
    %c0_i32_0 = arith.constant 0 : i32
    %c0_i32_1 = arith.constant 0 : i32
    return %c0_i32, %c0_i32_0 : i32, i32
  }
  func.func @transform_9(%arg0: i32) -> (i32, i32) {
    %c0_i32 = arith.constant 0 : i32
    %c0_i32_0 = arith.constant 0 : i32
    %c0_i32_1 = arith.constant 0 : i32
    return %c0_i32, %c0_i32_0 : i32, i32
  }
  func.func @transform_10(%arg0: i32) -> (i32, i32) {
    %c0_i32 = arith.constant 0 : i32
    %c0_i32_0 = arith.constant 0 : i32
    %c0_i32_1 = arith.constant 0 : i32
    return %c0_i32, %c0_i32_0 : i32, i32
  }
  func.func @transform_11(%arg0: i32) -> (i32, i32) {
    %c0_i32 = arith.constant 0 : i32
    %c0_i32_0 = arith.constant 0 : i32
    %c0_i32_1 = arith.constant 0 : i32
    return %c0_i32, %c0_i32_0 : i32, i32
  }
  func.func @transform_12(%arg0: i32) -> (i32, i32) {
    %c0_i32 = arith.constant 0 : i32
    %c0_i32_0 = arith.constant 0 : i32
    %c0_i32_1 = arith.constant 0 : i32
    return %c0_i32, %c0_i32_0 : i32, i32
  }
  func.func @transform_13(%arg0: i32) -> (i32, i32) {
    %c0_i32 = arith.constant 0 : i32
    %c0_i32_0 = arith.constant 0 : i32
    %c0_i32_1 = arith.constant 0 : i32
    return %c0_i32, %c0_i32_0 : i32, i32
  }
  func.func @transform_14(%arg0: i32) -> (i32, i32) {
    %c0_i32 = arith.constant 0 : i32
    %c0_i32_0 = arith.constant 0 : i32
    %c0_i32_1 = arith.constant 0 : i32
    return %c0_i32, %c0_i32_0 : i32, i32
  }
  func.func @transform_15(%arg0: i32) -> (i32, i32) {
    %c0_i32 = arith.constant 0 : i32
    %c0_i32_0 = arith.constant 0 : i32
    %c0_i32_1 = arith.constant 0 : i32
    return %c0_i32, %c0_i32_0 : i32, i32
  }
  func.func @transform_16(%arg0: i32) -> (i32, i32, i32) {
    %c0_i32 = arith.constant 0 : i32
    %c0_i32_0 = arith.constant 0 : i32
    %c0_i32_1 = arith.constant 0 : i32
    return %arg0, %c0_i32, %c0_i32_0 : i32, i32, i32
  }
}

</mosaic_0001>

<llo_original>
// kernel: _lambda_.1
$region0: #{_lambda_.1}
  #allocation0 [shape = 'u32[]', space=smem, size = 0x4, offset = 0x4, fixed_abs, tag = 'smem constant byte address 0x4 - core index']
  #allocation1 [shape = 'u32[144,128]{1,0:T(1,128)}', space=vmem, size = 0x12000, scoped, tag = 'internal scratch']
  #allocation2 [shape = 'bf16[144,256]{1,0:T(16,128)(2,1)}', space=vmem, size = 0x12000, scoped, tag = 'scratch operand']
  #allocation3 [shape = 'bf16[288,256]{1,0:T(16,128)(2,1)}', space=vmem, size = 0x24000, scoped, tag = 'scratch operand']
  %s0 = inlined_call_operand.vmem [shape: f32[2,16,256], index: 0, kind: input, shape index: {}]
  %s1 = inlined_call_operand.vmem [shape: bf16[32,144], index: 1, kind: input, shape index: {}]
  %s2 = inlined_call_operand.vmem [shape: f32[32,256], index: 2, kind: input, shape index: {}]
  %s3 = inlined_call_operand.vmem [shape: f32[9,256], index: 3, kind: input, shape index: {}]
  %s4 = inlined_call_operand.vmem [shape: f32[32,4], index: 4, kind: input, shape index: {}]
  %s5 = inlined_call_operand.vmem [shape: f32[32,4], index: 5, kind: input, shape index: {}]
  %s6 = inlined_call_operand.vmem [shape: bf16[32,16], index: 6, kind: input, shape index: {}]
  %s7 = inlined_call_operand.vmem [shape: bf16[256,512], index: 7, kind: input, shape index: {}]
  %s8 = inlined_call_operand.vmem [shape: bf16[512,256], index: 8, kind: input, shape index: {}]
  %s9 = inlined_call_operand.vmem [shape: f32[32,256], index: 9, kind: input, shape index: {}]
  %s10 = inlined_call_operand.vmem [shape: f32[32,256], index: 10, kind: input, shape index: {}]
  %s11 = inlined_call_operand.vmem [shape: bf16[128,32], index: 11, kind: input, shape index: {}]
  %s12 = inlined_call_operand.vmem [shape: f32[128,1], index: 12, kind: input, shape index: {}]
  %s13 = inlined_call_operand.vmem [shape: bf16[32,128], index: 13, kind: input, shape index: {}]
  %s14 = inlined_call_operand.vmem [shape: f32[32,9], index: 14, kind: input, shape index: {}]
  %s15 = inlined_call_operand.vmem [shape: bf16[32,288], index: 15, kind: input, shape index: {}]
  %s16 = inlined_call_operand.vmem [shape: f32[2,32,256], index: 16, kind: output, shape index: {}]
  %s17 = sld [smem:[#allocation0]]
  $region97: #{_lambda_.1} parent=0
    _
  %s19 = ssub.s32 1, %s17
  %s20 = scalar_select 0, %s19, %s17
  loop: start=0, step=1, limit=4
  $region2: #{_lambda_.1} parent=0 // loop_pre_header
    _
  $region3: #{_lambda_.1} parent=0 // loop_header
    %s22 = sphi 0, %s26
    %p23 = scmp.ge.s32.totalorder %s22, 4
    %s32 = sphi 0, %s34
    %s35 = sphi 0, %s32
    %s36 = sphi 0, %s35
    %s52 = sphi 0, %s36
    %s56 = sphi 0, %s56
    %s58 = sphi 0, %s56
    %s59 = sphi 0, %s58
    %s73 = sphi 0, %s59
    %s77 = sphi 0, %s77
    %s79 = sphi 0, %s77
    %s80 = sphi 0, %s79
    %s94 = sphi 0, %s80
    %s98 = sphi 0, %s98
    %s100 = sphi 0, %s98
    %s101 = sphi 0, %s100
    %s115 = sphi 0, %s101
    %s119 = sphi 0, %s119
    %s121 = sphi 0, %s119
    %s122 = sphi 0, %s121
    %s136 = sphi 0, %s122
    %s140 = sphi 0, %s140
    %s142 = sphi 0, %s140
    %s143 = sphi 0, %s142
    %s157 = sphi 0, %s143
    %s161 = sphi 0, %s161
    %s163 = sphi 0, %s161
    %s164 = sphi 0, %s163
    %s178 = sphi 0, %s164
    %s182 = sphi 0, %s182
    %s184 = sphi 0, %s182
    %s185 = sphi 0, %s184
    %s199 = sphi 0, %s185
    %s203 = sphi 0, %s203
    %s205 = sphi 0, %s203
    %s206 = sphi 0, %s205
    %s220 = sphi 0, %s206
    %s224 = sphi 0, %s224
    %s226 = sphi 0, %s224
    %s227 = sphi 0, %s226
    %s241 = sphi 0, %s227
    %s245 = sphi 0, %s245
    %s247 = sphi 0, %s245
    %s248 = sphi 0, %s247
    %s262 = sphi 0, %s248
    %s266 = sphi 0, %s266
    %s268 = sphi 0, %s266
    %s269 = sphi 0, %s268
    %s283 = sphi 0, %s269
    %s287 = sphi 0, %s287
    %s289 = sphi 0, %s287
    %s290 = sphi 0, %s289
    %s304 = sphi 0, %s290
    %s308 = sphi 0, %s308
    %s310 = sphi 0, %s308
    %s311 = sphi 0, %s310
    %s325 = sphi 0, %s311
    %s329 = sphi 0, %s329
    %s331 = sphi 0, %s329
    %s332 = sphi 0, %s331
    %s346 = sphi 0, %s332
    %s350 = sphi 0, %s350
    %s352 = sphi 0, %s350
    %s353 = sphi 0, %s352
    %s367 = sphi 0, %s353
    %s373 = sphi 0, %s375
    %s376 = sphi 0, %s373
    %s377 = sphi 0, %s376
    %s393 = sphi 0, %s377
  $region4: #{_lambda_.1} parent=0 // loop_header_branch
    %25 = sbr.rel (%p23) target = $region8
  $region5: #{_lambda_.1} parent=0 // loop_body
    %s27 = ssub.s32 %s22, 1
    %s28 = ssub.s32 %s22, 2
    %s29 = sadd.s32 %s22, 1
    %s30 = ssub.s32 %s22, %s29
    %p31 = scmp.eq.s32.totalorder %s30, 0
    %s33 = sadd.s32 %s32, 1
    %s34 = scalar_select %p31, %s32, %s33
    %p37 = pneg %p31
    %p38 = scmp.eq.s32.totalorder %s22, 1
    %p39 = por %p37, %p38
    %p40 = scmp.ne.s32.totalorder %s32, %s35
    %p41 = scmp.eq.s32.totalorder %s22, 0
    %p42 = por %p40, %p41
    %p43 = scmp.ne.s32.totalorder %s32, %s35
    %p44 = scmp.eq.s32.totalorder %s27, 1
    %p45 = por %p43, %p44
    %p46 = scmp.ne.s32.totalorder %s35, %s36
    %p47 = scmp.eq.s32.totalorder %s27, 0
    %p48 = por %p46, %p47
    %p49 = scmp.ne.s32.totalorder %s35, %s36
    %p50 = scmp.eq.s32.totalorder %s28, 1
    %p51 = por %p49, %p50
    %p53 = scmp.ne.s32.totalorder %s36, %s52
    %p54 = scmp.eq.s32.totalorder %s28, 0
    %p55 = por %p53, %p54
    %s57 = sadd.s32 %s56, 1
    %p60 = scmp.eq.s32.totalorder %s22, 1
    %p61 = scmp.ne.s32.totalorder %s56, %s58
    %p62 = scmp.eq.s32.totalorder %s22, 0
    %p63 = por %p61, %p62
    %p64 = scmp.ne.s32.totalorder %s56, %s58
    %p65 = scmp.eq.s32.totalorder %s27, 1
    %p66 = por %p64, %p65
    %p67 = scmp.ne.s32.totalorder %s58, %s59
    %p68 = scmp.eq.s32.totalorder %s27, 0
    %p69 = por %p67, %p68
    %p70 = scmp.ne.s32.totalorder %s58, %s59
    %p71 = scmp.eq.s32.totalorder %s28, 1
    %p72 = por %p70, %p71
    %p74 = scmp.ne.s32.totalorder %s59, %s73
    %p75 = scmp.eq.s32.totalorder %s28, 0
    %p76 = por %p74, %p75
    %s78 = sadd.s32 %s77, 1
    %p81 = scmp.eq.s32.totalorder %s22, 1
    %p82 = scmp.ne.s32.totalorder %s77, %s79
    %p83 = scmp.eq.s32.totalorder %s22, 0
    %p84 = por %p82, %p83
    %p85 = scmp.ne.s32.totalorder %s77, %s79
    %p86 = scmp.eq.s32.totalorder %s27, 1
    %p87 = por %p85, %p86
    %p88 = scmp.ne.s32.totalorder %s79, %s80
    %p89 = scmp.eq.s32.totalorder %s27, 0
    %p90 = por %p88, %p89
    %p91 = scmp.ne.s32.totalorder %s79, %s80
    %p92 = scmp.eq.s32.totalorder %s28, 1
    %p93 = por %p91, %p92
    %p95 = scmp.ne.s32.totalorder %s80, %s94
    %p96 = scmp.eq.s32.totalorder %s28, 0
    %p97 = por %p95, %p96
    %s99 = sadd.s32 %s98, 1
    %p102 = scmp.eq.s32.totalorder %s22, 1
    %p103 = scmp.ne.s32.totalorder %s98, %s100
    %p104 = scmp.eq.s32.totalorder %s22, 0
    %p105 = por %p103, %p104
    %p106 = scmp.ne.s32.totalorder %s98, %s100
    %p107 = scmp.eq.s32.totalorder %s27, 1
    %p108 = por %p106, %p107
    %p109 = scmp.ne.s32.totalorder %s100, %s101
    %p110 = scmp.eq.s32.totalorder %s27, 0
    %p111 = por %p109, %p110
    %p112 = scmp.ne.s32.totalorder %s100, %s101
    %p113 = scmp.eq.s32.totalorder %s28, 1
    %p114 = por %p112, %p113
    %p116 = scmp.ne.s32.totalorder %s101, %s115
    %p117 = scmp.eq.s32.totalorder %s28, 0
    %p118 = por %p116, %p117
    %s120 = sadd.s32 %s119, 1
    %p123 = scmp.eq.s32.totalorder %s22, 1
    %p124 = scmp.ne.s32.totalorder %s119, %s121
    %p125 = scmp.eq.s32.totalorder %s22, 0
    %p126 = por %p124, %p125
    %p127 = scmp.ne.s32.totalorder %s119, %s121
    %p128 = scmp.eq.s32.totalorder %s27, 1
    %p129 = por %p127, %p128
    %p130 = scmp.ne.s32.totalorder %s121, %s122
    %p131 = scmp.eq.s32.totalorder %s27, 0
    %p132 = por %p130, %p131
    %p133 = scmp.ne.s32.totalorder %s121, %s122
    %p134 = scmp.eq.s32.totalorder %s28, 1
    %p135 = por %p133, %p134
    %p137 = scmp.ne.s32.totalorder %s122, %s136
    %p138 = scmp.eq.s32.totalorder %s28, 0
    %p139 = por %p137, %p138
    %s141 = sadd.s32 %s140, 1
    %p144 = scmp.eq.s32.totalorder %s22, 1
    %p145 = scmp.ne.s32.totalorder %s140, %s142
    %p146 = scmp.eq.s32.totalorder %s22, 0
    %p147 = por %p145, %p146
    %p148 = scmp.ne.s32.totalorder %s140, %s142
    %p149 = scmp.eq.s32.totalorder %s27, 1
    %p150 = por %p148, %p149
    %p151 = scmp.ne.s32.totalorder %s142, %s143
    %p152 = scmp.eq.s32.totalorder %s27, 0
    %p153 = por %p151, %p152
    %p154 = scmp.ne.s32.totalorder %s142, %s143
    %p155 = scmp.eq.s32.totalorder %s28, 1
    %p156 = por %p154, %p155
    %p158 = scmp.ne.s32.totalorder %s143, %s157
    %p159 = scmp.eq.s32.totalorder %s28, 0
    %p160 = por %p158, %p159
    %s162 = sadd.s32 %s161, 1
    %p165 = scmp.eq.s32.totalorder %s22, 1
    %p166 = scmp.ne.s32.totalorder %s161, %s163
    %p167 = scmp.eq.s32.totalorder %s22, 0
    %p168 = por %p166, %p167
    %p169 = scmp.ne.s32.totalorder %s161, %s163
    %p170 = scmp.eq.s32.totalorder %s27, 1
    %p171 = por %p169, %p170
    %p172 = scmp.ne.s32.totalorder %s163, %s164
    %p173 = scmp.eq.s32.totalorder %s27, 0
    %p174 = por %p172, %p173
    %p175 = scmp.ne.s32.totalorder %s163, %s164
    %p176 = scmp.eq.s32.totalorder %s28, 1
    %p177 = por %p175, %p176
    %p179 = scmp.ne.s32.totalorder %s164, %s178
    %p180 = scmp.eq.s32.totalorder %s28, 0
    %p181 = por %p179, %p180
    %s183 = sadd.s32 %s182, 1
    %p186 = scmp.eq.s32.totalorder %s22, 1
    %p187 = scmp.ne.s32.totalorder %s182, %s184
    %p188 = scmp.eq.s32.totalorder %s22, 0
    %p189 = por %p187, %p188
    %p190 = scmp.ne.s32.totalorder %s182, %s184
    %p191 = scmp.eq.s32.totalorder %s27, 1
    %p192 = por %p190, %p191
    %p193 = scmp.ne.s32.totalorder %s184, %s185
    %p194 = scmp.eq.s32.totalorder %s27, 0
    %p195 = por %p193, %p194
    %p196 = scmp.ne.s32.totalorder %s184, %s185
    %p197 = scmp.eq.s32.totalorder %s28, 1
    %p198 = por %p196, %p197
    %p200 = scmp.ne.s32.totalorder %s185, %s199
    %p201 = scmp.eq.s32.totalorder %s28, 0
    %p202 = por %p200, %p201
    %s204 = sadd.s32 %s203, 1
    %p207 = scmp.eq.s32.totalorder %s22, 1
    %p208 = scmp.ne.s32.totalorder %s203, %s205
    %p209 = scmp.eq.s32.totalorder %s22, 0
    %p210 = por %p208, %p209
    %p211 = scmp.ne.s32.totalorder %s203, %s205
    %p212 = scmp.eq.s32.totalorder %s27, 1
    %p213 = por %p211, %p212
    %p214 = scmp.ne.s32.totalorder %s205, %s206
    %p215 = scmp.eq.s32.totalorder %s27, 0
    %p216 = por %p214, %p215
    %p217 = scmp.ne.s32.totalorder %s205, %s206
    %p218 = scmp.eq.s32.totalorder %s28, 1
    %p219 = por %p217, %p218
    %p221 = scmp.ne.s32.totalorder %s206, %s220
    %p222 = scmp.eq.s32.totalorder %s28, 0
    %p223 = por %p221, %p222
    %s225 = sadd.s32 %s224, 1
    %p228 = scmp.eq.s32.totalorder %s22, 1
    %p229 = scmp.ne.s32.totalorder %s224, %s226
    %p230 = scmp.eq.s32.totalorder %s22, 0
    %p231 = por %p229, %p230
    %p232 = scmp.ne.s32.totalorder %s224, %s226
    %p233 = scmp.eq.s32.totalorder %s27, 1
    %p234 = por %p232, %p233
    %p235 = scmp.ne.s32.totalorder %s226, %s227
    %p236 = scmp.eq.s32.totalorder %s27, 0
    %p237 = por %p235, %p236
    %p238 = scmp.ne.s32.totalorder %s226, %s227
    %p239 = scmp.eq.s32.totalorder %s28, 1
    %p240 = por %p238, %p239
    %p242 = scmp.ne.s32.totalorder %s227, %s241
    %p243 = scmp.eq.s32.totalorder %s28, 0
    %p244 = por %p242, %p243
    %s246 = sadd.s32 %s245, 1
    %p249 = scmp.eq.s32.totalorder %s22, 1
    %p250 = scmp.ne.s32.totalorder %s245, %s247
    %p251 = scmp.eq.s32.totalorder %s22, 0
    %p252 = por %p250, %p251
    %p253 = scmp.ne.s32.totalorder %s245, %s247
    %p254 = scmp.eq.s32.totalorder %s27, 1
    %p255 = por %p253, %p254
    %p256 = scmp.ne.s32.totalorder %s247, %s248
    %p257 = scmp.eq.s32.totalorder %s27, 0
    %p258 = por %p256, %p257
    %p259 = scmp.ne.s32.totalorder %s247, %s248
    %p260 = scmp.eq.s32.totalorder %s28, 1
    %p261 = por %p259, %p260
    %p263 = scmp.ne.s32.totalorder %s248, %s262
    %p264 = scmp.eq.s32.totalorder %s28, 0
    %p265 = por %p263, %p264
    %s267 = sadd.s32 %s266, 1
    %p270 = scmp.eq.s32.totalorder %s22, 1
    %p271 = scmp.ne.s32.totalorder %s266, %s268
    %p272 = scmp.eq.s32.totalorder %s22, 0
    %p273 = por %p271, %p272
    %p274 = scmp.ne.s32.totalorder %s266, %s268
    %p275 = scmp.eq.s32.totalorder %s27, 1
    %p276 = por %p274, %p275
    %p277 = scmp.ne.s32.totalorder %s268, %s269
    %p278 = scmp.eq.s32.totalorder %s27, 0
    %p279 = por %p277, %p278
    %p280 = scmp.ne.s32.totalorder %s268, %s269
    %p281 = scmp.eq.s32.totalorder %s28, 1
    %p282 = por %p280, %p281
    %p284 = scmp.ne.s32.totalorder %s269, %s283
    %p285 = scmp.eq.s32.totalorder %s28, 0
    %p286 = por %p284, %p285
    %s288 = sadd.s32 %s287, 1
    %p291 = scmp.eq.s32.totalorder %s22, 1
    %p292 = scmp.ne.s32.totalorder %s287, %s289
    %p293 = scmp.eq.s32.totalorder %s22, 0
    %p294 = por %p292, %p293
    %p295 = scmp.ne.s32.totalorder %s287, %s289
    %p296 = scmp.eq.s32.totalorder %s27, 1
    %p297 = por %p295, %p296
    %p298 = scmp.ne.s32.totalorder %s289, %s290
    %p299 = scmp.eq.s32.totalorder %s27, 0
    %p300 = por %p298, %p299
    %p301 = scmp.ne.s32.totalorder %s289, %s290
    %p302 = scmp.eq.s32.totalorder %s28, 1
    %p303 = por %p301, %p302
    %p305 = scmp.ne.s32.totalorder %s290, %s304
    %p306 = scmp.eq.s32.totalorder %s28, 0
    %p307 = por %p305, %p306
    %s309 = sadd.s32 %s308, 1
    %p312 = scmp.eq.s32.totalorder %s22, 1
    %p313 = scmp.ne.s32.totalorder %s308, %s310
    %p314 = scmp.eq.s32.totalorder %s22, 0
    %p315 = por %p313, %p314
    %p316 = scmp.ne.s32.totalorder %s308, %s310
    %p317 = scmp.eq.s32.totalorder %s27, 1
    %p318 = por %p316, %p317
    %p319 = scmp.ne.s32.totalorder %s310, %s311
    %p320 = scmp.eq.s32.totalorder %s27, 0
    %p321 = por %p319, %p320
    %p322 = scmp.ne.s32.totalorder %s310, %s311
    %p323 = scmp.eq.s32.totalorder %s28, 1
    %p324 = por %p322, %p323
    %p326 = scmp.ne.s32.totalorder %s311, %s325
    %p327 = scmp.eq.s32.totalorder %s28, 0
    %p328 = por %p326, %p327
    %s330 = sadd.s32 %s329, 1
    %p333 = scmp.eq.s32.totalorder %s22, 1
    %p334 = scmp.ne.s32.totalorder %s329, %s331
    %p335 = scmp.eq.s32.totalorder %s22, 0
    %p336 = por %p334, %p335
    %p337 = scmp.ne.s32.totalorder %s329, %s331
    %p338 = scmp.eq.s32.totalorder %s27, 1
    %p339 = por %p337, %p338
    %p340 = scmp.ne.s32.totalorder %s331, %s332
    %p341 = scmp.eq.s32.totalorder %s27, 0
    %p342 = por %p340, %p341
    %p343 = scmp.ne.s32.totalorder %s331, %s332
    %p344 = scmp.eq.s32.totalorder %s28, 1
    %p345 = por %p343, %p344
    %p347 = scmp.ne.s32.totalorder %s332, %s346
    %p348 = scmp.eq.s32.totalorder %s28, 0
    %p349 = por %p347, %p348
    %s351 = sadd.s32 %s350, 1
    %p354 = scmp.eq.s32.totalorder %s22, 1
    %p355 = scmp.ne.s32.totalorder %s350, %s352
    %p356 = scmp.eq.s32.totalorder %s22, 0
    %p357 = por %p355, %p356
    %p358 = scmp.ne.s32.totalorder %s350, %s352
    %p359 = scmp.eq.s32.totalorder %s27, 1
    %p360 = por %p358, %p359
    %p361 = scmp.ne.s32.totalorder %s352, %s353
    %p362 = scmp.eq.s32.totalorder %s27, 0
    %p363 = por %p361, %p362
    %p364 = scmp.ne.s32.totalorder %s352, %s353
    %p365 = scmp.eq.s32.totalorder %s28, 1
    %p366 = por %p364, %p365
    %p368 = scmp.ne.s32.totalorder %s353, %s367
    %p369 = scmp.eq.s32.totalorder %s28, 0
    %p370 = por %p368, %p369
    %s371 = ssub.s32 %s22, %s29
    %p372 = scmp.eq.s32.totalorder %s371, 0
    %s374 = sadd.s32 %s373, 1
    %s375 = scalar_select %p372, %s373, %s374
    %p378 = pneg %p372
    %p379 = scmp.eq.s32.totalorder %s22, 1
    %p380 = por %p378, %p379
    %p381 = scmp.ne.s32.totalorder %s373, %s376
    %p382 = scmp.eq.s32.totalorder %s22, 0
    %p383 = por %p381, %p382
    %p384 = scmp.ne.s32.totalorder %s373, %s376
    %p385 = scmp.eq.s32.totalorder %s27, 1
    %p386 = por %p384, %p385
    %p387 = scmp.ne.s32.totalorder %s376, %s377
    %p388 = scmp.eq.s32.totalorder %s27, 0
    %p389 = por %p387, %p388
    %p390 = scmp.ne.s32.totalorder %s376, %s377
    %p391 = scmp.eq.s32.totalorder %s28, 1
    %p392 = por %p390, %p391
    %p394 = scmp.ne.s32.totalorder %s377, %s393
    %p395 = scmp.eq.s32.totalorder %s28, 0
    %p396 = por %p394, %p395
    %p397 = scmp.le.s32.totalorder 1, %s22
    %p398 = scmp.lt.s32.totalorder %s22, 3
    %p399 = pnand %p397, %p398
    %p400 = pneg %p399
    // Predicated region
    $region9: #{_lambda_.1} parent=5 // pred_check
      _
    $region10: #{_lambda_.1} parent=5 // pred_check_branch
      %402 = sbr.rel (%p399) target = $region12
    $region11: #{_lambda_.1} parent=5 // pred_region
      %s403 = ssub.s32 %s22, 1
      // Predicated region
      $region13: #{_lambda_.1} parent=11 // pred_check
        %p404 = pneg %p69
      $region14: #{_lambda_.1} parent=11 // pred_check_branch
        %406 = sbr.rel (%p404) target = $region16
      $region15: #{_lambda_.1} parent=11 // pred_region
        _
      $region16: #{_lambda_.1} parent=11 // pred_fallthru
        _
      // Predicated region
      $region17: #{_lambda_.1} parent=11 // pred_check
        %p407 = pneg %p90
      $region18: #{_lambda_.1} parent=11 // pred_check_branch
        %409 = sbr.rel (%p407) target = $region20
      $region19: #{_lambda_.1} parent=11 // pred_region
        _
      $region20: #{_lambda_.1} parent=11 // pred_fallthru
        _
      // Predicated region
      $region21: #{_lambda_.1} parent=11 // pred_check
        %p410 = pneg %p111
      $region22: #{_lambda_.1} parent=11 // pred_check_branch
        %412 = sbr.rel (%p410) target = $region24
      $region23: #{_lambda_.1} parent=11 // pred_region
        _
      $region24: #{_lambda_.1} parent=11 // pred_fallthru
        _
      // Predicated region
      $region25: #{_lambda_.1} parent=11 // pred_check
        %p413 = pneg %p132
      $region26: #{_lambda_.1} parent=11 // pred_check_branch
        %415 = sbr.rel (%p413) target = $region28
      $region27: #{_lambda_.1} parent=11 // pred_region
        _
      $region28: #{_lambda_.1} parent=11 // pred_fallthru
        _
      // Predicated region
      $region29: #{_lambda_.1} parent=11 // pred_check
        %p416 = pneg %p153
      $region30: #{_lambda_.1} parent=11 // pred_check_branch
        %418 = sbr.rel (%p416) target = $region32
      $region31: #{_lambda_.1} parent=11 // pred_region
        _
      $region32: #{_lambda_.1} parent=11 // pred_fallthru
        _
      // Predicated region
      $region33: #{_lambda_.1} parent=11 // pred_check
        %p419 = pneg %p174
      $region34: #{_lambda_.1} parent=11 // pred_check_branch
        %421 = sbr.rel (%p419) target = $region36
      $region35: #{_lambda_.1} parent=11 // pred_region
        _
      $region36: #{_lambda_.1} parent=11 // pred_fallthru
        _
      // Predicated region
      $region37: #{_lambda_.1} parent=11 // pred_check
        %p422 = pneg %p195
      $region38: #{_lambda_.1} parent=11 // pred_check_branch
        %424 = sbr.rel (%p422) target = $region40
      $region39: #{_lambda_.1} parent=11 // pred_region
        _
      $region40: #{_lambda_.1} parent=11 // pred_fallthru
        _
      // Predicated region
      $region41: #{_lambda_.1} parent=11 // pred_check
        %p425 = pneg %p216
      $region42: #{_lambda_.1} parent=11 // pred_check_branch
        %427 = sbr.rel (%p425) target = $region44
      $region43: #{_lambda_.1} parent=11 // pred_region
        _
      $region44: #{_lambda_.1} parent=11 // pred_fallthru
        _
      // Predicated region
      $region45: #{_lambda_.1} parent=11 // pred_check
        %p428 = pneg %p237
      $region46: #{_lambda_.1} parent=11 // pred_check_branch
        %430 = sbr.rel (%p428) target = $region48
      $region47: #{_lambda_.1} parent=11 // pred_region
        _
      $region48: #{_lambda_.1} parent=11 // pred_fallthru
        _
      // Predicated region
      $region49: #{_lambda_.1} parent=11 // pred_check
        %p431 = pneg %p258
      $region50: #{_lambda_.1} parent=11 // pred_check_branch
        %433 = sbr.rel (%p431) target = $region52
      $region51: #{_lambda_.1} parent=11 // pred_region
        _
      $region52: #{_lambda_.1} parent=11 // pred_fallthru
        _
      // Predicated region
      $region53: #{_lambda_.1} parent=11 // pred_check
        %p434 = pneg %p279
      $region54: #{_lambda_.1} parent=11 // pred_check_branch
        %436 = sbr.rel (%p434) target = $region56
      $region55: #{_lambda_.1} parent=11 // pred_region
        _
      $region56: #{_lambda_.1} parent=11 // pred_fallthru
        _
      // Predicated region
      $region57: #{_lambda_.1} parent=11 // pred_check
        %p437 = pneg %p300
      $region58: #{_lambda_.1} parent=11 // pred_check_branch
        %439 = sbr.rel (%p437) target = $region60
      $region59: #{_lambda_.1} parent=11 // pred_region
        _
      $region60: #{_lambda_.1} parent=11 // pred_fallthru
        _
      // Predicated region
      $region61: #{_lambda_.1} parent=11 // pred_check
        %p440 = pneg %p321
      $region62: #{_lambda_.1} parent=11 // pred_check_branch
        %442 = sbr.rel (%p440) target = $region64
      $region63: #{_lambda_.1} parent=11 // pred_region
        _
      $region64: #{_lambda_.1} parent=11 // pred_fallthru
        _
      // Predicated region
      $region65: #{_lambda_.1} parent=11 // pred_check
        %p443 = pneg %p342
      $region66: #{_lambda_.1} parent=11 // pred_check_branch
        %445 = sbr.rel (%p443) target = $region68
      $region67: #{_lambda_.1} parent=11 // pred_region
        _
      $region68: #{_lambda_.1} parent=11 // pred_fallthru
        _
      // Predicated region
      $region69: #{_lambda_.1} parent=11 // pred_check
        %p446 = pneg %p363
      $region70: #{_lambda_.1} parent=11 // pred_check_branch
        %448 = sbr.rel (%p446) target = $region72
      $region71: #{_lambda_.1} parent=11 // pred_region
        _
      $region72: #{_lambda_.1} parent=11 // pred_fallthru
        _
    $region12: #{_lambda_.1} parent=5 // pred_fallthru
      _
    %p449 = scmp.lt.s32.totalorder %s22, 2
    // Predicated region
    $region73: #{_lambda_.1} parent=5 // pred_check
      %p450 = pneg %p449
    $region74: #{_lambda_.1} parent=5 // pred_check_branch
      %452 = sbr.rel (%p450) target = $region76
    $region75: #{_lambda_.1} parent=5 // pred_region
      // Predicated region
      $region77: #{_lambda_.1} parent=75 // pred_check
        %p453 = pneg %p42
      $region78: #{_lambda_.1} parent=75 // pred_check_branch
        %455 = sbr.rel (%p453) target = $region80
      $region79: #{_lambda_.1} parent=75 // pred_region
        %p456 = scmp.lt.s32.totalorder %s22, 1
        %s457 = scalar_select %p456, %s22, 1
        %s458 = smul.addr %s457, 4
        %s459 = smul.addr %s458, 8
        %s460 = scalar_lea.vmem %s0, %s459
      $region80: #{_lambda_.1} parent=75 // pred_fallthru
        _
    $region76: #{_lambda_.1} parent=5 // pred_fallthru
      _
    %p461 = scmp.le.s32.totalorder 1, %s22
    %p462 = scmp.lt.s32.totalorder %s22, 3
    %p463 = pnand %p461, %p462
    %p464 = pneg %p463
    // Predicated region
    $region81: #{_lambda_.1} parent=5 // pred_check
      _
    $region82: #{_lambda_.1} parent=5 // pred_check_branch
      %466 = sbr.rel (%p463) target = $region84
    $region83: #{_lambda_.1} parent=5 // pred_region
      %s467 = ssub.s32 %s22, 1
      %p468 = scmp.lt.s32.totalorder %s27, 1
      %s469 = scalar_select %p468, %s27, 1
      %s470 = smul.addr %s469, 4
      %s471 = smul.addr %s470, 8
      %s472 = scalar_lea.vmem %s0, %s471
      %p473 = pneg %p48
      %p474 = pneg %p45
      %p475 = pneg %p69
      %p476 = pneg %p66
      %p477 = pneg %p90
      %p478 = pneg %p87
      %p479 = pneg %p111
      %p480 = pneg %p108
      %p481 = pneg %p132
      %p482 = pneg %p129
      %p483 = pneg %p153
      %p484 = pneg %p150
      %p485 = pneg %p174
      %p486 = pneg %p171
      %p487 = pneg %p195
      %p488 = pneg %p192
      %p489 = pneg %p216
      %p490 = pneg %p213
      %p491 = pneg %p237
      %p492 = pneg %p234
      %p493 = pneg %p258
      %p494 = pneg %p255
      %p495 = pneg %p279
      %p496 = pneg %p276
      %p497 = pneg %p300
      %p498 = pneg %p297
      %p499 = pneg %p321
      %p500 = pneg %p318
      %p501 = pneg %p342
      %p502 = pneg %p339
      %p503 = pneg %p363
      %p504 = pneg %p360
      %p505 = pneg %p389
      %p506 = pneg %p386
      %p507 = scmp.lt.s32.totalorder %s27, 1
      %s508 = scalar_select %p507, %s27, 1
      %s509 = smul.addr %s508, 8
      %s510 = smul.addr %s509, 8
      %s511 = scalar_lea.vmem %s16, %s510
      %p512 = scmp.lt.s32.totalorder %s27, 1
      %s513 = scalar_select %p512, %s27, 1
      %s514 = smul.addr %s513, 4
      %s515 = smul.addr %s514, 8
      %s516 = scalar_lea.vmem %s0, %s515
      %p517 = scmp.lt.s32.totalorder %s27, 1
      %s518 = scalar_select %p517, %s27, 1
      %s519 = smul.addr %s518, 8
      %s520 = smul.addr %s519, 8
      %s521 = scalar_lea.vmem %s16, %s520
      %v523 = vld [vmem:[%s516] sm:$0xff]
      %v524 = vld [vmem:[%s516 + $0x8] sm:$0xff]
      %v525 = vld [vmem:[%s516 + $0x10] sm:$0xff]
      %v526 = vld [vmem:[%s516 + $0x18] sm:$0xff]
      %v527 = vpack.c.bf16 %v525, %v523
      %v528 = vpack.c.bf16 %v526, %v524
      %v529 = vld [vmem:[%s6] sm:$0xf]
      %v530 = vld [vmem:[%s6 + $0x4] sm:$0xf]
      %v531 = vld [vmem:[%s6 + $0x8] sm:$0xf]
      %v532 = vld [vmem:[%s6 + $0xc] sm:$0xf]
      %v533 = vld [vmem:[%s14] sm:$0xff]
      %v534 = vld [vmem:[%s14 + $0x8] sm:$0xff]
      %v535 = vld [vmem:[%s14 + $0x10] sm:$0xff]
      %v536 = vld [vmem:[%s14 + $0x18] sm:$0xff]
      %538 = vset.pattern.permute.xlu0 0
      %539 = vperm.xlu0 %538, %v533
      %v540 = vpop.permute.xlu0 %539
      %543 = vset.pattern.permute.xlu0 0
      %544 = vperm.xlu0 %543, %v534
      %v545 = vpop.permute.xlu0 %544
      %548 = vset.pattern.permute.xlu0 0
      %549 = vperm.xlu0 %548, %v535
      %v550 = vpop.permute.xlu0 %549
      %553 = vset.pattern.permute.xlu0 0
      %554 = vperm.xlu0 %553, %v536
      %v555 = vpop.permute.xlu0 %554
      %v561 = vunpack.c.l.b16 %v529
      %v562 = vunpack.c.l.b16 %v530
      %v563 = vunpack.c.l.b16 %v531
      %v564 = vunpack.c.l.b16 %v532
      %v565 = vpack.c.b16 %v562, %v561
      %v566 = vpack.c.b16 %v564, %v563
      %vm567 = vcmask 130048
      %v569 = vsel %vm567, %v565, 0
      %v572 = vsel %vm567, %v566, 0
      %574 = vmatprep.subr.bf16.mxu0 %v528
      %575 = vmatpush1.bf16.msra.mxu0 %v527
      %576 = vmatprep.subr.bf16.mxu0 0
      %577 = vmatpush1.bf16.msra.mxu0 0
      %578 = vmatprep.subr.bf16.mxu0 0
      %579 = vmatpush1.bf16.msra.mxu0 0
      %580 = vmatprep.subr.bf16.mxu0 0
      %581 = vmatpush1.bf16.msra.mxu0 0
      %582 = vmatprep.subr.bf16.mxu0 0
      %583 = vmatpush1.bf16.msra.mxu0 0
      %584 = vmatprep.subr.bf16.mxu0 0
      %585 = vmatpush1.bf16.msra.mxu0 0
      %586 = vmatprep.subr.bf16.mxu0 0
      %587 = vmatpush1.bf16.msra.mxu0 0
      %588 = vmatprep.subr.bf16.mxu0 0
      %589 = vmatpush1.bf16.msra.mxu0 0
      %590 = vmatprep.subr.bf16.mxu0 0
      %591 = vmatpush1.bf16.msra.mxu0 0
      %592 = vmatprep.subr.bf16.mxu0 0
      %593 = vmatpush1.bf16.msra.mxu0 0
      %594 = vmatprep.subr.bf16.mxu0 0
      %595 = vmatpush1.bf16.msra.mxu0 0
      %596 = vmatprep.subr.bf16.mxu0 0
      %597 = vmatpush1.bf16.msra.mxu0 0
      %598 = vmatprep.subr.bf16.mxu0 0
      %599 = vmatpush1.bf16.msra.mxu0 0
      %600 = vmatprep.subr.bf16.mxu0 0
      %601 = vmatpush1.bf16.msra.mxu0 0
      %602 = vmatprep.subr.bf16.mxu0 0
      %603 = vmatpush1.bf16.msra.mxu0 0
      %604 = vmatprep.subr.bf16.mxu0 0
      %605 = vmatpush1.bf16.msra.mxu0 0
      %606 = vmatprep.mubr.bf16.mxu0 0
      %607 = vmatmul.mubr.bf16.gmra.mrb[0].mxu0 %v569
      %v608 = vpop.f32.mrb[0].mxu0
      %v609 = vadd.f32 %v540, %v608
      %v610 = vpop.f32.mrb[0].mxu0
      %v611 = vadd.f32 %v540, %v610
      %v612 = vpop.f32.mrb[0].mxu0
      %v613 = vadd.f32 %v545, %v612
      %v614 = vpop.f32.mrb[0].mxu0
      %v615 = vadd.f32 %v545, %v614
      %616 = vmatprep.mubr.bf16.mxu0 0
      %617 = vmatmul.mubr.bf16.gmra.mrb[0].mxu0 %v572
      %v618 = vpop.f32.mrb[0].mxu0
      %v619 = vadd.f32 %v550, %v618
      %v620 = vpop.f32.mrb[0].mxu0
      %v621 = vadd.f32 %v550, %v620
      %v622 = vpop.f32.mrb[0].mxu0
      %v623 = vadd.f32 %v555, %v622
      %v624 = vpop.f32.mrb[0].mxu0
      %v625 = vadd.f32 %v555, %v624
      %626 = vdwg.mxu0
      %v627 = vadd.f32 %v609, %v613
      %v628 = vadd.f32 %v627, %v619
      %v629 = vadd.f32 %v628, %v623
      %v630 = vrot.slane %v629, 4
      %v631 = vadd.f32 %v629, %v630
      %v632 = vrot.slane %v631, 2
      %v633 = vadd.f32 %v631, %v632
      %v634 = vrot.slane %v633, 1
      %v635 = vadd.f32 %v633, %v634
      %v636 = vadd.f32 %v611, %v615
      %v637 = vadd.f32 %v636, %v621
      %v638 = vadd.f32 %v637, %v625
      %v639 = vrot.slane %v638, 4
      %v640 = vadd.f32 %v638, %v639
      %v641 = vrot.slane %v640, 2
      %v642 = vadd.f32 %v640, %v641
      %v643 = vrot.slane %v642, 1
      %v644 = vadd.f32 %v642, %v643
      %v645 = vrcp.pop 32.0
      %v646 = vmul.f32 %v635, %v645
      %v647 = vmul.f32 %v644, %v645
      %v648 = vsub.f32 %v609, %v646
      %v649 = vsub.f32 %v611, %v647
      %v650 = vsub.f32 %v613, %v646
      %v651 = vsub.f32 %v615, %v647
      %v652 = vsub.f32 %v619, %v646
      %v653 = vsub.f32 %v621, %v647
      %v654 = vsub.f32 %v623, %v646
      %v655 = vsub.f32 %v625, %v647
      %v656 = vmul.f32 %v648, %v648
      %v657 = vmul.f32 %v649, %v649
      %v658 = vmul.f32 %v650, %v650
      %v659 = vmul.f32 %v651, %v651
      %v660 = vmul.f32 %v652, %v652
      %v661 = vmul.f32 %v653, %v653
      %v662 = vmul.f32 %v654, %v654
      %v663 = vmul.f32 %v655, %v655
      %v664 = vadd.f32 %v656, %v658
      %v665 = vadd.f32 %v664, %v660
      %v666 = vadd.f32 %v665, %v662
      %v667 = vrot.slane %v666, 4
      %v668 = vadd.f32 %v666, %v667
      %v669 = vrot.slane %v668, 2
      %v670 = vadd.f32 %v668, %v669
      %v671 = vrot.slane %v670, 1
      %v672 = vadd.f32 %v670, %v671
      %v673 = vadd.f32 %v657, %v659
      %v674 = vadd.f32 %v673, %v661
      %v675 = vadd.f32 %v674, %v663
      %v676 = vrot.slane %v675, 4
      %v677 = vadd.f32 %v675, %v676
      %v678 = vrot.slane %v677, 2
      %v679 = vadd.f32 %v677, %v678
      %v680 = vrot.slane %v679, 1
      %v681 = vadd.f32 %v679, %v680
      %v682 = vmul.f32 %v672, %v645
      %v683 = vmul.f32 %v681, %v645
      %v684 = vadd.f32 %v682, 1e-05
      %v685 = vadd.f32 %v683, 1e-05
      %v686 = vrsqrt.pop %v684
      %v687 = vrsqrt.pop %v685
      %v688 = vmul.f32 %v648, %v686
      %v689 = vmul.f32 %v649, %v687
      %v690 = vmul.f32 %v650, %v686
      %v691 = vmul.f32 %v651, %v687
      %v692 = vmul.f32 %v652, %v686
      %v693 = vmul.f32 %v653, %v687
      %v694 = vmul.f32 %v654, %v686
      %v695 = vmul.f32 %v655, %v687
      %696 = vset.pattern.permute.xlu0 1
      %697 = vperm.xlu0 %696, %v533
      %v698 = vpop.permute.xlu0 %697
      %700 = vset.pattern.permute.xlu0 1
      %701 = vperm.xlu0 %700, %v534
      %v702 = vpop.permute.xlu0 %701
      %704 = vset.pattern.permute.xlu0 1
      %705 = vperm.xlu0 %704, %v535
      %v706 = vpop.permute.xlu0 %705
      %708 = vset.pattern.permute.xlu0 1
      %709 = vperm.xlu0 %708, %v536
      %v710 = vpop.permute.xlu0 %709
      %v712 = vmul.f32 %v688, %v698
      %v713 = vmul.f32 %v689, %v698
      %v714 = vmul.f32 %v690, %v702
      %v715 = vmul.f32 %v691, %v702
      %v716 = vmul.f32 %v692, %v706
      %v717 = vmul.f32 %v693, %v706
      %v718 = vmul.f32 %v694, %v710
      %v719 = vmul.f32 %v695, %v710
      %720 = vset.pattern.permute.xlu0 2
      %721 = vperm.xlu0 %720, %v533
      %v722 = vpop.permute.xlu0 %721
      %724 = vset.pattern.permute.xlu0 2
      %725 = vperm.xlu0 %724, %v534
      %v726 = vpop.permute.xlu0 %725
      %728 = vset.pattern.permute.xlu0 2
      %729 = vperm.xlu0 %728, %v535
      %v730 = vpop.permute.xlu0 %729
      %732 = vset.pattern.permute.xlu0 2
      %733 = vperm.xlu0 %732, %v536
      %v734 = vpop.permute.xlu0 %733
      %v736 = vadd.f32 %v712, %v722
      %v737 = vadd.f32 %v713, %v722
      %v738 = vadd.f32 %v714, %v726
      %v739 = vadd.f32 %v715, %v726
      %v740 = vadd.f32 %v716, %v730
      %v741 = vadd.f32 %v717, %v730
      %v742 = vadd.f32 %v718, %v734
      %v743 = vadd.f32 %v719, %v734
      %v744 = vpack.c.bf16 %v738, %v736
      %v745 = vpack.c.bf16 %v739, %v737
      %v746 = vpack.c.bf16 %v742, %v740
      %v747 = vpack.c.bf16 %v743, %v741
      %v748 = vld [vmem:[%s7] sm:$0xff]
      %v749 = vld [vmem:[%s7 + $0x8] sm:$0xff]
      %v750 = vld [vmem:[%s7 + $0x10] sm:$0xff]
      %v751 = vld [vmem:[%s7 + $0x18] sm:$0xff]
      %v752 = vld [vmem:[%s7 + $0x20] sm:$0xff]
      %v753 = vld [vmem:[%s7 + $0x28] sm:$0xff]
      %v754 = vld [vmem:[%s7 + $0x30] sm:$0xff]
      %v755 = vld [vmem:[%s7 + $0x38] sm:$0xff]
      %v756 = vld [vmem:[%s7 + $0x40] sm:$0xff]
      %v757 = vld [vmem:[%s7 + $0x48] sm:$0xff]
      %v758 = vld [vmem:[%s7 + $0x50] sm:$0xff]
      %v759 = vld [vmem:[%s7 + $0x58] sm:$0xff]
      %v760 = vld [vmem:[%s7 + $0x60] sm:$0xff]
      %v761 = vld [vmem:[%s7 + $0x68] sm:$0xff]
      %v762 = vld [vmem:[%s7 + $0x70] sm:$0xff]
      %v763 = vld [vmem:[%s7 + $0x78] sm:$0xff]
      %v764 = vld [vmem:[%s7 + $0x80] sm:$0xff]
      %v765 = vld [vmem:[%s7 + $0x88] sm:$0xff]
      %v766 = vld [vmem:[%s7 + $0x90] sm:$0xff]
      %v767 = vld [vmem:[%s7 + $0x98] sm:$0xff]
      %v768 = vld [vmem:[%s7 + $0xa0] sm:$0xff]
      %v769 = vld [vmem:[%s7 + $0xa8] sm:$0xff]
      %v770 = vld [vmem:[%s7 + $0xb0] sm:$0xff]
      %v771 = vld [vmem:[%s7 + $0xb8] sm:$0xff]
      %v772 = vld [vmem:[%s7 + $0xc0] sm:$0xff]
      %v773 = vld [vmem:[%s7 + $0xc8] sm:$0xff]
      %v774 = vld [vmem:[%s7 + $0xd0] sm:$0xff]
      %v775 = vld [vmem:[%s7 + $0xd8] sm:$0xff]
      %v776 = vld [vmem:[%s7 + $0xe0] sm:$0xff]
      %v777 = vld [vmem:[%s7 + $0xe8] sm:$0xff]
      %v778 = vld [vmem:[%s7 + $0xf0] sm:$0xff]
      %v779 = vld [vmem:[%s7 + $0xf8] sm:$0xff]
      %v780 = vld [vmem:[%s7 + $0x100] sm:$0xff]
      %v781 = vld [vmem:[%s7 + $0x108] sm:$0xff]
      %v782 = vld [vmem:[%s7 + $0x110] sm:$0xff]
      %v783 = vld [vmem:[%s7 + $0x118] sm:$0xff]
      %v784 = vld [vmem:[%s7 + $0x120] sm:$0xff]
      %v785 = vld [vmem:[%s7 + $0x128] sm:$0xff]
      %v786 = vld [vmem:[%s7 + $0x130] sm:$0xff]
      %v787 = vld [vmem:[%s7 + $0x138] sm:$0xff]
      %v788 = vld [vmem:[%s7 + $0x140] sm:$0xff]
      %v789 = vld [vmem:[%s7 + $0x148] sm:$0xff]
      %v790 = vld [vmem:[%s7 + $0x150] sm:$0xff]
      %v791 = vld [vmem:[%s7 + $0x158] sm:$0xff]
      %v792 = vld [vmem:[%s7 + $0x160] sm:$0xff]
      %v793 = vld [vmem:[%s7 + $0x168] sm:$0xff]
      %v794 = vld [vmem:[%s7 + $0x170] sm:$0xff]
      %v795 = vld [vmem:[%s7 + $0x178] sm:$0xff]
      %v796 = vld [vmem:[%s7 + $0x180] sm:$0xff]
      %v797 = vld [vmem:[%s7 + $0x188] sm:$0xff]
      %v798 = vld [vmem:[%s7 + $0x190] sm:$0xff]
      %v799 = vld [vmem:[%s7 + $0x198] sm:$0xff]
      %v800 = vld [vmem:[%s7 + $0x1a0] sm:$0xff]
      %v801 = vld [vmem:[%s7 + $0x1a8] sm:$0xff]
      %v802 = vld [vmem:[%s7 + $0x1b0] sm:$0xff]
      %v803 = vld [vmem:[%s7 + $0x1b8] sm:$0xff]
      %v804 = vld [vmem:[%s7 + $0x1c0] sm:$0xff]
      %v805 = vld [vmem:[%s7 + $0x1c8] sm:$0xff]
      %v806 = vld [vmem:[%s7 + $0x1d0] sm:$0xff]
      %v807 = vld [vmem:[%s7 + $0x1d8] sm:$0xff]
      %v808 = vld [vmem:[%s7 + $0x1e0] sm:$0xff]
      %v809 = vld [vmem:[%s7 + $0x1e8] sm:$0xff]
      %v810 = vld [vmem:[%s7 + $0x1f0] sm:$0xff]
      %v811 = vld [vmem:[%s7 + $0x1f8] sm:$0xff]
      %v876 = vunpack.c.l.b16 %v748
      %v877 = vunpack.c.h.b16 %v748
      %v878 = vunpack.c.l.b16 %v749
      %v879 = vunpack.c.h.b16 %v749
      %v880 = vunpack.c.l.b16 %v750
      %v881 = vunpack.c.h.b16 %v750
      %v882 = vunpack.c.l.b16 %v751
      %v883 = vunpack.c.h.b16 %v751
      %v884 = vunpack.c.l.b16 %v752
      %v885 = vunpack.c.h.b16 %v752
      %v886 = vunpack.c.l.b16 %v753
      %v887 = vunpack.c.h.b16 %v753
      %v888 = vunpack.c.l.b16 %v754
      %v889 = vunpack.c.h.b16 %v754
      %v890 = vunpack.c.l.b16 %v755
      %v891 = vunpack.c.h.b16 %v755
      %v892 = vunpack.c.l.b16 %v756
      %v893 = vunpack.c.h.b16 %v756
      %v894 = vunpack.c.l.b16 %v757
      %v895 = vunpack.c.h.b16 %v757
      %v896 = vunpack.c.l.b16 %v758
      %v897 = vunpack.c.h.b16 %v758
      %v898 = vunpack.c.l.b16 %v759
      %v899 = vunpack.c.h.b16 %v759
      %v900 = vunpack.c.l.b16 %v760
      %v901 = vunpack.c.h.b16 %v760
      %v902 = vunpack.c.l.b16 %v761
      %v903 = vunpack.c.h.b16 %v761
      %v904 = vunpack.c.l.b16 %v762
      %v905 = vunpack.c.h.b16 %v762
      %v906 = vunpack.c.l.b16 %v763
      %v907 = vunpack.c.h.b16 %v763
      %v908 = vunpack.c.l.b16 %v764
      %v909 = vunpack.c.h.b16 %v764
      %v910 = vunpack.c.l.b16 %v765
      %v911 = vunpack.c.h.b16 %v765
      %v912 = vunpack.c.l.b16 %v766
      %v913 = vunpack.c.h.b16 %v766
      %v914 = vunpack.c.l.b16 %v767
      %v915 = vunpack.c.h.b16 %v767
      %v916 = vunpack.c.l.b16 %v768
      %v917 = vunpack.c.h.b16 %v768
      %v918 = vunpack.c.l.b16 %v769
      %v919 = vunpack.c.h.b16 %v769
      %v920 = vunpack.c.l.b16 %v770
      %v921 = vunpack.c.h.b16 %v770
      %v922 = vunpack.c.l.b16 %v771
      %v923 = vunpack.c.h.b16 %v771
      %v924 = vunpack.c.l.b16 %v772
      %v925 = vunpack.c.h.b16 %v772
      %v926 = vunpack.c.l.b16 %v773
      %v927 = vunpack.c.h.b16 %v773
      %v928 = vunpack.c.l.b16 %v774
      %v929 = vunpack.c.h.b16 %v774
      %v930 = vunpack.c.l.b16 %v775
      %v931 = vunpack.c.h.b16 %v775
      %v932 = vunpack.c.l.b16 %v776
      %v933 = vunpack.c.h.b16 %v776
      %v934 = vunpack.c.l.b16 %v777
      %v935 = vunpack.c.h.b16 %v777
      %v936 = vunpack.c.l.b16 %v778
      %v937 = vunpack.c.h.b16 %v778
      %v938 = vunpack.c.l.b16 %v779
      %v939 = vunpack.c.h.b16 %v779
      %v940 = vunpack.c.l.b16 %v780
      %v941 = vunpack.c.h.b16 %v780
      %v942 = vunpack.c.l.b16 %v781
      %v943 = vunpack.c.h.b16 %v781
      %v944 = vunpack.c.l.b16 %v782
      %v945 = vunpack.c.h.b16 %v782
      %v946 = vunpack.c.l.b16 %v783
      %v947 = vunpack.c.h.b16 %v783
      %v948 = vunpack.c.l.b16 %v784
      %v949 = vunpack.c.h.b16 %v784
      %v950 = vunpack.c.l.b16 %v785
      %v951 = vunpack.c.h.b16 %v785
      %v952 = vunpack.c.l.b16 %v786
      %v953 = vunpack.c.h.b16 %v786
      %v954 = vunpack.c.l.b16 %v787
      %v955 = vunpack.c.h.b16 %v787
      %v956 = vunpack.c.l.b16 %v788
      %v957 = vunpack.c.h.b16 %v788
      %v958 = vunpack.c.l.b16 %v789
      %v959 = vunpack.c.h.b16 %v789
      %v960 = vunpack.c.l.b16 %v790
      %v961 = vunpack.c.h.b16 %v790
      %v962 = vunpack.c.l.b16 %v791
      %v963 = vunpack.c.h.b16 %v791
      %v964 = vunpack.c.l.b16 %v792
      %v965 = vunpack.c.h.b16 %v792
      %v966 = vunpack.c.l.b16 %v793
      %v967 = vunpack.c.h.b16 %v793
      %v968 = vunpack.c.l.b16 %v794
      %v969 = vunpack.c.h.b16 %v794
      %v970 = vunpack.c.l.b16 %v795
      %v971 = vunpack.c.h.b16 %v795
      %v972 = vunpack.c.l.b16 %v796
      %v973 = vunpack.c.h.b16 %v796
      %v974 = vunpack.c.l.b16 %v797
      %v975 = vunpack.c.h.b16 %v797
      %v976 = vunpack.c.l.b16 %v798
      %v977 = vunpack.c.h.b16 %v798
      %v978 = vunpack.c.l.b16 %v799
      %v979 = vunpack.c.h.b16 %v799
      %v980 = vunpack.c.l.b16 %v800
      %v981 = vunpack.c.h.b16 %v800
      %v982 = vunpack.c.l.b16 %v801
      %v983 = vunpack.c.h.b16 %v801
      %v984 = vunpack.c.l.b16 %v802
      %v985 = vunpack.c.h.b16 %v802
      %v986 = vunpack.c.l.b16 %v803
      %v987 = vunpack.c.h.b16 %v803
      %v988 = vunpack.c.l.b16 %v804
      %v989 = vunpack.c.h.b16 %v804
      %v990 = vunpack.c.l.b16 %v805
      %v991 = vunpack.c.h.b16 %v805
      %v992 = vunpack.c.l.b16 %v806
      %v993 = vunpack.c.h.b16 %v806
      %v994 = vunpack.c.l.b16 %v807
      %v995 = vunpack.c.h.b16 %v807
      %v996 = vunpack.c.l.b16 %v808
      %v997 = vunpack.c.h.b16 %v808
      %v998 = vunpack.c.l.b16 %v809
      %v999 = vunpack.c.h.b16 %v809
      %v1000 = vunpack.c.l.b16 %v810
      %v1001 = vunpack.c.h.b16 %v810
      %v1002 = vunpack.c.l.b16 %v811
      %v1003 = vunpack.c.h.b16 %v811
      %v1004 = vpack.c.b16 %v880, %v876
      %v1005 = vpack.c.b16 %v881, %v877
      %v1006 = vpack.c.b16 %v882, %v878
      %v1007 = vpack.c.b16 %v883, %v879
      %v1008 = vpack.c.b16 %v888, %v884
      %v1009 = vpack.c.b16 %v889, %v885
      %v1010 = vpack.c.b16 %v890, %v886
      %v1011 = vpack.c.b16 %v891, %v887
      %v1012 = vpack.c.b16 %v896, %v892
      %v1013 = vpack.c.b16 %v897, %v893
      %v1014 = vpack.c.b16 %v898, %v894
      %v1015 = vpack.c.b16 %v899, %v895
      %v1016 = vpack.c.b16 %v904, %v900
      %v1017 = vpack.c.b16 %v905, %v901
      %v1018 = vpack.c.b16 %v906, %v902
      %v1019 = vpack.c.b16 %v907, %v903
      %v1020 = vpack.c.b16 %v912, %v908
      %v1021 = vpack.c.b16 %v913, %v909
      %v1022 = vpack.c.b16 %v914, %v910
      %v1023 = vpack.c.b16 %v915, %v911
      %v1024 = vpack.c.b16 %v920, %v916
      %v1025 = vpack.c.b16 %v921, %v917
      %v1026 = vpack.c.b16 %v922, %v918
      %v1027 = vpack.c.b16 %v923, %v919
      %v1028 = vpack.c.b16 %v928, %v924
      %v1029 = vpack.c.b16 %v929, %v925
      %v1030 = vpack.c.b16 %v930, %v926
      %v1031 = vpack.c.b16 %v931, %v927
      %v1032 = vpack.c.b16 %v936, %v932
      %v1033 = vpack.c.b16 %v937, %v933
      %v1034 = vpack.c.b16 %v938, %v934
      %v1035 = vpack.c.b16 %v939, %v935
      %v1036 = vpack.c.b16 %v944, %v940
      %v1037 = vpack.c.b16 %v945, %v941
      %v1038 = vpack.c.b16 %v946, %v942
      %v1039 = vpack.c.b16 %v947, %v943
      %v1040 = vpack.c.b16 %v952, %v948
      %v1041 = vpack.c.b16 %v953, %v949
      %v1042 = vpack.c.b16 %v954, %v950
      %v1043 = vpack.c.b16 %v955, %v951
      %v1044 = vpack.c.b16 %v960, %v956
      %v1045 = vpack.c.b16 %v961, %v957
      %v1046 = vpack.c.b16 %v962, %v958
      %v1047 = vpack.c.b16 %v963, %v959
      %v1048 = vpack.c.b16 %v968, %v964
      %v1049 = vpack.c.b16 %v969, %v965
      %v1050 = vpack.c.b16 %v970, %v966
      %v1051 = vpack.c.b16 %v971, %v967
      %v1052 = vpack.c.b16 %v976, %v972
      %v1053 = vpack.c.b16 %v977, %v973
      %v1054 = vpack.c.b16 %v978, %v974
      %v1055 = vpack.c.b16 %v979, %v975
      %v1056 = vpack.c.b16 %v984, %v980
      %v1057 = vpack.c.b16 %v985, %v981
      %v1058 = vpack.c.b16 %v986, %v982
      %v1059 = vpack.c.b16 %v987, %v983
      %v1060 = vpack.c.b16 %v992, %v988
      %v1061 = vpack.c.b16 %v993, %v989
      %v1062 = vpack.c.b16 %v994, %v990
      %v1063 = vpack.c.b16 %v995, %v991
      %v1064 = vpack.c.b16 %v1000, %v996
      %v1065 = vpack.c.b16 %v1001, %v997
      %v1066 = vpack.c.b16 %v1002, %v998
      %v1067 = vpack.c.b16 %v1003, %v999
      %1132 = vmatprep.subr.bf16.mxu0 %v1005
      %1133 = vmatpush1.bf16.msra.mxu0 %v1004
      %1134 = vmatprep.subr.bf16.mxu0 %v1009
      %1135 = vmatpush1.bf16.msra.mxu0 %v1008
      %1136 = vmatprep.subr.bf16.mxu0 %v1013
      %1137 = vmatpush1.bf16.msra.mxu0 %v1012
      %1138 = vmatprep.subr.bf16.mxu0 %v1017
      %1139 = vmatpush1.bf16.msra.mxu0 %v1016
      %1140 = vmatprep.subr.bf16.mxu0 %v1021
      %1141 = vmatpush1.bf16.msra.mxu0 %v1020
      %1142 = vmatprep.subr.bf16.mxu0 %v1025
      %1143 = vmatpush1.bf16.msra.mxu0 %v1024
      %1144 = vmatprep.subr.bf16.mxu0 %v1029
      %1145 = vmatpush1.bf16.msra.mxu0 %v1028
      %1146 = vmatprep.subr.bf16.mxu0 %v1033
      %1147 = vmatpush1.bf16.msra.mxu0 %v1032
      %1148 = vmatprep.subr.bf16.mxu0 %v1037
      %1149 = vmatpush1.bf16.msra.mxu0 %v1036
      %1150 = vmatprep.subr.bf16.mxu0 %v1041
      %1151 = vmatpush1.bf16.msra.mxu0 %v1040
      %1152 = vmatprep.subr.bf16.mxu0 %v1045
      %1153 = vmatpush1.bf16.msra.mxu0 %v1044
      %1154 = vmatprep.subr.bf16.mxu0 %v1049
      %1155 = vmatpush1.bf16.msra.mxu0 %v1048
      %1156 = vmatprep.subr.bf16.mxu0 %v1053
      %1157 = vmatpush1.bf16.msra.mxu0 %v1052
      %1158 = vmatprep.subr.bf16.mxu0 %v1057
      %1159 = vmatpush1.bf16.msra.mxu0 %v1056
      %1160 = vmatprep.subr.bf16.mxu0 %v1061
      %1161 = vmatpush1.bf16.msra.mxu0 %v1060
      %1162 = vmatprep.subr.bf16.mxu0 %v1065
      %1163 = vmatpush1.bf16.msra.mxu0 %v1064
      %1164 = vmatprep.mubr.bf16.mxu0 %v745
      %1165 = vmatmul.mubr.bf16.gmra.mrb[0].mxu0 %v744
      %v1166 = vpop.f32.mrb[0].mxu0
      %v1167 = vadd.f32 0.0, %v1166
      %v1168 = vpop.f32.mrb[0].mxu0
      %v1169 = vadd.f32 0.0, %v1168
      %v1170 = vpop.f32.mrb[0].mxu0
      %v1171 = vadd.f32 0.0, %v1170
      %v1172 = vpop.f32.mrb[0].mxu0
      %v1173 = vadd.f32 0.0, %v1172
      %1174 = vmatprep.mubr.bf16.mxu0 %v747
      %1175 = vmatmul.mubr.bf16.gmra.mrb[0].mxu0 %v746
      %v1176 = vpop.f32.mrb[0].mxu0
      %v1177 = vadd.f32 0.0, %v1176
      %v1178 = vpop.f32.mrb[0].mxu0
      %v1179 = vadd.f32 0.0, %v1178
      %v1180 = vpop.f32.mrb[0].mxu0
      %v1181 = vadd.f32 0.0, %v1180
      %v1182 = vpop.f32.mrb[0].mxu0
      %v1183 = vadd.f32 0.0, %v1182
      %1184 = vdwg.mxu0
      %1185 = vmatprep.subr.bf16.mxu0 %v1007
      %1186 = vmatpush1.bf16.msra.mxu0 %v1006
      %1187 = vmatprep.subr.bf16.mxu0 %v1011
      %1188 = vmatpush1.bf16.msra.mxu0 %v1010
      %1189 = vmatprep.subr.bf16.mxu0 %v1015
      %1190 = vmatpush1.bf16.msra.mxu0 %v1014
      %1191 = vmatprep.subr.bf16.mxu0 %v1019
      %1192 = vmatpush1.bf16.msra.mxu0 %v1018
      %1193 = vmatprep.subr.bf16.mxu0 %v1023
      %1194 = vmatpush1.bf16.msra.mxu0 %v1022
      %1195 = vmatprep.subr.bf16.mxu0 %v1027
      %1196 = vmatpush1.bf16.msra.mxu0 %v1026
      %1197 = vmatprep.subr.bf16.mxu0 %v1031
      %1198 = vmatpush1.bf16.msra.mxu0 %v1030
      %1199 = vmatprep.subr.bf16.mxu0 %v1035
      %1200 = vmatpush1.bf16.msra.mxu0 %v1034
      %1201 = vmatprep.subr.bf16.mxu0 %v1039
      %1202 = vmatpush1.bf16.msra.mxu0 %v1038
      %1203 = vmatprep.subr.bf16.mxu0 %v1043
      %1204 = vmatpush1.bf16.msra.mxu0 %v1042
      %1205 = vmatprep.subr.bf16.mxu0 %v1047
      %1206 = vmatpush1.bf16.msra.mxu0 %v1046
      %1207 = vmatprep.subr.bf16.mxu0 %v1051
      %1208 = vmatpush1.bf16.msra.mxu0 %v1050
      %1209 = vmatprep.subr.bf16.mxu0 %v1055
      %1210 = vmatpush1.bf16.msra.mxu0 %v1054
      %1211 = vmatprep.subr.bf16.mxu0 %v1059
      %1212 = vmatpush1.bf16.msra.mxu0 %v1058
      %1213 = vmatprep.subr.bf16.mxu0 %v1063
      %1214 = vmatpush1.bf16.msra.mxu0 %v1062
      %1215 = vmatprep.subr.bf16.mxu0 %v1067
      %1216 = vmatpush1.bf16.msra.mxu0 %v1066
      %1217 = vmatprep.mubr.bf16.mxu0 %v745
      %1218 = vmatmul.mubr.bf16.gmra.mrb[0].mxu0 %v744
      %v1219 = vpop.f32.mrb[0].mxu0
      %v1220 = vadd.f32 0.0, %v1219
      %v1221 = vpop.f32.mrb[0].mxu0
      %v1222 = vadd.f32 0.0, %v1221
      %v1223 = vpop.f32.mrb[0].mxu0
      %v1224 = vadd.f32 0.0, %v1223
      %v1225 = vpop.f32.mrb[0].mxu0
      %v1226 = vadd.f32 0.0, %v1225
      %1227 = vmatprep.mubr.bf16.mxu0 %v747
      %1228 = vmatmul.mubr.bf16.gmra.mrb[0].mxu0 %v746
      %v1229 = vpop.f32.mrb[0].mxu0
      %v1230 = vadd.f32 0.0, %v1229
      %v1231 = vpop.f32.mrb[0].mxu0
      %v1232 = vadd.f32 0.0, %v1231
      %v1233 = vpop.f32.mrb[0].mxu0
      %v1234 = vadd.f32 0.0, %v1233
      %v1235 = vpop.f32.mrb[0].mxu0
      %v1236 = vadd.f32 0.0, %v1235
      %1237 = vdwg.mxu0
      %v1238 = vld [vmem:[%s9] sm:$0xff]
      %v1239 = vld [vmem:[%s9 + $0x8] sm:$0xff]
      %v1240 = vld [vmem:[%s9 + $0x10] sm:$0xff]
      %v1241 = vld [vmem:[%s9 + $0x18] sm:$0xff]
      %v1242 = vld [vmem:[%s9 + $0x20] sm:$0xff]
      %v1243 = vld [vmem:[%s9 + $0x28] sm:$0xff]
      %v1244 = vld [vmem:[%s9 + $0x30] sm:$0xff]
      %v1245 = vld [vmem:[%s9 + $0x38] sm:$0xff]
      %v1246 = vmul.f32 %v1167, %v1238
      %v1247 = vmul.f32 %v1169, %v1239
      %v1248 = vmul.f32 %v1171, %v1240
      %v1249 = vmul.f32 %v1173, %v1241
      %v1250 = vmul.f32 %v1177, %v1242
      %v1251 = vmul.f32 %v1179, %v1243
      %v1252 = vmul.f32 %v1181, %v1244
      %v1253 = vmul.f32 %v1183, %v1245
      %v1254 = vld [vmem:[%s10] sm:$0xff]
      %v1255 = vld [vmem:[%s10 + $0x8] sm:$0xff]
      %v1256 = vld [vmem:[%s10 + $0x10] sm:$0xff]
      %v1257 = vld [vmem:[%s10 + $0x18] sm:$0xff]
      %v1258 = vld [vmem:[%s10 + $0x20] sm:$0xff]
      %v1259 = vld [vmem:[%s10 + $0x28] sm:$0xff]
      %v1260 = vld [vmem:[%s10 + $0x30] sm:$0xff]
      %v1261 = vld [vmem:[%s10 + $0x38] sm:$0xff]
      %v1262 = vmul.f32 %v1220, %v1254
      %v1263 = vmul.f32 %v1222, %v1255
      %v1264 = vmul.f32 %v1224, %v1256
      %v1265 = vmul.f32 %v1226, %v1257
      %v1266 = vmul.f32 %v1230, %v1258
      %v1267 = vmul.f32 %v1232, %v1259
      %v1268 = vmul.f32 %v1234, %v1260
      %v1269 = vmul.f32 %v1236, %v1261
      %v1270 = vsub.f32 %v1246, %v1262
      %v1271 = vsub.f32 %v1247, %v1263
      %v1272 = vsub.f32 %v1248, %v1264
      %v1273 = vsub.f32 %v1249, %v1265
      %v1274 = vsub.f32 %v1250, %v1266
      %v1275 = vsub.f32 %v1251, %v1267
      %v1276 = vsub.f32 %v1252, %v1268
      %v1277 = vsub.f32 %v1253, %v1269
      %v1278 = vmul.f32 %v1167, %v1254
      %v1279 = vmul.f32 %v1169, %v1255
      %v1280 = vmul.f32 %v1171, %v1256
      %v1281 = vmul.f32 %v1173, %v1257
      %v1282 = vmul.f32 %v1177, %v1258
      %v1283 = vmul.f32 %v1179, %v1259
      %v1284 = vmul.f32 %v1181, %v1260
      %v1285 = vmul.f32 %v1183, %v1261
      %v1286 = vmul.f32 %v1220, %v1238
      %v1287 = vmul.f32 %v1222, %v1239
      %v1288 = vmul.f32 %v1224, %v1240
      %v1289 = vmul.f32 %v1226, %v1241
      %v1290 = vmul.f32 %v1230, %v1242
      %v1291 = vmul.f32 %v1232, %v1243
      %v1292 = vmul.f32 %v1234, %v1244
      %v1293 = vmul.f32 %v1236, %v1245
      %v1294 = vadd.f32 %v1278, %v1286
      %v1295 = vadd.f32 %v1279, %v1287
      %v1296 = vadd.f32 %v1280, %v1288
      %v1297 = vadd.f32 %v1281, %v1289
      %v1298 = vadd.f32 %v1282, %v1290
      %v1299 = vadd.f32 %v1283, %v1291
      %v1300 = vadd.f32 %v1284, %v1292
      %v1301 = vadd.f32 %v1285, %v1293
      %v1302 = vpack.c.bf16 %v1272, %v1270
      %v1303 = vpack.c.bf16 %v1273, %v1271
      %v1304 = vpack.c.bf16 %v1296, %v1294
      %v1305 = vpack.c.bf16 %v1297, %v1295
      %v1306 = vpack.c.bf16 %v1276, %v1274
      %v1307 = vpack.c.bf16 %v1277, %v1275
      %v1308 = vpack.c.bf16 %v1300, %v1298
      %v1309 = vpack.c.bf16 %v1301, %v1299
      %v1310 = vld [vmem:[%s8] sm:$0xff]
      %v1311 = vld [vmem:[%s8 + $0x8] sm:$0xff]
      %v1312 = vld [vmem:[%s8 + $0x10] sm:$0xff]
      %v1313 = vld [vmem:[%s8 + $0x18] sm:$0xff]
      %v1314 = vld [vmem:[%s8 + $0x20] sm:$0xff]
      %v1315 = vld [vmem:[%s8 + $0x28] sm:$0xff]
      %v1316 = vld [vmem:[%s8 + $0x30] sm:$0xff]
      %v1317 = vld [vmem:[%s8 + $0x38] sm:$0xff]
      %v1318 = vld [vmem:[%s8 + $0x40] sm:$0xff]
      %v1319 = vld [vmem:[%s8 + $0x48] sm:$0xff]
      %v1320 = vld [vmem:[%s8 + $0x50] sm:$0xff]
      %v1321 = vld [vmem:[%s8 + $0x58] sm:$0xff]
      %v1322 = vld [vmem:[%s8 + $0x60] sm:$0xff]
      %v1323 = vld [vmem:[%s8 + $0x68] sm:$0xff]
      %v1324 = vld [vmem:[%s8 + $0x70] sm:$0xff]
      %v1325 = vld [vmem:[%s8 + $0x78] sm:$0xff]
      %v1326 = vld [vmem:[%s8 + $0x80] sm:$0xff]
      %v1327 = vld [vmem:[%s8 + $0x88] sm:$0xff]
      %v1328 = vld [vmem:[%s8 + $0x90] sm:$0xff]
      %v1329 = vld [vmem:[%s8 + $0x98] sm:$0xff]
      %v1330 = vld [vmem:[%s8 + $0xa0] sm:$0xff]
      %v1331 = vld [vmem:[%s8 + $0xa8] sm:$0xff]
      %v1332 = vld [vmem:[%s8 + $0xb0] sm:$0xff]
      %v1333 = vld [vmem:[%s8 + $0xb8] sm:$0xff]
      %v1334 = vld [vmem:[%s8 + $0xc0] sm:$0xff]
      %v1335 = vld [vmem:[%s8 + $0xc8] sm:$0xff]
      %v1336 = vld [vmem:[%s8 + $0xd0] sm:$0xff]
      %v1337 = vld [vmem:[%s8 + $0xd8] sm:$0xff]
      %v1338 = vld [vmem:[%s8 + $0xe0] sm:$0xff]
      %v1339 = vld [vmem:[%s8 + $0xe8] sm:$0xff]
      %v1340 = vld [vmem:[%s8 + $0xf0] sm:$0xff]
      %v1341 = vld [vmem:[%s8 + $0xf8] sm:$0xff]
      %v1342 = vld [vmem:[%s8 + $0x100] sm:$0xff]
      %v1343 = vld [vmem:[%s8 + $0x108] sm:$0xff]
      %v1344 = vld [vmem:[%s8 + $0x110] sm:$0xff]
      %v1345 = vld [vmem:[%s8 + $0x118] sm:$0xff]
      %v1346 = vld [vmem:[%s8 + $0x120] sm:$0xff]
      %v1347 = vld [vmem:[%s8 + $0x128] sm:$0xff]
      %v1348 = vld [vmem:[%s8 + $0x130] sm:$0xff]
      %v1349 = vld [vmem:[%s8 + $0x138] sm:$0xff]
      %v1350 = vld [vmem:[%s8 + $0x140] sm:$0xff]
      %v1351 = vld [vmem:[%s8 + $0x148] sm:$0xff]
      %v1352 = vld [vmem:[%s8 + $0x150] sm:$0xff]
      %v1353 = vld [vmem:[%s8 + $0x158] sm:$0xff]
      %v1354 = vld [vmem:[%s8 + $0x160] sm:$0xff]
      %v1355 = vld [vmem:[%s8 + $0x168] sm:$0xff]
      %v1356 = vld [vmem:[%s8 + $0x170] sm:$0xff]
      %v1357 = vld [vmem:[%s8 + $0x178] sm:$0xff]
      %v1358 = vld [vmem:[%s8 + $0x180] sm:$0xff]
      %v1359 = vld [vmem:[%s8 + $0x188] sm:$0xff]
      %v1360 = vld [vmem:[%s8 + $0x190] sm:$0xff]
      %v1361 = vld [vmem:[%s8 + $0x198] sm:$0xff]
      %v1362 = vld [vmem:[%s8 + $0x1a0] sm:$0xff]
      %v1363 = vld [vmem:[%s8 + $0x1a8] sm:$0xff]
      %v1364 = vld [vmem:[%s8 + $0x1b0] sm:$0xff]
      %v1365 = vld [vmem:[%s8 + $0x1b8] sm:$0xff]
      %v1366 = vld [vmem:[%s8 + $0x1c0] sm:$0xff]
      %v1367 = vld [vmem:[%s8 + $0x1c8] sm:$0xff]
      %v1368 = vld [vmem:[%s8 + $0x1d0] sm:$0xff]
      %v1369 = vld [vmem:[%s8 + $0x1d8] sm:$0xff]
      %v1370 = vld [vmem:[%s8 + $0x1e0] sm:$0xff]
      %v1371 = vld [vmem:[%s8 + $0x1e8] sm:$0xff]
      %v1372 = vld [vmem:[%s8 + $0x1f0] sm:$0xff]
      %v1373 = vld [vmem:[%s8 + $0x1f8] sm:$0xff]
      %v1438 = vunpack.c.l.b16 %v1310
      %v1439 = vunpack.c.h.b16 %v1310
      %v1440 = vunpack.c.l.b16 %v1311
      %v1441 = vunpack.c.h.b16 %v1311
      %v1442 = vunpack.c.l.b16 %v1312
      %v1443 = vunpack.c.h.b16 %v1312
      %v1444 = vunpack.c.l.b16 %v1313
      %v1445 = vunpack.c.h.b16 %v1313
      %v1446 = vunpack.c.l.b16 %v1314
      %v1447 = vunpack.c.h.b16 %v1314
      %v1448 = vunpack.c.l.b16 %v1315
      %v1449 = vunpack.c.h.b16 %v1315
      %v1450 = vunpack.c.l.b16 %v1316
      %v1451 = vunpack.c.h.b16 %v1316
      %v1452 = vunpack.c.l.b16 %v1317
      %v1453 = vunpack.c.h.b16 %v1317
      %v1454 = vunpack.c.l.b16 %v1318
      %v1455 = vunpack.c.h.b16 %v1318
      %v1456 = vunpack.c.l.b16 %v1319
      %v1457 = vunpack.c.h.b16 %v1319
      %v1458 = vunpack.c.l.b16 %v1320
      %v1459 = vunpack.c.h.b16 %v1320
      %v1460 = vunpack.c.l.b16 %v1321
      %v1461 = vunpack.c.h.b16 %v1321
      %v1462 = vunpack.c.l.b16 %v1322
      %v1463 = vunpack.c.h.b16 %v1322
      %v1464 = vunpack.c.l.b16 %v1323
      %v1465 = vunpack.c.h.b16 %v1323
      %v1466 = vunpack.c.l.b16 %v1324
      %v1467 = vunpack.c.h.b16 %v1324
      %v1468 = vunpack.c.l.b16 %v1325
      %v1469 = vunpack.c.h.b16 %v1325
      %v1470 = vunpack.c.l.b16 %v1326
      %v1471 = vunpack.c.h.b16 %v1326
      %v1472 = vunpack.c.l.b16 %v1327
      %v1473 = vunpack.c.h.b16 %v1327
      %v1474 = vunpack.c.l.b16 %v1328
      %v1475 = vunpack.c.h.b16 %v1328
      %v1476 = vunpack.c.l.b16 %v1329
      %v1477 = vunpack.c.h.b16 %v1329
      %v1478 = vunpack.c.l.b16 %v1330
      %v1479 = vunpack.c.h.b16 %v1330
      %v1480 = vunpack.c.l.b16 %v1331
      %v1481 = vunpack.c.h.b16 %v1331
      %v1482 = vunpack.c.l.b16 %v1332
      %v1483 = vunpack.c.h.b16 %v1332
      %v1484 = vunpack.c.l.b16 %v1333
      %v1485 = vunpack.c.h.b16 %v1333
      %v1486 = vunpack.c.l.b16 %v1334
      %v1487 = vunpack.c.h.b16 %v1334
      %v1488 = vunpack.c.l.b16 %v1335
      %v1489 = vunpack.c.h.b16 %v1335
      %v1490 = vunpack.c.l.b16 %v1336
      %v1491 = vunpack.c.h.b16 %v1336
      %v1492 = vunpack.c.l.b16 %v1337
      %v1493 = vunpack.c.h.b16 %v1337
      %v1494 = vunpack.c.l.b16 %v1338
      %v1495 = vunpack.c.h.b16 %v1338
      %v1496 = vunpack.c.l.b16 %v1339
      %v1497 = vunpack.c.h.b16 %v1339
      %v1498 = vunpack.c.l.b16 %v1340
      %v1499 = vunpack.c.h.b16 %v1340
      %v1500 = vunpack.c.l.b16 %v1341
      %v1501 = vunpack.c.h.b16 %v1341
      %v1502 = vunpack.c.l.b16 %v1342
      %v1503 = vunpack.c.h.b16 %v1342
      %v1504 = vunpack.c.l.b16 %v1343
      %v1505 = vunpack.c.h.b16 %v1343
      %v1506 = vunpack.c.l.b16 %v1344
      %v1507 = vunpack.c.h.b16 %v1344
      %v1508 = vunpack.c.l.b16 %v1345
      %v1509 = vunpack.c.h.b16 %v1345
      %v1510 = vunpack.c.l.b16 %v1346
      %v1511 = vunpack.c.h.b16 %v1346
      %v1512 = vunpack.c.l.b16 %v1347
      %v1513 = vunpack.c.h.b16 %v1347
      %v1514 = vunpack.c.l.b16 %v1348
      %v1515 = vunpack.c.h.b16 %v1348
      %v1516 = vunpack.c.l.b16 %v1349
      %v1517 = vunpack.c.h.b16 %v1349
      %v1518 = vunpack.c.l.b16 %v1350
      %v1519 = vunpack.c.h.b16 %v1350
      %v1520 = vunpack.c.l.b16 %v1351
      %v1521 = vunpack.c.h.b16 %v1351
      %v1522 = vunpack.c.l.b16 %v1352
      %v1523 = vunpack.c.h.b16 %v1352
      %v1524 = vunpack.c.l.b16 %v1353
      %v1525 = vunpack.c.h.b16 %v1353
      %v1526 = vunpack.c.l.b16 %v1354
      %v1527 = vunpack.c.h.b16 %v1354
      %v1528 = vunpack.c.l.b16 %v1355
      %v1529 = vunpack.c.h.b16 %v1355
      %v1530 = vunpack.c.l.b16 %v1356
      %v1531 = vunpack.c.h.b16 %v1356
      %v1532 = vunpack.c.l.b16 %v1357
      %v1533 = vunpack.c.h.b16 %v1357
      %v1534 = vunpack.c.l.b16 %v1358
      %v1535 = vunpack.c.h.b16 %v1358
      %v1536 = vunpack.c.l.b16 %v1359
      %v1537 = vunpack.c.h.b16 %v1359
      %v1538 = vunpack.c.l.b16 %v1360
      %v1539 = vunpack.c.h.b16 %v1360
      %v1540 = vunpack.c.l.b16 %v1361
      %v1541 = vunpack.c.h.b16 %v1361
      %v1542 = vunpack.c.l.b16 %v1362
      %v1543 = vunpack.c.h.b16 %v1362
      %v1544 = vunpack.c.l.b16 %v1363
      %v1545 = vunpack.c.h.b16 %v1363
      %v1546 = vunpack.c.l.b16 %v1364
      %v1547 = vunpack.c.h.b16 %v1364
      %v1548 = vunpack.c.l.b16 %v1365
      %v1549 = vunpack.c.h.b16 %v1365
      %v1550 = vunpack.c.l.b16 %v1366
      %v1551 = vunpack.c.h.b16 %v1366
      %v1552 = vunpack.c.l.b16 %v1367
      %v1553 = vunpack.c.h.b16 %v1367
      %v1554 = vunpack.c.l.b16 %v1368
      %v1555 = vunpack.c.h.b16 %v1368
      %v1556 = vunpack.c.l.b16 %v1369
      %v1557 = vunpack.c.h.b16 %v1369
      %v1558 = vunpack.c.l.b16 %v1370
      %v1559 = vunpack.c.h.b16 %v1370
      %v1560 = vunpack.c.l.b16 %v1371
      %v1561 = vunpack.c.h.b16 %v1371
      %v1562 = vunpack.c.l.b16 %v1372
      %v1563 = vunpack.c.h.b16 %v1372
      %v1564 = vunpack.c.l.b16 %v1373
      %v1565 = vunpack.c.h.b16 %v1373
      %v1566 = vpack.c.b16 %v1440, %v1438
      %v1567 = vpack.c.b16 %v1441, %v1439
      %v1568 = vpack.c.b16 %v1444, %v1442
      %v1569 = vpack.c.b16 %v1445, %v1443
      %v1570 = vpack.c.b16 %v1448, %v1446
      %v1571 = vpack.c.b16 %v1449, %v1447
      %v1572 = vpack.c.b16 %v1452, %v1450
      %v1573 = vpack.c.b16 %v1453, %v1451
      %v1574 = vpack.c.b16 %v1456, %v1454
      %v1575 = vpack.c.b16 %v1457, %v1455
      %v1576 = vpack.c.b16 %v1460, %v1458
      %v1577 = vpack.c.b16 %v1461, %v1459
      %v1578 = vpack.c.b16 %v1464, %v1462
      %v1579 = vpack.c.b16 %v1465, %v1463
      %v1580 = vpack.c.b16 %v1468, %v1466
      %v1581 = vpack.c.b16 %v1469, %v1467
      %v1582 = vpack.c.b16 %v1472, %v1470
      %v1583 = vpack.c.b16 %v1473, %v1471
      %v1584 = vpack.c.b16 %v1476, %v1474
      %v1585 = vpack.c.b16 %v1477, %v1475
      %v1586 = vpack.c.b16 %v1480, %v1478
      %v1587 = vpack.c.b16 %v1481, %v1479
      %v1588 = vpack.c.b16 %v1484, %v1482
      %v1589 = vpack.c.b16 %v1485, %v1483
      %v1590 = vpack.c.b16 %v1488, %v1486
      %v1591 = vpack.c.b16 %v1489, %v1487
      %v1592 = vpack.c.b16 %v1492, %v1490
      %v1593 = vpack.c.b16 %v1493, %v1491
      %v1594 = vpack.c.b16 %v1496, %v1494
      %v1595 = vpack.c.b16 %v1497, %v1495
      %v1596 = vpack.c.b16 %v1500, %v1498
      %v1597 = vpack.c.b16 %v1501, %v1499
      %v1598 = vpack.c.b16 %v1504, %v1502
      %v1599 = vpack.c.b16 %v1505, %v1503
      %v1600 = vpack.c.b16 %v1508, %v1506
      %v1601 = vpack.c.b16 %v1509, %v1507
      %v1602 = vpack.c.b16 %v1512, %v1510
      %v1603 = vpack.c.b16 %v1513, %v1511
      %v1604 = vpack.c.b16 %v1516, %v1514
      %v1605 = vpack.c.b16 %v1517, %v1515
      %v1606 = vpack.c.b16 %v1520, %v1518
      %v1607 = vpack.c.b16 %v1521, %v1519
      %v1608 = vpack.c.b16 %v1524, %v1522
      %v1609 = vpack.c.b16 %v1525, %v1523
      %v1610 = vpack.c.b16 %v1528, %v1526
      %v1611 = vpack.c.b16 %v1529, %v1527
      %v1612 = vpack.c.b16 %v1532, %v1530
      %v1613 = vpack.c.b16 %v1533, %v1531
      %v1614 = vpack.c.b16 %v1536, %v1534
      %v1615 = vpack.c.b16 %v1537, %v1535
      %v1616 = vpack.c.b16 %v1540, %v1538
      %v1617 = vpack.c.b16 %v1541, %v1539
      %v1618 = vpack.c.b16 %v1544, %v1542
      %v1619 = vpack.c.b16 %v1545, %v1543
      %v1620 = vpack.c.b16 %v1548, %v1546
      %v1621 = vpack.c.b16 %v1549, %v1547
      %v1622 = vpack.c.b16 %v1552, %v1550
      %v1623 = vpack.c.b16 %v1553, %v1551
      %v1624 = vpack.c.b16 %v1556, %v1554
      %v1625 = vpack.c.b16 %v1557, %v1555
      %v1626 = vpack.c.b16 %v1560, %v1558
      %v1627 = vpack.c.b16 %v1561, %v1559
      %v1628 = vpack.c.b16 %v1564, %v1562
      %v1629 = vpack.c.b16 %v1565, %v1563
      %1694 = vmatprep.subr.bf16.mxu0 %v1567
      %1695 = vmatpush1.bf16.msra.mxu0 %v1566
      %1696 = vmatprep.subr.bf16.mxu0 %v1569
      %1697 = vmatpush1.bf16.msra.mxu0 %v1568
      %1698 = vmatprep.subr.bf16.mxu0 %v1571
      %1699 = vmatpush1.bf16.msra.mxu0 %v1570
      %1700 = vmatprep.subr.bf16.mxu0 %v1573
      %1701 = vmatpush1.bf16.msra.mxu0 %v1572
      %1702 = vmatprep.subr.bf16.mxu0 %v1575
      %1703 = vmatpush1.bf16.msra.mxu0 %v1574
      %1704 = vmatprep.subr.bf16.mxu0 %v1577
      %1705 = vmatpush1.bf16.msra.mxu0 %v1576
      %1706 = vmatprep.subr.bf16.mxu0 %v1579
      %1707 = vmatpush1.bf16.msra.mxu0 %v1578
      %1708 = vmatprep.subr.bf16.mxu0 %v1581
      %1709 = vmatpush1.bf16.msra.mxu0 %v1580
      %1710 = vmatprep.subr.bf16.mxu0 %v1583
      %1711 = vmatpush1.bf16.msra.mxu0 %v1582
      %1712 = vmatprep.subr.bf16.mxu0 %v1585
      %1713 = vmatpush1.bf16.msra.mxu0 %v1584
      %1714 = vmatprep.subr.bf16.mxu0 %v1587
      %1715 = vmatpush1.bf16.msra.mxu0 %v1586
      %1716 = vmatprep.subr.bf16.mxu0 %v1589
      %1717 = vmatpush1.bf16.msra.mxu0 %v1588
      %1718 = vmatprep.subr.bf16.mxu0 %v1591
      %1719 = vmatpush1.bf16.msra.mxu0 %v1590
      %1720 = vmatprep.subr.bf16.mxu0 %v1593
      %1721 = vmatpush1.bf16.msra.mxu0 %v1592
      %1722 = vmatprep.subr.bf16.mxu0 %v1595
      %1723 = vmatpush1.bf16.msra.mxu0 %v1594
      %1724 = vmatprep.subr.bf16.mxu0 %v1597
      %1725 = vmatpush1.bf16.msra.mxu0 %v1596
      %1726 = vmatprep.mubr.bf16.mxu0 %v1303
      %1727 = vmatmul.mubr.bf16.gmra.mrb[0].mxu0 %v1302
      %v1728 = vpop.f32.mrb[0].mxu0
      %v1729 = vadd.f32 0.0, %v1728
      %v1730 = vpop.f32.mrb[0].mxu0
      %v1731 = vadd.f32 0.0, %v1730
      %v1732 = vpop.f32.mrb[0].mxu0
      %v1733 = vadd.f32 0.0, %v1732
      %v1734 = vpop.f32.mrb[0].mxu0
      %v1735 = vadd.f32 0.0, %v1734
      %1736 = vmatprep.mubr.bf16.mxu0 %v1307
      %1737 = vmatmul.mubr.bf16.gmra.mrb[0].mxu0 %v1306
      %v1738 = vpop.f32.mrb[0].mxu0
      %v1739 = vadd.f32 0.0, %v1738
      %v1740 = vpop.f32.mrb[0].mxu0
      %v1741 = vadd.f32 0.0, %v1740
      %v1742 = vpop.f32.mrb[0].mxu0
      %v1743 = vadd.f32 0.0, %v1742
      %v1744 = vpop.f32.mrb[0].mxu0
      %v1745 = vadd.f32 0.0, %v1744
      %1746 = vdwg.mxu0
      %1747 = vmatprep.subr.bf16.mxu0 %v1599
      %1748 = vmatpush1.bf16.msra.mxu0 %v1598
      %1749 = vmatprep.subr.bf16.mxu0 %v1601
      %1750 = vmatpush1.bf16.msra.mxu0 %v1600
      %1751 = vmatprep.subr.bf16.mxu0 %v1603
      %1752 = vmatpush1.bf16.msra.mxu0 %v1602
      %1753 = vmatprep.subr.bf16.mxu0 %v1605
      %1754 = vmatpush1.bf16.msra.mxu0 %v1604
      %1755 = vmatprep.subr.bf16.mxu0 %v1607
      %1756 = vmatpush1.bf16.msra.mxu0 %v1606
      %1757 = vmatprep.subr.bf16.mxu0 %v1609
      %1758 = vmatpush1.bf16.msra.mxu0 %v1608
      %1759 = vmatprep.subr.bf16.mxu0 %v1611
      %1760 = vmatpush1.bf16.msra.mxu0 %v1610
      %1761 = vmatprep.subr.bf16.mxu0 %v1613
      %1762 = vmatpush1.bf16.msra.mxu0 %v1612
      %1763 = vmatprep.subr.bf16.mxu0 %v1615
      %1764 = vmatpush1.bf16.msra.mxu0 %v1614
      %1765 = vmatprep.subr.bf16.mxu0 %v1617
      %1766 = vmatpush1.bf16.msra.mxu0 %v1616
      %1767 = vmatprep.subr.bf16.mxu0 %v1619
      %1768 = vmatpush1.bf16.msra.mxu0 %v1618
      %1769 = vmatprep.subr.bf16.mxu0 %v1621
      %1770 = vmatpush1.bf16.msra.mxu0 %v1620
      %1771 = vmatprep.subr.bf16.mxu0 %v1623
      %1772 = vmatpush1.bf16.msra.mxu0 %v1622
      %1773 = vmatprep.subr.bf16.mxu0 %v1625
      %1774 = vmatpush1.bf16.msra.mxu0 %v1624
      %1775 = vmatprep.subr.bf16.mxu0 %v1627
      %1776 = vmatpush1.bf16.msra.mxu0 %v1626
      %1777 = vmatprep.subr.bf16.mxu0 %v1629
      %1778 = vmatpush1.bf16.msra.mxu0 %v1628
      %1779 = vmatprep.mubr.bf16.mxu0 %v1305
      %1780 = vmatmul.mubr.bf16.gmra.mrb[0].mxu0 %v1304
      %v1781 = vpop.f32.mrb[0].mxu0
      %v1782 = vadd.f32 %v1729, %v1781
      %v1783 = vpop.f32.mrb[0].mxu0
      %v1784 = vadd.f32 %v1731, %v1783
      %v1785 = vpop.f32.mrb[0].mxu0
      %v1786 = vadd.f32 %v1733, %v1785
      %v1787 = vpop.f32.mrb[0].mxu0
      %v1788 = vadd.f32 %v1735, %v1787
      %1789 = vmatprep.mubr.bf16.mxu0 %v1309
      %1790 = vmatmul.mubr.bf16.gmra.mrb[0].mxu0 %v1308
      %v1791 = vpop.f32.mrb[0].mxu0
      %v1792 = vadd.f32 %v1739, %v1791
      %v1793 = vpop.f32.mrb[0].mxu0
      %v1794 = vadd.f32 %v1741, %v1793
      %v1795 = vpop.f32.mrb[0].mxu0
      %v1796 = vadd.f32 %v1743, %v1795
      %v1797 = vpop.f32.mrb[0].mxu0
      %v1798 = vadd.f32 %v1745, %v1797
      %1799 = vdwg.mxu0
      %v1800 = vadd.f32 %v609, %v1782
      %v1801 = vadd.f32 %v611, %v1784
      %v1802 = vadd.f32 %v613, %v1786
      %v1803 = vadd.f32 %v615, %v1788
      %v1804 = vadd.f32 %v619, %v1792
      %v1805 = vadd.f32 %v621, %v1794
      %v1806 = vadd.f32 %v623, %v1796
      %v1807 = vadd.f32 %v625, %v1798
      %v1808 = vadd.f32 %v1800, %v1802
      %v1809 = vadd.f32 %v1808, %v1804
      %v1810 = vadd.f32 %v1809, %v1806
      %v1811 = vrot.slane %v1810, 4
      %v1812 = vadd.f32 %v1810, %v1811
      %v1813 = vrot.slane %v1812, 2
      %v1814 = vadd.f32 %v1812, %v1813
      %v1815 = vrot.slane %v1814, 1
      %v1816 = vadd.f32 %v1814, %v1815
      %v1817 = vadd.f32 %v1801, %v1803
      %v1818 = vadd.f32 %v1817, %v1805
      %v1819 = vadd.f32 %v1818, %v1807
      %v1820 = vrot.slane %v1819, 4
      %v1821 = vadd.f32 %v1819, %v1820
      %v1822 = vrot.slane %v1821, 2
      %v1823 = vadd.f32 %v1821, %v1822
      %v1824 = vrot.slane %v1823, 1
      %v1825 = vadd.f32 %v1823, %v1824
      %v1826 = vmul.f32 %v1816, %v645
      %v1827 = vmul.f32 %v1825, %v645
      %v1828 = vsub.f32 %v1800, %v1826
      %v1829 = vsub.f32 %v1801, %v1827
      %v1830 = vsub.f32 %v1802, %v1826
      %v1831 = vsub.f32 %v1803, %v1827
      %v1832 = vsub.f32 %v1804, %v1826
      %v1833 = vsub.f32 %v1805, %v1827
      %v1834 = vsub.f32 %v1806, %v1826
      %v1835 = vsub.f32 %v1807, %v1827
      %v1836 = vmul.f32 %v1828, %v1828
      %v1837 = vmul.f32 %v1829, %v1829
      %v1838 = vmul.f32 %v1830, %v1830
      %v1839 = vmul.f32 %v1831, %v1831
      %v1840 = vmul.f32 %v1832, %v1832
      %v1841 = vmul.f32 %v1833, %v1833
      %v1842 = vmul.f32 %v1834, %v1834
      %v1843 = vmul.f32 %v1835, %v1835
      %v1844 = vadd.f32 %v1836, %v1838
      %v1845 = vadd.f32 %v1844, %v1840
      %v1846 = vadd.f32 %v1845, %v1842
      %v1847 = vrot.slane %v1846, 4
      %v1848 = vadd.f32 %v1846, %v1847
      %v1849 = vrot.slane %v1848, 2
      %v1850 = vadd.f32 %v1848, %v1849
      %v1851 = vrot.slane %v1850, 1
      %v1852 = vadd.f32 %v1850, %v1851
      %v1853 = vadd.f32 %v1837, %v1839
      %v1854 = vadd.f32 %v1853, %v1841
      %v1855 = vadd.f32 %v1854, %v1843
      %v1856 = vrot.slane %v1855, 4
      %v1857 = vadd.f32 %v1855, %v1856
      %v1858 = vrot.slane %v1857, 2
      %v1859 = vadd.f32 %v1857, %v1858
      %v1860 = vrot.slane %v1859, 1
      %v1861 = vadd.f32 %v1859, %v1860
      %v1862 = vmul.f32 %v1852, %v645
      %v1863 = vmul.f32 %v1861, %v645
      %v1864 = vadd.f32 %v1862, 1e-05
      %v1865 = vadd.f32 %v1863, 1e-05
      %v1866 = vrsqrt.pop %v1864
      %v1867 = vrsqrt.pop %v1865
      %v1868 = vmul.f32 %v1828, %v1866
      %v1869 = vmul.f32 %v1829, %v1867
      %v1870 = vmul.f32 %v1830, %v1866
      %v1871 = vmul.f32 %v1831, %v1867
      %v1872 = vmul.f32 %v1832, %v1866
      %v1873 = vmul.f32 %v1833, %v1867
      %v1874 = vmul.f32 %v1834, %v1866
      %v1875 = vmul.f32 %v1835, %v1867
      %1876 = vset.pattern.permute.xlu0 3
      %1877 = vperm.xlu0 %1876, %v533
      %v1878 = vpop.permute.xlu0 %1877
      %1880 = vset.pattern.permute.xlu0 3
      %1881 = vperm.xlu0 %1880, %v534
      %v1882 = vpop.permute.xlu0 %1881
      %1884 = vset.pattern.permute.xlu0 3
      %1885 = vperm.xlu0 %1884, %v535
      %v1886 = vpop.permute.xlu0 %1885
      %1888 = vset.pattern.permute.xlu0 3
      %1889 = vperm.xlu0 %1888, %v536
      %v1890 = vpop.permute.xlu0 %1889
      %v1892 = vmul.f32 %v1868, %v1878
      %v1893 = vmul.f32 %v1869, %v1878
      %v1894 = vmul.f32 %v1870, %v1882
      %v1895 = vmul.f32 %v1871, %v1882
      %v1896 = vmul.f32 %v1872, %v1886
      %v1897 = vmul.f32 %v1873, %v1886
      %v1898 = vmul.f32 %v1874, %v1890
      %v1899 = vmul.f32 %v1875, %v1890
      %1900 = vset.pattern.permute.xlu0 4
      %1901 = vperm.xlu0 %1900, %v533
      %v1902 = vpop.permute.xlu0 %1901
      %1904 = vset.pattern.permute.xlu0 4
      %1905 = vperm.xlu0 %1904, %v534
      %v1906 = vpop.permute.xlu0 %1905
      %1908 = vset.pattern.permute.xlu0 4
      %1909 = vperm.xlu0 %1908, %v535
      %v1910 = vpop.permute.xlu0 %1909
      %1912 = vset.pattern.permute.xlu0 4
      %1913 = vperm.xlu0 %1912, %v536
      %v1914 = vpop.permute.xlu0 %1913
      %v1916 = vadd.f32 %v1892, %v1902
      %v1917 = vadd.f32 %v1893, %v1902
      %v1918 = vadd.f32 %v1894, %v1906
      %v1919 = vadd.f32 %v1895, %v1906
      %v1920 = vadd.f32 %v1896, %v1910
      %v1921 = vadd.f32 %v1897, %v1910
      %v1922 = vadd.f32 %v1898, %v1914
      %v1923 = vadd.f32 %v1899, %v1914
      %v1924 = vld [vmem:[%s11] sm:$0xf]
      %v1925 = vld [vmem:[%s11 + $0x4] sm:$0xf]
      %v1926 = vld [vmem:[%s11 + $0x8] sm:$0xf]
      %v1927 = vld [vmem:[%s11 + $0xc] sm:$0xf]
      %v1928 = vld [vmem:[%s11 + $0x10] sm:$0xf]
      %v1929 = vld [vmem:[%s11 + $0x14] sm:$0xf]
      %v1930 = vld [vmem:[%s11 + $0x18] sm:$0xf]
      %v1931 = vld [vmem:[%s11 + $0x1c] sm:$0xf]
      %v1932 = vld [vmem:[%s11 + $0x20] sm:$0xf]
      %v1933 = vld [vmem:[%s11 + $0x24] sm:$0xf]
      %v1934 = vld [vmem:[%s11 + $0x28] sm:$0xf]
      %v1935 = vld [vmem:[%s11 + $0x2c] sm:$0xf]
      %v1936 = vld [vmem:[%s11 + $0x30] sm:$0xf]
      %v1937 = vld [vmem:[%s11 + $0x34] sm:$0xf]
      %v1938 = vld [vmem:[%s11 + $0x38] sm:$0xf]
      %v1939 = vld [vmem:[%s11 + $0x3c] sm:$0xf]
      %v1940 = vpack.c.bf16 %v1918, %v1916
      %v1941 = vpack.c.bf16 %v1919, %v1917
      %v1942 = vpack.c.bf16 %v1922, %v1920
      %v1943 = vpack.c.bf16 %v1923, %v1921
      %v1944 = vld [vmem:[%s12] sm:$0xff]
      %v1945 = vld [vmem:[%s12 + $0x8] sm:$0xff]
      %v1946 = vld [vmem:[%s12 + $0x10] sm:$0xff]
      %v1947 = vld [vmem:[%s12 + $0x18] sm:$0xff]
      %v1948 = vld [vmem:[%s12 + $0x20] sm:$0xff]
      %v1949 = vld [vmem:[%s12 + $0x28] sm:$0xff]
      %v1950 = vld [vmem:[%s12 + $0x30] sm:$0xff]
      %v1951 = vld [vmem:[%s12 + $0x38] sm:$0xff]
      %v1952 = vld [vmem:[%s12 + $0x40] sm:$0xff]
      %v1953 = vld [vmem:[%s12 + $0x48] sm:$0xff]
      %v1954 = vld [vmem:[%s12 + $0x50] sm:$0xff]
      %v1955 = vld [vmem:[%s12 + $0x58] sm:$0xff]
      %v1956 = vld [vmem:[%s12 + $0x60] sm:$0xff]
      %v1957 = vld [vmem:[%s12 + $0x68] sm:$0xff]
      %v1958 = vld [vmem:[%s12 + $0x70] sm:$0xff]
      %v1959 = vld [vmem:[%s12 + $0x78] sm:$0xff]
      %1961 = vset.pattern.permute.xlu0 0
      %1962 = vperm.xlu0 %1961, %v1944
      %v1963 = vpop.permute.xlu0 %1962
      %1966 = vset.pattern.permute.xlu0 0
      %1967 = vperm.xlu0 %1966, %v1945
      %v1968 = vpop.permute.xlu0 %1967
      %1971 = vset.pattern.permute.xlu0 0
      %1972 = vperm.xlu0 %1971, %v1946
      %v1973 = vpop.permute.xlu0 %1972
      %1976 = vset.pattern.permute.xlu0 0
      %1977 = vperm.xlu0 %1976, %v1947
      %v1978 = vpop.permute.xlu0 %1977
      %1981 = vset.pattern.permute.xlu0 0
      %1982 = vperm.xlu0 %1981, %v1948
      %v1983 = vpop.permute.xlu0 %1982
      %1986 = vset.pattern.permute.xlu0 0
      %1987 = vperm.xlu0 %1986, %v1949
      %v1988 = vpop.permute.xlu0 %1987
      %1991 = vset.pattern.permute.xlu0 0
      %1992 = vperm.xlu0 %1991, %v1950
      %v1993 = vpop.permute.xlu0 %1992
      %1996 = vset.pattern.permute.xlu0 0
      %1997 = vperm.xlu0 %1996, %v1951
      %v1998 = vpop.permute.xlu0 %1997
      %2001 = vset.pattern.permute.xlu0 0
      %2002 = vperm.xlu0 %2001, %v1952
      %v2003 = vpop.permute.xlu0 %2002
      %2006 = vset.pattern.permute.xlu0 0
      %2007 = vperm.xlu0 %2006, %v1953
      %v2008 = vpop.permute.xlu0 %2007
      %2011 = vset.pattern.permute.xlu0 0
      %2012 = vperm.xlu0 %2011, %v1954
      %v2013 = vpop.permute.xlu0 %2012
      %2016 = vset.pattern.permute.xlu0 0
      %2017 = vperm.xlu0 %2016, %v1955
      %v2018 = vpop.permute.xlu0 %2017
      %2021 = vset.pattern.permute.xlu0 0
      %2022 = vperm.xlu0 %2021, %v1956
      %v2023 = vpop.permute.xlu0 %2022
      %2026 = vset.pattern.permute.xlu0 0
      %2027 = vperm.xlu0 %2026, %v1957
      %v2028 = vpop.permute.xlu0 %2027
      %2031 = vset.pattern.permute.xlu0 0
      %2032 = vperm.xlu0 %2031, %v1958
      %v2033 = vpop.permute.xlu0 %2032
      %2036 = vset.pattern.permute.xlu0 0
      %2037 = vperm.xlu0 %2036, %v1959
      %v2038 = vpop.permute.xlu0 %2037
      %v2056 = vunpack.c.l.b16 %v1924
      %v2057 = vunpack.c.l.b16 %v1925
      %v2058 = vunpack.c.l.b16 %v1926
      %v2059 = vunpack.c.l.b16 %v1927
      %v2060 = vunpack.c.l.b16 %v1928
      %v2061 = vunpack.c.l.b16 %v1929
      %v2062 = vunpack.c.l.b16 %v1930
      %v2063 = vunpack.c.l.b16 %v1931
      %v2064 = vunpack.c.l.b16 %v1932
      %v2065 = vunpack.c.l.b16 %v1933
      %v2066 = vunpack.c.l.b16 %v1934
      %v2067 = vunpack.c.l.b16 %v1935
      %v2068 = vunpack.c.l.b16 %v1936
      %v2069 = vunpack.c.l.b16 %v1937
      %v2070 = vunpack.c.l.b16 %v1938
      %v2071 = vunpack.c.l.b16 %v1939
      %v2072 = vpack.c.b16 %v2057, %v2056
      %v2073 = vpack.c.b16 %v2059, %v2058
      %v2074 = vpack.c.b16 %v2061, %v2060
      %v2075 = vpack.c.b16 %v2063, %v2062
      %v2076 = vpack.c.b16 %v2065, %v2064
      %v2077 = vpack.c.b16 %v2067, %v2066
      %v2078 = vpack.c.b16 %v2069, %v2068
      %v2079 = vpack.c.b16 %v2071, %v2070
      %vm2080 = vcmask 261120
      %v2082 = vsel %vm2080, %v2072, 0
      %v2085 = vsel %vm2080, %v2073, 0
      %v2088 = vsel %vm2080, %v2074, 0
      %v2091 = vsel %vm2080, %v2075, 0
      %v2094 = vsel %vm2080, %v2076, 0
      %v2097 = vsel %vm2080, %v2077, 0
      %v2100 = vsel %vm2080, %v2078, 0
      %v2103 = vsel %vm2080, %v2079, 0
      %2105 = vmatprep.subr.bf16.mxu0 %v1941
      %2106 = vmatpush1.bf16.msra.mxu0 %v1940
      %2107 = vmatprep.subr.bf16.mxu0 %v1943
      %2108 = vmatpush1.bf16.msra.mxu0 %v1942
      %2109 = vmatprep.subr.bf16.mxu0 0
      %2110 = vmatpush1.bf16.msra.mxu0 0
      %2111 = vmatprep.subr.bf16.mxu0 0
      %2112 = vmatpush1.bf16.msra.mxu0 0
      %2113 = vmatprep.subr.bf16.mxu0 0
      %2114 = vmatpush1.bf16.msra.mxu0 0
      %2115 = vmatprep.subr.bf16.mxu0 0
      %2116 = vmatpush1.bf16.msra.mxu0 0
      %2117 = vmatprep.subr.bf16.mxu0 0
      %2118 = vmatpush1.bf16.msra.mxu0 0
      %2119 = vmatprep.subr.bf16.mxu0 0
      %2120 = vmatpush1.bf16.msra.mxu0 0
      %2121 = vmatprep.subr.bf16.mxu0 0
      %2122 = vmatpush1.bf16.msra.mxu0 0
      %2123 = vmatprep.subr.bf16.mxu0 0
      %2124 = vmatpush1.bf16.msra.mxu0 0
      %2125 = vmatprep.subr.bf16.mxu0 0
      %2126 = vmatpush1.bf16.msra.mxu0 0
      %2127 = vmatprep.subr.bf16.mxu0 0
      %2128 = vmatpush1.bf16.msra.mxu0 0
      %2129 = vmatprep.subr.bf16.mxu0 0
      %2130 = vmatpush1.bf16.msra.mxu0 0
      %2131 = vmatprep.subr.bf16.mxu0 0
      %2132 = vmatpush1.bf16.msra.mxu0 0
      %2133 = vmatprep.subr.bf16.mxu0 0
      %2134 = vmatpush1.bf16.msra.mxu0 0
      %2135 = vmatprep.subr.bf16.mxu0 0
      %2136 = vmatpush1.bf16.msra.mxu0 0
      %2137 = vmatprep.mubr.bf16.mxu0 0
      %2138 = vmatmul.mubr.bf16.gmra.mrb[0].mxu0 %v2082
      %v2139 = vpop.f32.mrb[0].mxu0
      %v2140 = vadd.f32 %v1963, %v2139
      %v2141 = vpop.f32.mrb[0].mxu0
      %v2142 = vadd.f32 %v1963, %v2141
      %v2143 = vpop.f32.mrb[0].mxu0
      %v2144 = vadd.f32 %v1968, %v2143
      %v2145 = vpop.f32.mrb[0].mxu0
      %v2146 = vadd.f32 %v1968, %v2145
      %2147 = vmatprep.mubr.bf16.mxu0 0
      %2148 = vmatmul.mubr.bf16.gmra.mrb[0].mxu0 %v2085
      %v2149 = vpop.f32.mrb[0].mxu0
      %v2150 = vadd.f32 %v1973, %v2149
      %v2151 = vpop.f32.mrb[0].mxu0
      %v2152 = vadd.f32 %v1973, %v2151
      %v2153 = vpop.f32.mrb[0].mxu0
      %v2154 = vadd.f32 %v1978, %v2153
      %v2155 = vpop.f32.mrb[0].mxu0
      %v2156 = vadd.f32 %v1978, %v2155
      %2157 = vmatprep.mubr.bf16.mxu0 0
      %2158 = vmatmul.mubr.bf16.gmra.mrb[0].mxu0 %v2088
      %v2159 = vpop.f32.mrb[0].mxu0
      %v2160 = vadd.f32 %v1983, %v2159
      %v2161 = vpop.f32.mrb[0].mxu0
      %v2162 = vadd.f32 %v1983, %v2161
      %v2163 = vpop.f32.mrb[0].mxu0
      %v2164 = vadd.f32 %v1988, %v2163
      %v2165 = vpop.f32.mrb[0].mxu0
      %v2166 = vadd.f32 %v1988, %v2165
      %2167 = vmatprep.mubr.bf16.mxu0 0
      %2168 = vmatmul.mubr.bf16.gmra.mrb[0].mxu0 %v2091
      %v2169 = vpop.f32.mrb[0].mxu0
      %v2170 = vadd.f32 %v1993, %v2169
      %v2171 = vpop.f32.mrb[0].mxu0
      %v2172 = vadd.f32 %v1993, %v2171
      %v2173 = vpop.f32.mrb[0].mxu0
      %v2174 = vadd.f32 %v1998, %v2173
      %v2175 = vpop.f32.mrb[0].mxu0
      %v2176 = vadd.f32 %v1998, %v2175
      %2177 = vmatprep.mubr.bf16.mxu0 0
      %2178 = vmatmul.mubr.bf16.gmra.mrb[0].mxu0 %v2094
      %v2179 = vpop.f32.mrb[0].mxu0
      %v2180 = vadd.f32 %v2003, %v2179
      %v2181 = vpop.f32.mrb[0].mxu0
      %v2182 = vadd.f32 %v2003, %v2181
      %v2183 = vpop.f32.mrb[0].mxu0
      %v2184 = vadd.f32 %v2008, %v2183
      %v2185 = vpop.f32.mrb[0].mxu0
      %v2186 = vadd.f32 %v2008, %v2185
      %2187 = vmatprep.mubr.bf16.mxu0 0
      %2188 = vmatmul.mubr.bf16.gmra.mrb[0].mxu0 %v2097
      %v2189 = vpop.f32.mrb[0].mxu0
      %v2190 = vadd.f32 %v2013, %v2189
      %v2191 = vpop.f32.mrb[0].mxu0
      %v2192 = vadd.f32 %v2013, %v2191
      %v2193 = vpop.f32.mrb[0].mxu0
      %v2194 = vadd.f32 %v2018, %v2193
      %v2195 = vpop.f32.mrb[0].mxu0
      %v2196 = vadd.f32 %v2018, %v2195
      %2197 = vmatprep.mubr.bf16.mxu0 0
      %2198 = vmatmul.mubr.bf16.gmra.mrb[0].mxu0 %v2100
      %v2199 = vpop.f32.mrb[0].mxu0
      %v2200 = vadd.f32 %v2023, %v2199
      %v2201 = vpop.f32.mrb[0].mxu0
      %v2202 = vadd.f32 %v2023, %v2201
      %v2203 = vpop.f32.mrb[0].mxu0
      %v2204 = vadd.f32 %v2028, %v2203
      %v2205 = vpop.f32.mrb[0].mxu0
      %v2206 = vadd.f32 %v2028, %v2205
      %2207 = vmatprep.mubr.bf16.mxu0 0
      %2208 = vmatmul.mubr.bf16.gmra.mrb[0].mxu0 %v2103
      %v2209 = vpop.f32.mrb[0].mxu0
      %v2210 = vadd.f32 %v2033, %v2209
      %v2211 = vpop.f32.mrb[0].mxu0
      %v2212 = vadd.f32 %v2033, %v2211
      %v2213 = vpop.f32.mrb[0].mxu0
      %v2214 = vadd.f32 %v2038, %v2213
      %v2215 = vpop.f32.mrb[0].mxu0
      %v2216 = vadd.f32 %v2038, %v2215
      %2217 = vdwg.mxu0
      %v2218 = vmul.f32 %v2140, %v2140
      %v2219 = vmul.f32 %v2142, %v2142
      %v2220 = vmul.f32 %v2144, %v2144
      %v2221 = vmul.f32 %v2146, %v2146
      %v2222 = vmul.f32 %v2150, %v2150
      %v2223 = vmul.f32 %v2152, %v2152
      %v2224 = vmul.f32 %v2154, %v2154
      %v2225 = vmul.f32 %v2156, %v2156
      %v2226 = vmul.f32 %v2160, %v2160
      %v2227 = vmul.f32 %v2162, %v2162
      %v2228 = vmul.f32 %v2164, %v2164
      %v2229 = vmul.f32 %v2166, %v2166
      %v2230 = vmul.f32 %v2170, %v2170
      %v2231 = vmul.f32 %v2172, %v2172
      %v2232 = vmul.f32 %v2174, %v2174
      %v2233 = vmul.f32 %v2176, %v2176
      %v2234 = vmul.f32 %v2180, %v2180
      %v2235 = vmul.f32 %v2182, %v2182
      %v2236 = vmul.f32 %v2184, %v2184
      %v2237 = vmul.f32 %v2186, %v2186
      %v2238 = vmul.f32 %v2190, %v2190
      %v2239 = vmul.f32 %v2192, %v2192
      %v2240 = vmul.f32 %v2194, %v2194
      %v2241 = vmul.f32 %v2196, %v2196
      %v2242 = vmul.f32 %v2200, %v2200
      %v2243 = vmul.f32 %v2202, %v2202
      %v2244 = vmul.f32 %v2204, %v2204
      %v2245 = vmul.f32 %v2206, %v2206
      %v2246 = vmul.f32 %v2210, %v2210
      %v2247 = vmul.f32 %v2212, %v2212
      %v2248 = vmul.f32 %v2214, %v2214
      %v2249 = vmul.f32 %v2216, %v2216
      %v2250 = vmul.f32 %v2140, %v2218
      %v2251 = vmul.f32 %v2142, %v2219
      %v2252 = vmul.f32 %v2144, %v2220
      %v2253 = vmul.f32 %v2146, %v2221
      %v2254 = vmul.f32 %v2150, %v2222
      %v2255 = vmul.f32 %v2152, %v2223
      %v2256 = vmul.f32 %v2154, %v2224
      %v2257 = vmul.f32 %v2156, %v2225
      %v2258 = vmul.f32 %v2160, %v2226
      %v2259 = vmul.f32 %v2162, %v2227
      %v2260 = vmul.f32 %v2164, %v2228
      %v2261 = vmul.f32 %v2166, %v2229
      %v2262 = vmul.f32 %v2170, %v2230
      %v2263 = vmul.f32 %v2172, %v2231
      %v2264 = vmul.f32 %v2174, %v2232
      %v2265 = vmul.f32 %v2176, %v2233
      %v2266 = vmul.f32 %v2180, %v2234
      %v2267 = vmul.f32 %v2182, %v2235
      %v2268 = vmul.f32 %v2184, %v2236
      %v2269 = vmul.f32 %v2186, %v2237
      %v2270 = vmul.f32 %v2190, %v2238
      %v2271 = vmul.f32 %v2192, %v2239
      %v2272 = vmul.f32 %v2194, %v2240
      %v2273 = vmul.f32 %v2196, %v2241
      %v2274 = vmul.f32 %v2200, %v2242
      %v2275 = vmul.f32 %v2202, %v2243
      %v2276 = vmul.f32 %v2204, %v2244
      %v2277 = vmul.f32 %v2206, %v2245
      %v2278 = vmul.f32 %v2210, %v2246
      %v2279 = vmul.f32 %v2212, %v2247
      %v2280 = vmul.f32 %v2214, %v2248
      %v2281 = vmul.f32 %v2216, %v2249
      %v2282 = vmul.f32 %v2250, 0.044715
      %v2283 = vmul.f32 %v2251, 0.044715
      %v2284 = vmul.f32 %v2252, 0.044715
      %v2285 = vmul.f32 %v2253, 0.044715
      %v2286 = vmul.f32 %v2254, 0.044715
      %v2287 = vmul.f32 %v2255, 0.044715
      %v2288 = vmul.f32 %v2256, 0.044715
      %v2289 = vmul.f32 %v2257, 0.044715
      %v2290 = vmul.f32 %v2258, 0.044715
      %v2291 = vmul.f32 %v2259, 0.044715
      %v2292 = vmul.f32 %v2260, 0.044715
      %v2293 = vmul.f32 %v2261, 0.044715
      %v2294 = vmul.f32 %v2262, 0.044715
      %v2295 = vmul.f32 %v2263, 0.044715
      %v2296 = vmul.f32 %v2264, 0.044715
      %v2297 = vmul.f32 %v2265, 0.044715
      %v2298 = vmul.f32 %v2266, 0.044715
      %v2299 = vmul.f32 %v2267, 0.044715
      %v2300 = vmul.f32 %v2268, 0.044715
      %v2301 = vmul.f32 %v2269, 0.044715
      %v2302 = vmul.f32 %v2270, 0.044715
      %v2303 = vmul.f32 %v2271, 0.044715
      %v2304 = vmul.f32 %v2272, 0.044715
      %v2305 = vmul.f32 %v2273, 0.044715
      %v2306 = vmul.f32 %v2274, 0.044715
      %v2307 = vmul.f32 %v2275, 0.044715
      %v2308 = vmul.f32 %v2276, 0.044715
      %v2309 = vmul.f32 %v2277, 0.044715
      %v2310 = vmul.f32 %v2278, 0.044715
      %v2311 = vmul.f32 %v2279, 0.044715
      %v2312 = vmul.f32 %v2280, 0.044715
      %v2313 = vmul.f32 %v2281, 0.044715
      %v2314 = vadd.f32 %v2140, %v2282
      %v2315 = vadd.f32 %v2142, %v2283
      %v2316 = vadd.f32 %v2144, %v2284
      %v2317 = vadd.f32 %v2146, %v2285
      %v2318 = vadd.f32 %v2150, %v2286
      %v2319 = vadd.f32 %v2152, %v2287
      %v2320 = vadd.f32 %v2154, %v2288
      %v2321 = vadd.f32 %v2156, %v2289
      %v2322 = vadd.f32 %v2160, %v2290
      %v2323 = vadd.f32 %v2162, %v2291
      %v2324 = vadd.f32 %v2164, %v2292
      %v2325 = vadd.f32 %v2166, %v2293
      %v2326 = vadd.f32 %v2170, %v2294
      %v2327 = vadd.f32 %v2172, %v2295
      %v2328 = vadd.f32 %v2174, %v2296
      %v2329 = vadd.f32 %v2176, %v2297
      %v2330 = vadd.f32 %v2180, %v2298
      %v2331 = vadd.f32 %v2182, %v2299
      %v2332 = vadd.f32 %v2184, %v2300
      %v2333 = vadd.f32 %v2186, %v2301
      %v2334 = vadd.f32 %v2190, %v2302
      %v2335 = vadd.f32 %v2192, %v2303
      %v2336 = vadd.f32 %v2194, %v2304
      %v2337 = vadd.f32 %v2196, %v2305
      %v2338 = vadd.f32 %v2200, %v2306
      %v2339 = vadd.f32 %v2202, %v2307
      %v2340 = vadd.f32 %v2204, %v2308
      %v2341 = vadd.f32 %v2206, %v2309
      %v2342 = vadd.f32 %v2210, %v2310
      %v2343 = vadd.f32 %v2212, %v2311
      %v2344 = vadd.f32 %v2214, %v2312
      %v2345 = vadd.f32 %v2216, %v2313
      %v2346 = vmul.f32 %v2314, 0.7978846
      %v2347 = vmul.f32 %v2315, 0.7978846
      %v2348 = vmul.f32 %v2316, 0.7978846
      %v2349 = vmul.f32 %v2317, 0.7978846
      %v2350 = vmul.f32 %v2318, 0.7978846
      %v2351 = vmul.f32 %v2319, 0.7978846
      %v2352 = vmul.f32 %v2320, 0.7978846
      %v2353 = vmul.f32 %v2321, 0.7978846
      %v2354 = vmul.f32 %v2322, 0.7978846
      %v2355 = vmul.f32 %v2323, 0.7978846
      %v2356 = vmul.f32 %v2324, 0.7978846
      %v2357 = vmul.f32 %v2325, 0.7978846
      %v2358 = vmul.f32 %v2326, 0.7978846
      %v2359 = vmul.f32 %v2327, 0.7978846
      %v2360 = vmul.f32 %v2328, 0.7978846
      %v2361 = vmul.f32 %v2329, 0.7978846
      %v2362 = vmul.f32 %v2330, 0.7978846
      %v2363 = vmul.f32 %v2331, 0.7978846
      %v2364 = vmul.f32 %v2332, 0.7978846
      %v2365 = vmul.f32 %v2333, 0.7978846
      %v2366 = vmul.f32 %v2334, 0.7978846
      %v2367 = vmul.f32 %v2335, 0.7978846
      %v2368 = vmul.f32 %v2336, 0.7978846
      %v2369 = vmul.f32 %v2337, 0.7978846
      %v2370 = vmul.f32 %v2338, 0.7978846
      %v2371 = vmul.f32 %v2339, 0.7978846
      %v2372 = vmul.f32 %v2340, 0.7978846
      %v2373 = vmul.f32 %v2341, 0.7978846
      %v2374 = vmul.f32 %v2342, 0.7978846
      %v2375 = vmul.f32 %v2343, 0.7978846
      %v2376 = vmul.f32 %v2344, 0.7978846
      %v2377 = vmul.f32 %v2345, 0.7978846
      %v2378 = vtanh.pop %v2346
      %v2379 = vtanh.pop %v2347
      %v2380 = vtanh.pop %v2348
      %v2381 = vtanh.pop %v2349
      %v2382 = vtanh.pop %v2350
      %v2383 = vtanh.pop %v2351
      %v2384 = vtanh.pop %v2352
      %v2385 = vtanh.pop %v2353
      %v2386 = vtanh.pop %v2354
      %v2387 = vtanh.pop %v2355
      %v2388 = vtanh.pop %v2356
      %v2389 = vtanh.pop %v2357
      %v2390 = vtanh.pop %v2358
      %v2391 = vtanh.pop %v2359
      %v2392 = vtanh.pop %v2360
      %v2393 = vtanh.pop %v2361
      %v2394 = vtanh.pop %v2362
      %v2395 = vtanh.pop %v2363
      %v2396 = vtanh.pop %v2364
      %v2397 = vtanh.pop %v2365
      %v2398 = vtanh.pop %v2366
      %v2399 = vtanh.pop %v2367
      %v2400 = vtanh.pop %v2368
      %v2401 = vtanh.pop %v2369
      %v2402 = vtanh.pop %v2370
      %v2403 = vtanh.pop %v2371
      %v2404 = vtanh.pop %v2372
      %v2405 = vtanh.pop %v2373
      %v2406 = vtanh.pop %v2374
      %v2407 = vtanh.pop %v2375
      %v2408 = vtanh.pop %v2376
      %v2409 = vtanh.pop %v2377
      %v2410 = vadd.f32 %v2378, 1.0
      %v2411 = vadd.f32 %v2379, 1.0
      %v2412 = vadd.f32 %v2380, 1.0
      %v2413 = vadd.f32 %v2381, 1.0
      %v2414 = vadd.f32 %v2382, 1.0
      %v2415 = vadd.f32 %v2383, 1.0
      %v2416 = vadd.f32 %v2384, 1.0
      %v2417 = vadd.f32 %v2385, 1.0
      %v2418 = vadd.f32 %v2386, 1.0
      %v2419 = vadd.f32 %v2387, 1.0
      %v2420 = vadd.f32 %v2388, 1.0
      %v2421 = vadd.f32 %v2389, 1.0
      %v2422 = vadd.f32 %v2390, 1.0
      %v2423 = vadd.f32 %v2391, 1.0
      %v2424 = vadd.f32 %v2392, 1.0
      %v2425 = vadd.f32 %v2393, 1.0
      %v2426 = vadd.f32 %v2394, 1.0
      %v2427 = vadd.f32 %v2395, 1.0
      %v2428 = vadd.f32 %v2396, 1.0
      %v2429 = vadd.f32 %v2397, 1.0
      %v2430 = vadd.f32 %v2398, 1.0
      %v2431 = vadd.f32 %v2399, 1.0
      %v2432 = vadd.f32 %v2400, 1.0
      %v2433 = vadd.f32 %v2401, 1.0
      %v2434 = vadd.f32 %v2402, 1.0
      %v2435 = vadd.f32 %v2403, 1.0
      %v2436 = vadd.f32 %v2404, 1.0
      %v2437 = vadd.f32 %v2405, 1.0
      %v2438 = vadd.f32 %v2406, 1.0
      %v2439 = vadd.f32 %v2407, 1.0
      %v2440 = vadd.f32 %v2408, 1.0
      %v2441 = vadd.f32 %v2409, 1.0
      %v2442 = vmul.f32 %v2410, 0.5
      %v2443 = vmul.f32 %v2411, 0.5
      %v2444 = vmul.f32 %v2412, 0.5
      %v2445 = vmul.f32 %v2413, 0.5
      %v2446 = vmul.f32 %v2414, 0.5
      %v2447 = vmul.f32 %v2415, 0.5
      %v2448 = vmul.f32 %v2416, 0.5
      %v2449 = vmul.f32 %v2417, 0.5
      %v2450 = vmul.f32 %v2418, 0.5
      %v2451 = vmul.f32 %v2419, 0.5
      %v2452 = vmul.f32 %v2420, 0.5
      %v2453 = vmul.f32 %v2421, 0.5
      %v2454 = vmul.f32 %v2422, 0.5
      %v2455 = vmul.f32 %v2423, 0.5
      %v2456 = vmul.f32 %v2424, 0.5
      %v2457 = vmul.f32 %v2425, 0.5
      %v2458 = vmul.f32 %v2426, 0.5
      %v2459 = vmul.f32 %v2427, 0.5
      %v2460 = vmul.f32 %v2428, 0.5
      %v2461 = vmul.f32 %v2429, 0.5
      %v2462 = vmul.f32 %v2430, 0.5
      %v2463 = vmul.f32 %v2431, 0.5
      %v2464 = vmul.f32 %v2432, 0.5
      %v2465 = vmul.f32 %v2433, 0.5
      %v2466 = vmul.f32 %v2434, 0.5
      %v2467 = vmul.f32 %v2435, 0.5
      %v2468 = vmul.f32 %v2436, 0.5
      %v2469 = vmul.f32 %v2437, 0.5
      %v2470 = vmul.f32 %v2438, 0.5
      %v2471 = vmul.f32 %v2439, 0.5
      %v2472 = vmul.f32 %v2440, 0.5
      %v2473 = vmul.f32 %v2441, 0.5
      %v2474 = vmul.f32 %v2140, %v2442
      %v2475 = vmul.f32 %v2142, %v2443
      %v2476 = vmul.f32 %v2144, %v2444
      %v2477 = vmul.f32 %v2146, %v2445
      %v2478 = vmul.f32 %v2150, %v2446
      %v2479 = vmul.f32 %v2152, %v2447
      %v2480 = vmul.f32 %v2154, %v2448
      %v2481 = vmul.f32 %v2156, %v2449
      %v2482 = vmul.f32 %v2160, %v2450
      %v2483 = vmul.f32 %v2162, %v2451
      %v2484 = vmul.f32 %v2164, %v2452
      %v2485 = vmul.f32 %v2166, %v2453
      %v2486 = vmul.f32 %v2170, %v2454
      %v2487 = vmul.f32 %v2172, %v2455
      %v2488 = vmul.f32 %v2174, %v2456
      %v2489 = vmul.f32 %v2176, %v2457
      %v2490 = vmul.f32 %v2180, %v2458
      %v2491 = vmul.f32 %v2182, %v2459
      %v2492 = vmul.f32 %v2184, %v2460
      %v2493 = vmul.f32 %v2186, %v2461
      %v2494 = vmul.f32 %v2190, %v2462
      %v2495 = vmul.f32 %v2192, %v2463
      %v2496 = vmul.f32 %v2194, %v2464
      %v2497 = vmul.f32 %v2196, %v2465
      %v2498 = vmul.f32 %v2200, %v2466
      %v2499 = vmul.f32 %v2202, %v2467
      %v2500 = vmul.f32 %v2204, %v2468
      %v2501 = vmul.f32 %v2206, %v2469
      %v2502 = vmul.f32 %v2210, %v2470
      %v2503 = vmul.f32 %v2212, %v2471
      %v2504 = vmul.f32 %v2214, %v2472
      %v2505 = vmul.f32 %v2216, %v2473
      %v2506 = vpack.c.bf16 %v2476, %v2474
      %v2507 = vpack.c.bf16 %v2477, %v2475
      %v2508 = vpack.c.bf16 %v2480, %v2478
      %v2509 = vpack.c.bf16 %v2481, %v2479
      %v2510 = vpack.c.bf16 %v2484, %v2482
      %v2511 = vpack.c.bf16 %v2485, %v2483
      %v2512 = vpack.c.bf16 %v2488, %v2486
      %v2513 = vpack.c.bf16 %v2489, %v2487
      %v2514 = vpack.c.bf16 %v2492, %v2490
      %v2515 = vpack.c.bf16 %v2493, %v2491
      %v2516 = vpack.c.bf16 %v2496, %v2494
      %v2517 = vpack.c.bf16 %v2497, %v2495
      %v2518 = vpack.c.bf16 %v2500, %v2498
      %v2519 = vpack.c.bf16 %v2501, %v2499
      %v2520 = vpack.c.bf16 %v2504, %v2502
      %v2521 = vpack.c.bf16 %v2505, %v2503
      %v2522 = vld [vmem:[%s13] sm:$0xf]
      %v2523 = vld [vmem:[%s13 + $0x4] sm:$0xf]
      %v2524 = vld [vmem:[%s13 + $0x8] sm:$0xf]
      %v2525 = vld [vmem:[%s13 + $0xc] sm:$0xf]
      %2526 = vset.pattern.permute.xlu0 5
      %2527 = vperm.xlu0 %2526, %v533
      %v2528 = vpop.permute.xlu0 %2527
      %2530 = vset.pattern.permute.xlu0 5
      %2531 = vperm.xlu0 %2530, %v534
      %v2532 = vpop.permute.xlu0 %2531
      %2534 = vset.pattern.permute.xlu0 5
      %2535 = vperm.xlu0 %2534, %v535
      %v2536 = vpop.permute.xlu0 %2535
      %2538 = vset.pattern.permute.xlu0 5
      %2539 = vperm.xlu0 %2538, %v536
      %v2540 = vpop.permute.xlu0 %2539
      %v2546 = vunpack.c.l.b16 %v2522
      %v2547 = vunpack.c.l.b16 %v2523
      %v2548 = vunpack.c.l.b16 %v2524
      %v2549 = vunpack.c.l.b16 %v2525
      %v2550 = vpack.c.b16 %v2547, %v2546
      %v2551 = vpack.c.b16 %v2549, %v2548
      %2554 = vmatprep.subr.bf16.mxu0 %v2507
      %2555 = vmatpush1.bf16.msra.mxu0 %v2506
      %2556 = vmatprep.subr.bf16.mxu0 %v2509
      %2557 = vmatpush1.bf16.msra.mxu0 %v2508
      %2558 = vmatprep.subr.bf16.mxu0 %v2511
      %2559 = vmatpush1.bf16.msra.mxu0 %v2510
      %2560 = vmatprep.subr.bf16.mxu0 %v2513
      %2561 = vmatpush1.bf16.msra.mxu0 %v2512
      %2562 = vmatprep.subr.bf16.mxu0 %v2515
      %2563 = vmatpush1.bf16.msra.mxu0 %v2514
      %2564 = vmatprep.subr.bf16.mxu0 %v2517
      %2565 = vmatpush1.bf16.msra.mxu0 %v2516
      %2566 = vmatprep.subr.bf16.mxu0 %v2519
      %2567 = vmatpush1.bf16.msra.mxu0 %v2518
      %2568 = vmatprep.subr.bf16.mxu0 %v2521
      %2569 = vmatpush1.bf16.msra.mxu0 %v2520
      %2570 = vmatprep.subr.bf16.mxu0 0
      %2571 = vmatpush1.bf16.msra.mxu0 0
      %2572 = vmatprep.subr.bf16.mxu0 0
      %2573 = vmatpush1.bf16.msra.mxu0 0
      %2574 = vmatprep.subr.bf16.mxu0 0
      %2575 = vmatpush1.bf16.msra.mxu0 0
      %2576 = vmatprep.subr.bf16.mxu0 0
      %2577 = vmatpush1.bf16.msra.mxu0 0
      %2578 = vmatprep.subr.bf16.mxu0 0
      %2579 = vmatpush1.bf16.msra.mxu0 0
      %2580 = vmatprep.subr.bf16.mxu0 0
      %2581 = vmatpush1.bf16.msra.mxu0 0
      %2582 = vmatprep.subr.bf16.mxu0 0
      %2583 = vmatpush1.bf16.msra.mxu0 0
      %2584 = vmatprep.subr.bf16.mxu0 0
      %2585 = vmatpush1.bf16.msra.mxu0 0
      %2586 = vmatprep.mubr.bf16.mxu0 0
      %2587 = vmatmul.mubr.bf16.gmra.mrb[0].mxu0 %v2550
      %v2588 = vpop.f32.mrb[0].mxu0
      %v2589 = vadd.f32 %v2528, %v2588
      %v2590 = vpop.f32.mrb[0].mxu0
      %v2591 = vadd.f32 %v2528, %v2590
      %v2592 = vpop.f32.mrb[0].mxu0
      %v2593 = vadd.f32 %v2532, %v2592
      %v2594 = vpop.f32.mrb[0].mxu0
      %v2595 = vadd.f32 %v2532, %v2594
      %2596 = vmatprep.mubr.bf16.mxu0 0
      %2597 = vmatmul.mubr.bf16.gmra.mrb[0].mxu0 %v2551
      %v2598 = vpop.f32.mrb[0].mxu0
      %v2599 = vadd.f32 %v2536, %v2598
      %v2600 = vpop.f32.mrb[0].mxu0
      %v2601 = vadd.f32 %v2536, %v2600
      %v2602 = vpop.f32.mrb[0].mxu0
      %v2603 = vadd.f32 %v2540, %v2602
      %v2604 = vpop.f32.mrb[0].mxu0
      %v2605 = vadd.f32 %v2540, %v2604
      %2606 = vdwg.mxu0
      %v2607 = vadd.f32 %v1800, %v2589
      %v2608 = vadd.f32 %v1801, %v2591
      %v2609 = vadd.f32 %v1802, %v2593
      %v2610 = vadd.f32 %v1803, %v2595
      %v2611 = vadd.f32 %v1804, %v2599
      %v2612 = vadd.f32 %v1805, %v2601
      %v2613 = vadd.f32 %v1806, %v2603
      %v2614 = vadd.f32 %v1807, %v2605
      %v2615 = vadd.f32 %v2607, %v2609
      %v2616 = vadd.f32 %v2615, %v2611
      %v2617 = vadd.f32 %v2616, %v2613
      %v2618 = vrot.slane %v2617, 4
      %v2619 = vadd.f32 %v2617, %v2618
      %v2620 = vrot.slane %v2619, 2
      %v2621 = vadd.f32 %v2619, %v2620
      %v2622 = vrot.slane %v2621, 1
      %v2623 = vadd.f32 %v2621, %v2622
      %v2624 = vadd.f32 %v2608, %v2610
      %v2625 = vadd.f32 %v2624, %v2612
      %v2626 = vadd.f32 %v2625, %v2614
      %v2627 = vrot.slane %v2626, 4
      %v2628 = vadd.f32 %v2626, %v2627
      %v2629 = vrot.slane %v2628, 2
      %v2630 = vadd.f32 %v2628, %v2629
      %v2631 = vrot.slane %v2630, 1
      %v2632 = vadd.f32 %v2630, %v2631
      %v2633 = vmul.f32 %v2623, %v645
      %v2634 = vmul.f32 %v2632, %v645
      %v2635 = vsub.f32 %v2607, %v2633
      %v2636 = vsub.f32 %v2608, %v2634
      %v2637 = vsub.f32 %v2609, %v2633
      %v2638 = vsub.f32 %v2610, %v2634
      %v2639 = vsub.f32 %v2611, %v2633
      %v2640 = vsub.f32 %v2612, %v2634
      %v2641 = vsub.f32 %v2613, %v2633
      %v2642 = vsub.f32 %v2614, %v2634
      %v2643 = vmul.f32 %v2635, %v2635
      %v2644 = vmul.f32 %v2636, %v2636
      %v2645 = vmul.f32 %v2637, %v2637
      %v2646 = vmul.f32 %v2638, %v2638
      %v2647 = vmul.f32 %v2639, %v2639
      %v2648 = vmul.f32 %v2640, %v2640
      %v2649 = vmul.f32 %v2641, %v2641
      %v2650 = vmul.f32 %v2642, %v2642
      %v2651 = vadd.f32 %v2643, %v2645
      %v2652 = vadd.f32 %v2651, %v2647
      %v2653 = vadd.f32 %v2652, %v2649
      %v2654 = vrot.slane %v2653, 4
      %v2655 = vadd.f32 %v2653, %v2654
      %v2656 = vrot.slane %v2655, 2
      %v2657 = vadd.f32 %v2655, %v2656
      %v2658 = vrot.slane %v2657, 1
      %v2659 = vadd.f32 %v2657, %v2658
      %v2660 = vadd.f32 %v2644, %v2646
      %v2661 = vadd.f32 %v2660, %v2648
      %v2662 = vadd.f32 %v2661, %v2650
      %v2663 = vrot.slane %v2662, 4
      %v2664 = vadd.f32 %v2662, %v2663
      %v2665 = vrot.slane %v2664, 2
      %v2666 = vadd.f32 %v2664, %v2665
      %v2667 = vrot.slane %v2666, 1
      %v2668 = vadd.f32 %v2666, %v2667
      %v2669 = vmul.f32 %v2659, %v645
      %v2670 = vmul.f32 %v2668, %v645
      %v2671 = vadd.f32 %v2669, 1e-05
      %v2672 = vadd.f32 %v2670, 1e-05
      %v2673 = vrsqrt.pop %v2671
      %v2674 = vrsqrt.pop %v2672
      %v2675 = vmul.f32 %v2635, %v2673
      %v2676 = vmul.f32 %v2636, %v2674
      %v2677 = vmul.f32 %v2637, %v2673
      %v2678 = vmul.f32 %v2638, %v2674
      %v2679 = vmul.f32 %v2639, %v2673
      %v2680 = vmul.f32 %v2640, %v2674
      %v2681 = vmul.f32 %v2641, %v2673
      %v2682 = vmul.f32 %v2642, %v2674
      %2683 = vset.pattern.permute.xlu0 6
      %2684 = vperm.xlu0 %2683, %v533
      %v2685 = vpop.permute.xlu0 %2684
      %2687 = vset.pattern.permute.xlu0 6
      %2688 = vperm.xlu0 %2687, %v534
      %v2689 = vpop.permute.xlu0 %2688
      %2691 = vset.pattern.permute.xlu0 6
      %2692 = vperm.xlu0 %2691, %v535
      %v2693 = vpop.permute.xlu0 %2692
      %2695 = vset.pattern.permute.xlu0 6
      %2696 = vperm.xlu0 %2695, %v536
      %v2697 = vpop.permute.xlu0 %2696
      %v2699 = vmul.f32 %v2675, %v2685
      %v2700 = vmul.f32 %v2676, %v2685
      %v2701 = vmul.f32 %v2677, %v2689
      %v2702 = vmul.f32 %v2678, %v2689
      %v2703 = vmul.f32 %v2679, %v2693
      %v2704 = vmul.f32 %v2680, %v2693
      %v2705 = vmul.f32 %v2681, %v2697
      %v2706 = vmul.f32 %v2682, %v2697
      %2707 = vset.pattern.permute.xlu0 7
      %2708 = vperm.xlu0 %2707, %v533
      %v2709 = vpop.permute.xlu0 %2708
      %2711 = vset.pattern.permute.xlu0 7
      %2712 = vperm.xlu0 %2711, %v534
      %v2713 = vpop.permute.xlu0 %2712
      %2715 = vset.pattern.permute.xlu0 7
      %2716 = vperm.xlu0 %2715, %v535
      %v2717 = vpop.permute.xlu0 %2716
      %2719 = vset.pattern.permute.xlu0 7
      %2720 = vperm.xlu0 %2719, %v536
      %v2721 = vpop.permute.xlu0 %2720
      %v2723 = vadd.f32 %v2699, %v2709
      %v2724 = vadd.f32 %v2700, %v2709
      %v2725 = vadd.f32 %v2701, %v2713
      %v2726 = vadd.f32 %v2702, %v2713
      %v2727 = vadd.f32 %v2703, %v2717
      %v2728 = vadd.f32 %v2704, %v2717
      %v2729 = vadd.f32 %v2705, %v2721
      %v2730 = vadd.f32 %v2706, %v2721
      %2735 = vrot.lane.b32.xlu0 %v523, 32
      %v2736 = vpop.permute.xlu0 %2735
      %2737 = vrot.lane.b32.xlu0 %v524, 32
      %v2738 = vpop.permute.xlu0 %2737
      %2739 = vrot.lane.b32.xlu0 %v525, 32
      %v2740 = vpop.permute.xlu0 %2739
      %2741 = vrot.lane.b32.xlu0 %v526, 32
      %v2742 = vpop.permute.xlu0 %2741
      %v2743 = vsel %vm2080, %v2736, %v2738
      %v2744 = vsel %vm2080, %v2740, %v2742
      %v2751 = vsel %vm2080, 0.0, %v2736
      %v2752 = vsel %vm2080, 0.0, %v2740
      %v2753 = vsel %vm2080, %v2738, 0.0
      %v2754 = vsel %vm2080, %v2742, 0.0
      %v2755 = vld [vmem:[%s3] ss:$8 sm:$0x3]
      %v2757 = vlaneseq
      %v2758 = vshrl.u32 %v2757, 7
      %v2759 = vsub.s32 0, %v2758
      %v2760 = vrot.slane %v2755, %v2759
      %v2761 = vlaneseq
      %v2762 = vshrl.u32 %v2761, 7
      %v2763 = vsub.s32 1, %v2762
      %v2764 = vrot.slane %v2755, %v2763
      %2765 = vrot.lane.b32.xlu0 %v2760, 15
      %v2766 = vpop.permute.xlu0 %2765
      %2767 = vrot.lane.b32.xlu0 %v2764, 15
      %v2768 = vpop.permute.xlu0 %2767
      %vm2769 = vcmask 121856
      %v2770 = vsel %vm2769, %v2766, %v2768
      %v2774 = vmul.f32 %v2751, %v2766
      %v2775 = vmul.f32 %v2743, %v2770
      %v2776 = vmul.f32 %v2753, %v2768
      %v2777 = vmul.f32 %v2752, %v2766
      %v2778 = vmul.f32 %v2744, %v2770
      %v2779 = vmul.f32 %v2754, %v2768
      %v2780 = vpack.c.bf16 %v2777, %v2774
      %v2781 = vpack.c.bf16 %v2778, %v2775
      %v2782 = vpack.c.bf16 %v2779, %v2776
      %2786 = vrot.lane.b32.xlu0 %v2780, 113
      %v2787 = vpop.permute.xlu0 %2786
      %2788 = vrot.lane.b32.xlu0 %v2781, 113
      %v2789 = vpop.permute.xlu0 %2788
      %2790 = vrot.lane.b32.xlu0 %v2782, 113
      %v2791 = vpop.permute.xlu0 %2790
      %vm2792 = vcmask 924672
      %v2793 = vsel %vm2792, %v2787, %v2789
      %v2794 = vsel %vm2792, %v2789, %v2791
      %2797 = vst [vmem:[#allocation2] sm:$0xff] %v2793
      %2798 = vst [vmem:[#allocation2 + $0x8] sm:$0xff] %v2794
      %s2799 = scalar_lea.vmem %s3, 1
      %v2800 = vld [vmem:[%s2799] ss:$8 sm:$0x3]
      %v2802 = vlaneseq
      %v2803 = vshrl.u32 %v2802, 7
      %v2804 = vsub.s32 0, %v2803
      %v2805 = vrot.slane %v2800, %v2804
      %v2806 = vlaneseq
      %v2807 = vshrl.u32 %v2806, 7
      %v2808 = vsub.s32 1, %v2807
      %v2809 = vrot.slane %v2800, %v2808
      %2810 = vrot.lane.b32.xlu0 %v2805, 16
      %v2811 = vpop.permute.xlu0 %2810
      %2812 = vrot.lane.b32.xlu0 %v2809, 16
      %v2813 = vpop.permute.xlu0 %2812
      %v2814 = vsel %vm567, %v2811, %v2813
      %v2818 = vmul.f32 %v2751, %v2811
      %v2819 = vmul.f32 %v2743, %v2814
      %v2820 = vmul.f32 %v2753, %v2813
      %v2821 = vmul.f32 %v2752, %v2811
      %v2822 = vmul.f32 %v2744, %v2814
      %v2823 = vmul.f32 %v2754, %v2813
      %v2824 = vpack.c.bf16 %v2821, %v2818
      %v2825 = vpack.c.bf16 %v2822, %v2819
      %v2826 = vpack.c.bf16 %v2823, %v2820
      %2830 = vrot.lane.b32.xlu0 %v2824, 112
      %v2831 = vpop.permute.xlu0 %2830
      %2832 = vrot.lane.b32.xlu0 %v2825, 112
      %v2833 = vpop.permute.xlu0 %2832
      %2834 = vrot.lane.b32.xlu0 %v2826, 112
      %v2835 = vpop.permute.xlu0 %2834
      %vm2836 = vcmask 916480
      %v2837 = vsel %vm2836, %v2831, %v2833
      %v2838 = vsel %vm2836, %v2833, %v2835
      %2841 = vst [vmem:[#allocation2 + $0x10] sm:$0xff] %v2837
      %2842 = vst [vmem:[#allocation2 + $0x18] sm:$0xff] %v2838
      %s2843 = scalar_lea.vmem %s3, 2
      %v2844 = vld [vmem:[%s2843] ss:$8 sm:$0x3]
      %v2846 = vlaneseq
      %v2847 = vshrl.u32 %v2846, 7
      %v2848 = vsub.s32 0, %v2847
      %v2849 = vrot.slane %v2844, %v2848
      %v2850 = vlaneseq
      %v2851 = vshrl.u32 %v2850, 7
      %v2852 = vsub.s32 1, %v2851
      %v2853 = vrot.slane %v2844, %v2852
      %2854 = vrot.lane.b32.xlu0 %v2849, 17
      %v2855 = vpop.permute.xlu0 %2854
      %2856 = vrot.lane.b32.xlu0 %v2853, 17
      %v2857 = vpop.permute.xlu0 %2856
      %vm2858 = vcmask 138240
      %v2859 = vsel %vm2858, %v2855, %v2857
      %v2863 = vmul.f32 %v2751, %v2855
      %v2864 = vmul.f32 %v2743, %v2859
      %v2865 = vmul.f32 %v2753, %v2857
      %v2866 = vmul.f32 %v2752, %v2855
      %v2867 = vmul.f32 %v2744, %v2859
      %v2868 = vmul.f32 %v2754, %v2857
      %v2869 = vpack.c.bf16 %v2866, %v2863
      %v2870 = vpack.c.bf16 %v2867, %v2864
      %v2871 = vpack.c.bf16 %v2868, %v2865
      %2875 = vrot.lane.b32.xlu0 %v2869, 111
      %v2876 = vpop.permute.xlu0 %2875
      %2877 = vrot.lane.b32.xlu0 %v2870, 111
      %v2878 = vpop.permute.xlu0 %2877
      %2879 = vrot.lane.b32.xlu0 %v2871, 111
      %v2880 = vpop.permute.xlu0 %2879
      %vm2881 = vcmask 908288
      %v2882 = vsel %vm2881, %v2876, %v2878
      %v2883 = vsel %vm2881, %v2878, %v2880
      %2886 = vst [vmem:[#allocation2 + $0x20] sm:$0xff] %v2882
      %2887 = vst [vmem:[#allocation2 + $0x28] sm:$0xff] %v2883
      %s2888 = scalar_lea.vmem %s3, 3
      %v2889 = vld [vmem:[%s2888] ss:$8 sm:$0x3]
      %v2891 = vlaneseq
      %v2892 = vshrl.u32 %v2891, 7
      %v2893 = vsub.s32 0, %v2892
      %v2894 = vrot.slane %v2889, %v2893
      %v2895 = vlaneseq
      %v2896 = vshrl.u32 %v2895, 7
      %v2897 = vsub.s32 1, %v2896
      %v2898 = vrot.slane %v2889, %v2897
      %2899 = vrot.lane.b32.xlu0 %v2894, 31
      %v2900 = vpop.permute.xlu0 %2899
      %2901 = vrot.lane.b32.xlu0 %v2898, 31
      %v2902 = vpop.permute.xlu0 %2901
      %vm2903 = vcmask 252928
      %v2904 = vsel %vm2903, %v2900, %v2902
      %v2908 = vmul.f32 %v2751, %v2900
      %v2909 = vmul.f32 %v2743, %v2904
      %v2910 = vmul.f32 %v2753, %v2902
      %v2911 = vmul.f32 %v2752, %v2900
      %v2912 = vmul.f32 %v2744, %v2904
      %v2913 = vmul.f32 %v2754, %v2902
      %v2914 = vpack.c.bf16 %v2911, %v2908
      %v2915 = vpack.c.bf16 %v2912, %v2909
      %v2916 = vpack.c.bf16 %v2913, %v2910
      %2920 = vrot.lane.b32.xlu0 %v2914, 97
      %v2921 = vpop.permute.xlu0 %2920
      %2922 = vrot.lane.b32.xlu0 %v2915, 97
      %v2923 = vpop.permute.xlu0 %2922
      %2924 = vrot.lane.b32.xlu0 %v2916, 97
      %v2925 = vpop.permute.xlu0 %2924
      %vm2926 = vcmask 793600
      %v2927 = vsel %vm2926, %v2921, %v2923
      %v2928 = vsel %vm2926, %v2923, %v2925
      %2931 = vst [vmem:[#allocation2 + $0x30] sm:$0xff] %v2927
      %2932 = vst [vmem:[#allocation2 + $0x38] sm:$0xff] %v2928
      %s2933 = scalar_lea.vmem %s3, 4
      %v2934 = vld [vmem:[%s2933] ss:$8 sm:$0x3]
      %v2936 = vlaneseq
      %v2937 = vshrl.u32 %v2936, 7
      %v2938 = vsub.s32 0, %v2937
      %v2939 = vrot.slane %v2934, %v2938
      %v2940 = vlaneseq
      %v2941 = vshrl.u32 %v2940, 7
      %v2942 = vsub.s32 1, %v2941
      %v2943 = vrot.slane %v2934, %v2942
      %2944 = vrot.lane.b32.xlu0 %v2939, 32
      %v2945 = vpop.permute.xlu0 %2944
      %2946 = vrot.lane.b32.xlu0 %v2943, 32
      %v2947 = vpop.permute.xlu0 %2946
      %v2948 = vsel %vm2080, %v2945, %v2947
      %v2952 = vmul.f32 %v2751, %v2945
      %v2953 = vmul.f32 %v2743, %v2948
      %v2954 = vmul.f32 %v2753, %v2947
      %v2955 = vmul.f32 %v2752, %v2945
      %v2956 = vmul.f32 %v2744, %v2948
      %v2957 = vmul.f32 %v2754, %v2947
      %v2958 = vpack.c.bf16 %v2955, %v2952
      %v2959 = vpack.c.bf16 %v2956, %v2953
      %v2960 = vpack.c.bf16 %v2957, %v2954
      %2964 = vrot.lane.b32.xlu0 %v2958, 96
      %v2965 = vpop.permute.xlu0 %2964
      %2966 = vrot.lane.b32.xlu0 %v2959, 96
      %v2967 = vpop.permute.xlu0 %2966
      %2968 = vrot.lane.b32.xlu0 %v2960, 96
      %v2969 = vpop.permute.xlu0 %2968
      %vm2970 = vcmask 785408
      %v2971 = vsel %vm2970, %v2965, %v2967
      %v2972 = vsel %vm2970, %v2967, %v2969
      %2975 = vst [vmem:[#allocation2 + $0x40] sm:$0xff] %v2971
      %2976 = vst [vmem:[#allocation2 + $0x48] sm:$0xff] %v2972
      %s2977 = scalar_lea.vmem %s3, 5
      %v2978 = vld [vmem:[%s2977] ss:$8 sm:$0x3]
      %v2980 = vlaneseq
      %v2981 = vshrl.u32 %v2980, 7
      %v2982 = vsub.s32 0, %v2981
      %v2983 = vrot.slane %v2978, %v2982
      %v2984 = vlaneseq
      %v2985 = vshrl.u32 %v2984, 7
      %v2986 = vsub.s32 1, %v2985
      %v2987 = vrot.slane %v2978, %v2986
      %2988 = vrot.lane.b32.xlu0 %v2983, 33
      %v2989 = vpop.permute.xlu0 %2988
      %2990 = vrot.lane.b32.xlu0 %v2987, 33
      %v2991 = vpop.permute.xlu0 %2990
      %vm2992 = vcmask 269312
      %v2993 = vsel %vm2992, %v2989, %v2991
      %v2997 = vmul.f32 %v2751, %v2989
      %v2998 = vmul.f32 %v2743, %v2993
      %v2999 = vmul.f32 %v2753, %v2991
      %v3000 = vmul.f32 %v2752, %v2989
      %v3001 = vmul.f32 %v2744, %v2993
      %v3002 = vmul.f32 %v2754, %v2991
      %v3003 = vpack.c.bf16 %v3000, %v2997
      %v3004 = vpack.c.bf16 %v3001, %v2998
      %v3005 = vpack.c.bf16 %v3002, %v2999
      %3009 = vrot.lane.b32.xlu0 %v3003, 95
      %v3010 = vpop.permute.xlu0 %3009
      %3011 = vrot.lane.b32.xlu0 %v3004, 95
      %v3012 = vpop.permute.xlu0 %3011
      %3013 = vrot.lane.b32.xlu0 %v3005, 95
      %v3014 = vpop.permute.xlu0 %3013
      %vm3015 = vcmask 777216
      %v3016 = vsel %vm3015, %v3010, %v3012
      %v3017 = vsel %vm3015, %v3012, %v3014
      %3020 = vst [vmem:[#allocation2 + $0x50] sm:$0xff] %v3016
      %3021 = vst [vmem:[#allocation2 + $0x58] sm:$0xff] %v3017
      %s3022 = scalar_lea.vmem %s3, 6
      %v3023 = vld [vmem:[%s3022] ss:$8 sm:$0x3]
      %v3025 = vlaneseq
      %v3026 = vshrl.u32 %v3025, 7
      %v3027 = vsub.s32 0, %v3026
      %v3028 = vrot.slane %v3023, %v3027
      %v3029 = vlaneseq
      %v3030 = vshrl.u32 %v3029, 7
      %v3031 = vsub.s32 1, %v3030
      %v3032 = vrot.slane %v3023, %v3031
      %3033 = vrot.lane.b32.xlu0 %v3028, 47
      %v3034 = vpop.permute.xlu0 %3033
      %3035 = vrot.lane.b32.xlu0 %v3032, 47
      %v3036 = vpop.permute.xlu0 %3035
      %vm3037 = vcmask 384000
      %v3038 = vsel %vm3037, %v3034, %v3036
      %v3042 = vmul.f32 %v2751, %v3034
      %v3043 = vmul.f32 %v2743, %v3038
      %v3044 = vmul.f32 %v2753, %v3036
      %v3045 = vmul.f32 %v2752, %v3034
      %v3046 = vmul.f32 %v2744, %v3038
      %v3047 = vmul.f32 %v2754, %v3036
      %v3048 = vpack.c.bf16 %v3045, %v3042
      %v3049 = vpack.c.bf16 %v3046, %v3043
      %v3050 = vpack.c.bf16 %v3047, %v3044
      %3054 = vrot.lane.b32.xlu0 %v3048, 81
      %v3055 = vpop.permute.xlu0 %3054
      %3056 = vrot.lane.b32.xlu0 %v3049, 81
      %v3057 = vpop.permute.xlu0 %3056
      %3058 = vrot.lane.b32.xlu0 %v3050, 81
      %v3059 = vpop.permute.xlu0 %3058
      %vm3060 = vcmask 662528
      %v3061 = vsel %vm3060, %v3055, %v3057
      %v3062 = vsel %vm3060, %v3057, %v3059
      %3065 = vst [vmem:[#allocation2 + $0x60] sm:$0xff] %v3061
      %3066 = vst [vmem:[#allocation2 + $0x68] sm:$0xff] %v3062
      %s3067 = scalar_lea.vmem %s3, 7
      %v3068 = vld [vmem:[%s3067] ss:$8 sm:$0x3]
      %v3070 = vlaneseq
      %v3071 = vshrl.u32 %v3070, 7
      %v3072 = vsub.s32 0, %v3071
      %v3073 = vrot.slane %v3068, %v3072
      %v3074 = vlaneseq
      %v3075 = vshrl.u32 %v3074, 7
      %v3076 = vsub.s32 1, %v3075
      %v3077 = vrot.slane %v3068, %v3076
      %3078 = vrot.lane.b32.xlu0 %v3073, 48
      %v3079 = vpop.permute.xlu0 %3078
      %3080 = vrot.lane.b32.xlu0 %v3077, 48
      %v3081 = vpop.permute.xlu0 %3080
      %vm3082 = vcmask 392192
      %v3083 = vsel %vm3082, %v3079, %v3081
      %v3087 = vmul.f32 %v2751, %v3079
      %v3088 = vmul.f32 %v2743, %v3083
      %v3089 = vmul.f32 %v2753, %v3081
      %v3090 = vmul.f32 %v2752, %v3079
      %v3091 = vmul.f32 %v2744, %v3083
      %v3092 = vmul.f32 %v2754, %v3081
      %v3093 = vpack.c.bf16 %v3090, %v3087
      %v3094 = vpack.c.bf16 %v3091, %v3088
      %v3095 = vpack.c.bf16 %v3092, %v3089
      %3099 = vrot.lane.b32.xlu0 %v3093, 80
      %v3100 = vpop.permute.xlu0 %3099
      %3101 = vrot.lane.b32.xlu0 %v3094, 80
      %v3102 = vpop.permute.xlu0 %3101
      %3103 = vrot.lane.b32.xlu0 %v3095, 80
      %v3104 = vpop.permute.xlu0 %3103
      %vm3105 = vcmask 654336
      %v3106 = vsel %vm3105, %v3100, %v3102
      %v3107 = vsel %vm3105, %v3102, %v3104
      %3110 = vst [vmem:[#allocation2 + $0x70] sm:$0xff] %v3106
      %3111 = vst [vmem:[#allocation2 + $0x78] sm:$0xff] %v3107
      %s3112 = scalar_lea.vmem %s3, 16
      %v3113 = vld [vmem:[%s3112] ss:$8 sm:$0x3]
      %v3115 = vlaneseq
      %v3116 = vshrl.u32 %v3115, 7
      %v3117 = vsub.s32 0, %v3116
      %v3118 = vrot.slane %v3113, %v3117
      %v3119 = vlaneseq
      %v3120 = vshrl.u32 %v3119, 7
      %v3121 = vsub.s32 1, %v3120
      %v3122 = vrot.slane %v3113, %v3121
      %3123 = vrot.lane.b32.xlu0 %v3118, 49
      %v3124 = vpop.permute.xlu0 %3123
      %3125 = vrot.lane.b32.xlu0 %v3122, 49
      %v3126 = vpop.permute.xlu0 %3125
      %vm3127 = vcmask 400384
      %v3128 = vsel %vm3127, %v3124, %v3126
      %v3132 = vmul.f32 %v2751, %v3124
      %v3133 = vmul.f32 %v2743, %v3128
      %v3134 = vmul.f32 %v2753, %v3126
      %v3135 = vmul.f32 %v2752, %v3124
      %v3136 = vmul.f32 %v2744, %v3128
      %v3137 = vmul.f32 %v2754, %v3126
      %v3138 = vpack.c.bf16 %v3135, %v3132
      %v3139 = vpack.c.bf16 %v3136, %v3133
      %v3140 = vpack.c.bf16 %v3137, %v3134
      %3144 = vrot.lane.b32.xlu0 %v3138, 79
      %v3145 = vpop.permute.xlu0 %3144
      %3146 = vrot.lane.b32.xlu0 %v3139, 79
      %v3147 = vpop.permute.xlu0 %3146
      %3148 = vrot.lane.b32.xlu0 %v3140, 79
      %v3149 = vpop.permute.xlu0 %3148
      %vm3150 = vcmask 646144
      %v3151 = vsel %vm3150, %v3145, %v3147
      %v3152 = vsel %vm3150, %v3147, %v3149
      %3155 = vst [vmem:[#allocation2 + $0x80] sm:$0xff] %v3151
      %3156 = vst [vmem:[#allocation2 + $0x88] sm:$0xff] %v3152
      %v3157 = vld [vmem:[%s1] sm:$0xff]
      %v3158 = vld [vmem:[%s1 + $0x8] sm:$0xff]
      %v3159 = vld [vmem:[%s1 + $0x10] sm:$0xff]
      %v3160 = vld [vmem:[%s1 + $0x18] sm:$0xff]
      %v3161 = vld [vmem:[#allocation2] sm:$0xff]
      %v3162 = vld [vmem:[#allocation2 + $0x8] sm:$0xff]
      %v3163 = vld [vmem:[#allocation2 + $0x10] sm:$0xff]
      %v3164 = vld [vmem:[#allocation2 + $0x18] sm:$0xff]
      %v3165 = vld [vmem:[#allocation2 + $0x20] sm:$0xff]
      %v3166 = vld [vmem:[#allocation2 + $0x28] sm:$0xff]
      %v3167 = vld [vmem:[#allocation2 + $0x30] sm:$0xff]
      %v3168 = vld [vmem:[#allocation2 + $0x38] sm:$0xff]
      %v3169 = vld [vmem:[#allocation2 + $0x40] sm:$0xff]
      %v3170 = vld [vmem:[#allocation2 + $0x48] sm:$0xff]
      %v3171 = vld [vmem:[#allocation2 + $0x50] sm:$0xff]
      %v3172 = vld [vmem:[#allocation2 + $0x58] sm:$0xff]
      %v3173 = vld [vmem:[#allocation2 + $0x60] sm:$0xff]
      %v3174 = vld [vmem:[#allocation2 + $0x68] sm:$0xff]
      %v3175 = vld [vmem:[#allocation2 + $0x70] sm:$0xff]
      %v3176 = vld [vmem:[#allocation2 + $0x78] sm:$0xff]
      %v3177 = vld [vmem:[#allocation2 + $0x80] sm:$0xff]
      %v3178 = vld [vmem:[#allocation2 + $0x88] sm:$0xff]
      %v3179 = vld [vmem:[%s2] sm:$0xff]
      %v3180 = vld [vmem:[%s2 + $0x8] sm:$0xff]
      %v3181 = vld [vmem:[%s2 + $0x10] sm:$0xff]
      %v3182 = vld [vmem:[%s2 + $0x18] sm:$0xff]
      %v3183 = vld [vmem:[%s2 + $0x20] sm:$0xff]
      %v3184 = vld [vmem:[%s2 + $0x28] sm:$0xff]
      %v3185 = vld [vmem:[%s2 + $0x30] sm:$0xff]
      %v3186 = vld [vmem:[%s2 + $0x38] sm:$0xff]
      %v3191 = vunpack.c.l.b16 %v3157
      %v3192 = vunpack.c.h.b16 %v3157
      %v3193 = vunpack.c.l.b16 %v3158
      %v3194 = vunpack.c.h.b16 %v3158
      %v3195 = vunpack.c.l.b16 %v3159
      %v3196 = vunpack.c.h.b16 %v3159
      %v3197 = vunpack.c.l.b16 %v3160
      %v3198 = vunpack.c.h.b16 %v3160
      %v3199 = vpack.c.b16 %v3193, %v3191
      %v3200 = vpack.c.b16 %v3194, %v3192
      %v3201 = vpack.c.b16 %v3197, %v3195
      %v3202 = vpack.c.b16 %v3198, %v3196
      %v3206 = vsel %vm567, %v3200, 0
      %v3209 = vsel %vm567, %v3202, 0
      %3211 = vmatprep.subr.bf16.mxu0 %v3162
      %3212 = vmatpush1.bf16.msra.mxu0 %v3161
      %3213 = vmatprep.subr.bf16.mxu0 %v3164
      %3214 = vmatpush1.bf16.msra.mxu0 %v3163
      %3215 = vmatprep.subr.bf16.mxu0 %v3166
      %3216 = vmatpush1.bf16.msra.mxu0 %v3165
      %3217 = vmatprep.subr.bf16.mxu0 %v3168
      %3218 = vmatpush1.bf16.msra.mxu0 %v3167
      %3219 = vmatprep.subr.bf16.mxu0 %v3170
      %3220 = vmatpush1.bf16.msra.mxu0 %v3169
      %3221 = vmatprep.subr.bf16.mxu0 %v3172
      %3222 = vmatpush1.bf16.msra.mxu0 %v3171
      %3223 = vmatprep.subr.bf16.mxu0 %v3174
      %3224 = vmatpush1.bf16.msra.mxu0 %v3173
      %3225 = vmatprep.subr.bf16.mxu0 %v3176
      %3226 = vmatpush1.bf16.msra.mxu0 %v3175
      %3227 = vmatprep.subr.bf16.mxu0 %v3178
      %3228 = vmatpush1.bf16.msra.mxu0 %v3177
      %3229 = vmatprep.subr.bf16.mxu0 0
      %3230 = vmatpush1.bf16.msra.mxu0 0
      %3231 = vmatprep.subr.bf16.mxu0 0
      %3232 = vmatpush1.bf16.msra.mxu0 0
      %3233 = vmatprep.subr.bf16.mxu0 0
      %3234 = vmatpush1.bf16.msra.mxu0 0
      %3235 = vmatprep.subr.bf16.mxu0 0
      %3236 = vmatpush1.bf16.msra.mxu0 0
      %3237 = vmatprep.subr.bf16.mxu0 0
      %3238 = vmatpush1.bf16.msra.mxu0 0
      %3239 = vmatprep.subr.bf16.mxu0 0
      %3240 = vmatpush1.bf16.msra.mxu0 0
      %3241 = vmatprep.subr.bf16.mxu0 0
      %3242 = vmatpush1.bf16.msra.mxu0 0
      %3243 = vmatprep.mubr.bf16.mxu0 %v3206
      %3244 = vmatmul.mubr.bf16.gmra.mrb[0].mxu0 %v3199
      %v3245 = vpop.f32.mrb[0].mxu0
      %v3246 = vadd.f32 %v3179, %v3245
      %v3247 = vpop.f32.mrb[0].mxu0
      %v3248 = vadd.f32 %v3180, %v3247
      %v3249 = vpop.f32.mrb[0].mxu0
      %v3250 = vadd.f32 %v3181, %v3249
      %v3251 = vpop.f32.mrb[0].mxu0
      %v3252 = vadd.f32 %v3182, %v3251
      %3253 = vmatprep.mubr.bf16.mxu0 %v3209
      %3254 = vmatmul.mubr.bf16.gmra.mrb[0].mxu0 %v3201
      %v3255 = vpop.f32.mrb[0].mxu0
      %v3256 = vadd.f32 %v3183, %v3255
      %v3257 = vpop.f32.mrb[0].mxu0
      %v3258 = vadd.f32 %v3184, %v3257
      %v3259 = vpop.f32.mrb[0].mxu0
      %v3260 = vadd.f32 %v3185, %v3259
      %v3261 = vpop.f32.mrb[0].mxu0
      %v3262 = vadd.f32 %v3186, %v3261
      %3263 = vdwg.mxu0
      %vm3264 = vcmp.ge.f32.partialorder %v3246, 0.0
      %vm3265 = vcmp.ge.f32.partialorder %v3248, 0.0
      %vm3266 = vcmp.ge.f32.partialorder %v3250, 0.0
      %vm3267 = vcmp.ge.f32.partialorder %v3252, 0.0
      %vm3268 = vcmp.ge.f32.partialorder %v3256, 0.0
      %vm3269 = vcmp.ge.f32.partialorder %v3258, 0.0
      %vm3270 = vcmp.ge.f32.partialorder %v3260, 0.0
      %vm3271 = vcmp.ge.f32.partialorder %v3262, 0.0
      %v3272 = vmul.f32 %v3246, 0.2
      %v3273 = vmul.f32 %v3248, 0.2
      %v3274 = vmul.f32 %v3250, 0.2
      %v3275 = vmul.f32 %v3252, 0.2
      %v3276 = vmul.f32 %v3256, 0.2
      %v3277 = vmul.f32 %v3258, 0.2
      %v3278 = vmul.f32 %v3260, 0.2
      %v3279 = vmul.f32 %v3262, 0.2
      %v3280 = vsel %vm3264, %v3246, %v3272
      %v3281 = vsel %vm3265, %v3248, %v3273
      %v3282 = vsel %vm3266, %v3250, %v3274
      %v3283 = vsel %vm3267, %v3252, %v3275
      %v3284 = vsel %vm3268, %v3256, %v3276
      %v3285 = vsel %vm3269, %v3258, %v3277
      %v3286 = vsel %vm3270, %v3260, %v3278
      %v3287 = vsel %vm3271, %v3262, %v3279
      %v3288 = vadd.f32 %v3280, %v3281
      %3289 = vadd.xlane.f32.xlu0 %v3288
      %v3290 = vpop.xlane.xlu0 %3289
      %v3291 = vadd.f32 %v3282, %v3283
      %3292 = vadd.xlane.f32.xlu0 %v3291
      %v3293 = vpop.xlane.xlu0 %3292
      %v3294 = vadd.f32 %v3284, %v3285
      %3295 = vadd.xlane.f32.xlu0 %v3294
      %v3296 = vpop.xlane.xlu0 %3295
      %v3297 = vadd.f32 %v3286, %v3287
      %3298 = vadd.xlane.f32.xlu0 %v3297
      %v3299 = vpop.xlane.xlu0 %3298
      %v3300 = vrcp.pop 256.0
      %v3301 = vmul.f32 %v3290, %v3300
      %v3302 = vmul.f32 %v3293, %v3300
      %v3303 = vmul.f32 %v3296, %v3300
      %v3304 = vmul.f32 %v3299, %v3300
      %v3305 = vld [vmem:[%s4] sm:$0xff]
      %v3306 = vld [vmem:[%s4 + $0x8] sm:$0xff]
      %v3307 = vld [vmem:[%s4 + $0x10] sm:$0xff]
      %v3308 = vld [vmem:[%s4 + $0x18] sm:$0xff]
      %v3309 = vmul.f32 %v3305, %v3301
      %v3310 = vmul.f32 %v3306, %v3302
      %v3311 = vmul.f32 %v3307, %v3303
      %v3312 = vmul.f32 %v3308, %v3304
      %vm3313 = vcmask 31744
      %v3314 = vsel %vm3313, %v3309, 0.0
      %v3315 = vsel %vm3313, %v3310, 0.0
      %v3316 = vadd.f32 %v3314, %v3315
      %v3317 = vsel %vm3313, %v3311, 0.0
      %v3318 = vadd.f32 %v3316, %v3317
      %v3319 = vsel %vm3313, %v3312, 0.0
      %v3320 = vadd.f32 %v3318, %v3319
      %v3321 = vrot.slane %v3320, 4
      %v3322 = vadd.f32 %v3320, %v3321
      %v3323 = vrot.slane %v3322, 2
      %v3324 = vadd.f32 %v3322, %v3323
      %v3325 = vrot.slane %v3324, 1
      %v3326 = vadd.f32 %v3324, %v3325
      %v3327 = vmax.f32 %v3326, 0.0
      %v3328 = vld [vmem:[%s5] sm:$0xff]
      %v3329 = vld [vmem:[%s5 + $0x8] sm:$0xff]
      %v3330 = vld [vmem:[%s5 + $0x10] sm:$0xff]
      %v3331 = vld [vmem:[%s5 + $0x18] sm:$0xff]
      %v3332 = vmul.f32 %v3328, %v3327
      %v3333 = vmul.f32 %v3329, %v3327
      %v3334 = vmul.f32 %v3330, %v3327
      %v3335 = vmul.f32 %v3331, %v3327
      %v3336 = vsel %vm3313, %v3332, 0.0
      %3337 = vadd.xlane.f32.xlu0 %v3336
      %v3338 = vpop.xlane.xlu0 %3337
      %v3339 = vsel %vm3313, %v3333, 0.0
      %3340 = vadd.xlane.f32.xlu0 %v3339
      %v3341 = vpop.xlane.xlu0 %3340
      %v3342 = vsel %vm3313, %v3334, 0.0
      %3343 = vadd.xlane.f32.xlu0 %v3342
      %v3344 = vpop.xlane.xlu0 %3343
      %v3345 = vsel %vm3313, %v3335, 0.0
      %3346 = vadd.xlane.f32.xlu0 %v3345
      %v3347 = vpop.xlane.xlu0 %3346
      %v3348 = vxor.u32 %v3338, 2147483648
      %v3349 = vxor.u32 %v3341, 2147483648
      %v3350 = vxor.u32 %v3344, 2147483648
      %v3351 = vxor.u32 %v3347, 2147483648
      %v3352 = vmul.f32 %v3348, 1.442695
      %v3353 = vpow.pop %v3352
      %v3354 = vmul.f32 %v3349, 1.442695
      %v3355 = vpow.pop %v3354
      %v3356 = vmul.f32 %v3350, 1.442695
      %v3357 = vpow.pop %v3356
      %v3358 = vmul.f32 %v3351, 1.442695
      %v3359 = vpow.pop %v3358
      %v3360 = vadd.f32 %v3353, 1.0
      %v3361 = vadd.f32 %v3355, 1.0
      %v3362 = vadd.f32 %v3357, 1.0
      %v3363 = vadd.f32 %v3359, 1.0
      %v3364 = vrcp.pop %v3360
      %v3365 = vmul.f32 1.0, %v3364
      %v3366 = vrcp.pop %v3361
      %v3367 = vmul.f32 1.0, %v3366
      %v3368 = vrcp.pop %v3362
      %v3369 = vmul.f32 1.0, %v3368
      %v3370 = vrcp.pop %v3363
      %v3371 = vmul.f32 1.0, %v3370
      %v3372 = vmul.f32 %v3280, %v3365
      %v3373 = vmul.f32 %v3281, %v3365
      %v3374 = vmul.f32 %v3282, %v3367
      %v3375 = vmul.f32 %v3283, %v3367
      %v3376 = vmul.f32 %v3284, %v3369
      %v3377 = vmul.f32 %v3285, %v3369
      %v3378 = vmul.f32 %v3286, %v3371
      %v3379 = vmul.f32 %v3287, %v3371
      %v3380 = vadd.f32 %v2723, %v3372
      %v3381 = vadd.f32 %v2724, %v3373
      %v3382 = vadd.f32 %v2725, %v3374
      %v3383 = vadd.f32 %v2726, %v3375
      %v3384 = vadd.f32 %v2727, %v3376
      %v3385 = vadd.f32 %v2728, %v3377
      %v3386 = vadd.f32 %v2729, %v3378
      %v3387 = vadd.f32 %v2730, %v3379
      %3396 = vrot.lane.b32.xlu0 %v3380, 32
      %v3397 = vpop.permute.xlu0 %3396
      %3398 = vrot.lane.b32.xlu0 %v3381, 32
      %v3399 = vpop.permute.xlu0 %3398
      %3400 = vrot.lane.b32.xlu0 %v3382, 32
      %v3401 = vpop.permute.xlu0 %3400
      %3402 = vrot.lane.b32.xlu0 %v3383, 32
      %v3403 = vpop.permute.xlu0 %3402
      %3404 = vrot.lane.b32.xlu0 %v3384, 32
      %v3405 = vpop.permute.xlu0 %3404
      %3406 = vrot.lane.b32.xlu0 %v3385, 32
      %v3407 = vpop.permute.xlu0 %3406
      %3408 = vrot.lane.b32.xlu0 %v3386, 32
      %v3409 = vpop.permute.xlu0 %3408
      %3410 = vrot.lane.b32.xlu0 %v3387, 32
      %v3411 = vpop.permute.xlu0 %3410
      %v3412 = vsel %vm2080, %v3397, %v3399
      %v3413 = vsel %vm2080, %v3401, %v3403
      %v3414 = vsel %vm2080, %v3405, %v3407
      %v3415 = vsel %vm2080, %v3409, %v3411
      %v3428 = vsel %vm2080, 0.0, %v3397
      %v3429 = vsel %vm2080, 0.0, %v3401
      %v3430 = vsel %vm2080, 0.0, %v3405
      %v3431 = vsel %vm2080, 0.0, %v3409
      %v3432 = vsel %vm2080, %v3399, 0.0
      %v3433 = vsel %vm2080, %v3403, 0.0
      %v3434 = vsel %vm2080, %v3407, 0.0
      %v3435 = vsel %vm2080, %v3411, 0.0
      %v3436 = vld [vmem:[%s3] ss:$8 sm:$0x3]
      %v3438 = vlaneseq
      %v3439 = vshrl.u32 %v3438, 7
      %v3440 = vsub.s32 0, %v3439
      %v3441 = vrot.slane %v3436, %v3440
      %v3442 = vlaneseq
      %v3443 = vshrl.u32 %v3442, 7
      %v3444 = vsub.s32 1, %v3443
      %v3445 = vrot.slane %v3436, %v3444
      %3446 = vrot.lane.b32.xlu0 %v3441, 15
      %v3447 = vpop.permute.xlu0 %3446
      %3448 = vrot.lane.b32.xlu0 %v3445, 15
      %v3449 = vpop.permute.xlu0 %3448
      %v3450 = vsel %vm2769, %v3447, %v3449
      %v3454 = vmul.f32 %v3428, %v3447
      %v3455 = vmul.f32 %v3412, %v3450
      %v3456 = vmul.f32 %v3432, %v3449
      %v3457 = vmul.f32 %v3429, %v3447
      %v3458 = vmul.f32 %v3413, %v3450
      %v3459 = vmul.f32 %v3433, %v3449
      %v3460 = vmul.f32 %v3430, %v3447
      %v3461 = vmul.f32 %v3414, %v3450
      %v3462 = vmul.f32 %v3434, %v3449
      %v3463 = vmul.f32 %v3431, %v3447
      %v3464 = vmul.f32 %v3415, %v3450
      %v3465 = vmul.f32 %v3435, %v3449
      %v3466 = vpack.c.bf16 %v3457, %v3454
      %v3467 = vpack.c.bf16 %v3458, %v3455
      %v3468 = vpack.c.bf16 %v3459, %v3456
      %v3469 = vpack.c.bf16 %v3463, %v3460
      %v3470 = vpack.c.bf16 %v3464, %v3461
      %v3471 = vpack.c.bf16 %v3465, %v3462
      %3478 = vrot.lane.b32.xlu0 %v3466, 113
      %v3479 = vpop.permute.xlu0 %3478
      %3480 = vrot.lane.b32.xlu0 %v3467, 113
      %v3481 = vpop.permute.xlu0 %3480
      %3482 = vrot.lane.b32.xlu0 %v3468, 113
      %v3483 = vpop.permute.xlu0 %3482
      %3484 = vrot.lane.b32.xlu0 %v3469, 113
      %v3485 = vpop.permute.xlu0 %3484
      %3486 = vrot.lane.b32.xlu0 %v3470, 113
      %v3487 = vpop.permute.xlu0 %3486
      %3488 = vrot.lane.b32.xlu0 %v3471, 113
      %v3489 = vpop.permute.xlu0 %3488
      %v3490 = vsel %vm2792, %v3479, %v3481
      %v3491 = vsel %vm2792, %v3481, %v3483
      %v3492 = vsel %vm2792, %v3485, %v3487
      %v3493 = vsel %vm2792, %v3487, %v3489
      %3498 = vst [vmem:[#allocation3] sm:$0xff] %v3490
      %3499 = vst [vmem:[#allocation3 + $0x8] sm:$0xff] %v3491
      %3500 = vst [vmem:[#allocation3 + $0x10] sm:$0xff] %v3492
      %3501 = vst [vmem:[#allocation3 + $0x18] sm:$0xff] %v3493
      %v3502 = vld [vmem:[%s2799] ss:$8 sm:$0x3]
      %v3504 = vlaneseq
      %v3505 = vshrl.u32 %v3504, 7
      %v3506 = vsub.s32 0, %v3505
      %v3507 = vrot.slane %v3502, %v3506
      %v3508 = vlaneseq
      %v3509 = vshrl.u32 %v3508, 7
      %v3510 = vsub.s32 1, %v3509
      %v3511 = vrot.slane %v3502, %v3510
      %3512 = vrot.lane.b32.xlu0 %v3507, 16
      %v3513 = vpop.permute.xlu0 %3512
      %3514 = vrot.lane.b32.xlu0 %v3511, 16
      %v3515 = vpop.permute.xlu0 %3514
      %v3516 = vsel %vm567, %v3513, %v3515
      %v3520 = vmul.f32 %v3428, %v3513
      %v3521 = vmul.f32 %v3412, %v3516
      %v3522 = vmul.f32 %v3432, %v3515
      %v3523 = vmul.f32 %v3429, %v3513
      %v3524 = vmul.f32 %v3413, %v3516
      %v3525 = vmul.f32 %v3433, %v3515
      %v3526 = vmul.f32 %v3430, %v3513
      %v3527 = vmul.f32 %v3414, %v3516
      %v3528 = vmul.f32 %v3434, %v3515
      %v3529 = vmul.f32 %v3431, %v3513
      %v3530 = vmul.f32 %v3415, %v3516
      %v3531 = vmul.f32 %v3435, %v3515
      %v3532 = vpack.c.bf16 %v3523, %v3520
      %v3533 = vpack.c.bf16 %v3524, %v3521
      %v3534 = vpack.c.bf16 %v3525, %v3522
      %v3535 = vpack.c.bf16 %v3529, %v3526
      %v3536 = vpack.c.bf16 %v3530, %v3527
      %v3537 = vpack.c.bf16 %v3531, %v3528
      %3544 = vrot.lane.b32.xlu0 %v3532, 112
      %v3545 = vpop.permute.xlu0 %3544
      %3546 = vrot.lane.b32.xlu0 %v3533, 112
      %v3547 = vpop.permute.xlu0 %3546
      %3548 = vrot.lane.b32.xlu0 %v3534, 112
      %v3549 = vpop.permute.xlu0 %3548
      %3550 = vrot.lane.b32.xlu0 %v3535, 112
      %v3551 = vpop.permute.xlu0 %3550
      %3552 = vrot.lane.b32.xlu0 %v3536, 112
      %v3553 = vpop.permute.xlu0 %3552
      %3554 = vrot.lane.b32.xlu0 %v3537, 112
      %v3555 = vpop.permute.xlu0 %3554
      %v3556 = vsel %vm2836, %v3545, %v3547
      %v3557 = vsel %vm2836, %v3547, %v3549
      %v3558 = vsel %vm2836, %v3551, %v3553
      %v3559 = vsel %vm2836, %v3553, %v3555
      %3564 = vst [vmem:[#allocation3 + $0x20] sm:$0xff] %v3556
      %3565 = vst [vmem:[#allocation3 + $0x28] sm:$0xff] %v3557
      %3566 = vst [vmem:[#allocation3 + $0x30] sm:$0xff] %v3558
      %3567 = vst [vmem:[#allocation3 + $0x38] sm:$0xff] %v3559
      %v3568 = vld [vmem:[%s2843] ss:$8 sm:$0x3]
      %v3570 = vlaneseq
      %v3571 = vshrl.u32 %v3570, 7
      %v3572 = vsub.s32 0, %v3571
      %v3573 = vrot.slane %v3568, %v3572
      %v3574 = vlaneseq
      %v3575 = vshrl.u32 %v3574, 7
      %v3576 = vsub.s32 1, %v3575
      %v3577 = vrot.slane %v3568, %v3576
      %3578 = vrot.lane.b32.xlu0 %v3573, 17
      %v3579 = vpop.permute.xlu0 %3578
      %3580 = vrot.lane.b32.xlu0 %v3577, 17
      %v3581 = vpop.permute.xlu0 %3580
      %v3582 = vsel %vm2858, %v3579, %v3581
      %v3586 = vmul.f32 %v3428, %v3579
      %v3587 = vmul.f32 %v3412, %v3582
      %v3588 = vmul.f32 %v3432, %v3581
      %v3589 = vmul.f32 %v3429, %v3579
      %v3590 = vmul.f32 %v3413, %v3582
      %v3591 = vmul.f32 %v3433, %v3581
      %v3592 = vmul.f32 %v3430, %v3579
      %v3593 = vmul.f32 %v3414, %v3582
      %v3594 = vmul.f32 %v3434, %v3581
      %v3595 = vmul.f32 %v3431, %v3579
      %v3596 = vmul.f32 %v3415, %v3582
      %v3597 = vmul.f32 %v3435, %v3581
      %v3598 = vpack.c.bf16 %v3589, %v3586
      %v3599 = vpack.c.bf16 %v3590, %v3587
      %v3600 = vpack.c.bf16 %v3591, %v3588
      %v3601 = vpack.c.bf16 %v3595, %v3592
      %v3602 = vpack.c.bf16 %v3596, %v3593
      %v3603 = vpack.c.bf16 %v3597, %v3594
      %3610 = vrot.lane.b32.xlu0 %v3598, 111
      %v3611 = vpop.permute.xlu0 %3610
      %3612 = vrot.lane.b32.xlu0 %v3599, 111
      %v3613 = vpop.permute.xlu0 %3612
      %3614 = vrot.lane.b32.xlu0 %v3600, 111
      %v3615 = vpop.permute.xlu0 %3614
      %3616 = vrot.lane.b32.xlu0 %v3601, 111
      %v3617 = vpop.permute.xlu0 %3616
      %3618 = vrot.lane.b32.xlu0 %v3602, 111
      %v3619 = vpop.permute.xlu0 %3618
      %3620 = vrot.lane.b32.xlu0 %v3603, 111
      %v3621 = vpop.permute.xlu0 %3620
      %v3622 = vsel %vm2881, %v3611, %v3613
      %v3623 = vsel %vm2881, %v3613, %v3615
      %v3624 = vsel %vm2881, %v3617, %v3619
      %v3625 = vsel %vm2881, %v3619, %v3621
      %3630 = vst [vmem:[#allocation3 + $0x40] sm:$0xff] %v3622
      %3631 = vst [vmem:[#allocation3 + $0x48] sm:$0xff] %v3623
      %3632 = vst [vmem:[#allocation3 + $0x50] sm:$0xff] %v3624
      %3633 = vst [vmem:[#allocation3 + $0x58] sm:$0xff] %v3625
      %v3634 = vld [vmem:[%s2888] ss:$8 sm:$0x3]
      %v3636 = vlaneseq
      %v3637 = vshrl.u32 %v3636, 7
      %v3638 = vsub.s32 0, %v3637
      %v3639 = vrot.slane %v3634, %v3638
      %v3640 = vlaneseq
      %v3641 = vshrl.u32 %v3640, 7
      %v3642 = vsub.s32 1, %v3641
      %v3643 = vrot.slane %v3634, %v3642
      %3644 = vrot.lane.b32.xlu0 %v3639, 31
      %v3645 = vpop.permute.xlu0 %3644
      %3646 = vrot.lane.b32.xlu0 %v3643, 31
      %v3647 = vpop.permute.xlu0 %3646
      %v3648 = vsel %vm2903, %v3645, %v3647
      %v3652 = vmul.f32 %v3428, %v3645
      %v3653 = vmul.f32 %v3412, %v3648
      %v3654 = vmul.f32 %v3432, %v3647
      %v3655 = vmul.f32 %v3429, %v3645
      %v3656 = vmul.f32 %v3413, %v3648
      %v3657 = vmul.f32 %v3433, %v3647
      %v3658 = vmul.f32 %v3430, %v3645
      %v3659 = vmul.f32 %v3414, %v3648
      %v3660 = vmul.f32 %v3434, %v3647
      %v3661 = vmul.f32 %v3431, %v3645
      %v3662 = vmul.f32 %v3415, %v3648
      %v3663 = vmul.f32 %v3435, %v3647
      %v3664 = vpack.c.bf16 %v3655, %v3652
      %v3665 = vpack.c.bf16 %v3656, %v3653
      %v3666 = vpack.c.bf16 %v3657, %v3654
      %v3667 = vpack.c.bf16 %v3661, %v3658
      %v3668 = vpack.c.bf16 %v3662, %v3659
      %v3669 = vpack.c.bf16 %v3663, %v3660
      %3676 = vrot.lane.b32.xlu0 %v3664, 97
      %v3677 = vpop.permute.xlu0 %3676
      %3678 = vrot.lane.b32.xlu0 %v3665, 97
      %v3679 = vpop.permute.xlu0 %3678
      %3680 = vrot.lane.b32.xlu0 %v3666, 97
      %v3681 = vpop.permute.xlu0 %3680
      %3682 = vrot.lane.b32.xlu0 %v3667, 97
      %v3683 = vpop.permute.xlu0 %3682
      %3684 = vrot.lane.b32.xlu0 %v3668, 97
      %v3685 = vpop.permute.xlu0 %3684
      %3686 = vrot.lane.b32.xlu0 %v3669, 97
      %v3687 = vpop.permute.xlu0 %3686
      %v3688 = vsel %vm2926, %v3677, %v3679
      %v3689 = vsel %vm2926, %v3679, %v3681
      %v3690 = vsel %vm2926, %v3683, %v3685
      %v3691 = vsel %vm2926, %v3685, %v3687
      %3696 = vst [vmem:[#allocation3 + $0x60] sm:$0xff] %v3688
      %3697 = vst [vmem:[#allocation3 + $0x68] sm:$0xff] %v3689
      %3698 = vst [vmem:[#allocation3 + $0x70] sm:$0xff] %v3690
      %3699 = vst [vmem:[#allocation3 + $0x78] sm:$0xff] %v3691
      %v3700 = vld [vmem:[%s2933] ss:$8 sm:$0x3]
      %v3702 = vlaneseq
      %v3703 = vshrl.u32 %v3702, 7
      %v3704 = vsub.s32 0, %v3703
      %v3705 = vrot.slane %v3700, %v3704
      %v3706 = vlaneseq
      %v3707 = vshrl.u32 %v3706, 7
      %v3708 = vsub.s32 1, %v3707
      %v3709 = vrot.slane %v3700, %v3708
      %3710 = vrot.lane.b32.xlu0 %v3705, 32
      %v3711 = vpop.permute.xlu0 %3710
      %3712 = vrot.lane.b32.xlu0 %v3709, 32
      %v3713 = vpop.permute.xlu0 %3712
      %v3714 = vsel %vm2080, %v3711, %v3713
      %v3718 = vmul.f32 %v3428, %v3711
      %v3719 = vmul.f32 %v3412, %v3714
      %v3720 = vmul.f32 %v3432, %v3713
      %v3721 = vmul.f32 %v3429, %v3711
      %v3722 = vmul.f32 %v3413, %v3714
      %v3723 = vmul.f32 %v3433, %v3713
      %v3724 = vmul.f32 %v3430, %v3711
      %v3725 = vmul.f32 %v3414, %v3714
      %v3726 = vmul.f32 %v3434, %v3713
      %v3727 = vmul.f32 %v3431, %v3711
      %v3728 = vmul.f32 %v3415, %v3714
      %v3729 = vmul.f32 %v3435, %v3713
      %v3730 = vpack.c.bf16 %v3721, %v3718
      %v3731 = vpack.c.bf16 %v3722, %v3719
      %v3732 = vpack.c.bf16 %v3723, %v3720
      %v3733 = vpack.c.bf16 %v3727, %v3724
      %v3734 = vpack.c.bf16 %v3728, %v3725
      %v3735 = vpack.c.bf16 %v3729, %v3726
      %3742 = vrot.lane.b32.xlu0 %v3730, 96
      %v3743 = vpop.permute.xlu0 %3742
      %3744 = vrot.lane.b32.xlu0 %v3731, 96
      %v3745 = vpop.permute.xlu0 %3744
      %3746 = vrot.lane.b32.xlu0 %v3732, 96
      %v3747 = vpop.permute.xlu0 %3746
      %3748 = vrot.lane.b32.xlu0 %v3733, 96
      %v3749 = vpop.permute.xlu0 %3748
      %3750 = vrot.lane.b32.xlu0 %v3734, 96
      %v3751 = vpop.permute.xlu0 %3750
      %3752 = vrot.lane.b32.xlu0 %v3735, 96
      %v3753 = vpop.permute.xlu0 %3752
      %v3754 = vsel %vm2970, %v3743, %v3745
      %v3755 = vsel %vm2970, %v3745, %v3747
      %v3756 = vsel %vm2970, %v3749, %v3751
      %v3757 = vsel %vm2970, %v3751, %v3753
      %3762 = vst [vmem:[#allocation3 + $0x80] sm:$0xff] %v3754
      %3763 = vst [vmem:[#allocation3 + $0x88] sm:$0xff] %v3755
      %3764 = vst [vmem:[#allocation3 + $0x90] sm:$0xff] %v3756
      %3765 = vst [vmem:[#allocation3 + $0x98] sm:$0xff] %v3757
      %v3766 = vld [vmem:[%s2977] ss:$8 sm:$0x3]
      %v3768 = vlaneseq
      %v3769 = vshrl.u32 %v3768, 7
      %v3770 = vsub.s32 0, %v3769
      %v3771 = vrot.slane %v3766, %v3770
      %v3772 = vlaneseq
      %v3773 = vshrl.u32 %v3772, 7
      %v3774 = vsub.s32 1, %v3773
      %v3775 = vrot.slane %v3766, %v3774
      %3776 = vrot.lane.b32.xlu0 %v3771, 33
      %v3777 = vpop.permute.xlu0 %3776
      %3778 = vrot.lane.b32.xlu0 %v3775, 33
      %v3779 = vpop.permute.xlu0 %3778
      %v3780 = vsel %vm2992, %v3777, %v3779
      %v3784 = vmul.f32 %v3428, %v3777
      %v3785 = vmul.f32 %v3412, %v3780
      %v3786 = vmul.f32 %v3432, %v3779
      %v3787 = vmul.f32 %v3429, %v3777
      %v3788 = vmul.f32 %v3413, %v3780
      %v3789 = vmul.f32 %v3433, %v3779
      %v3790 = vmul.f32 %v3430, %v3777
      %v3791 = vmul.f32 %v3414, %v3780
      %v3792 = vmul.f32 %v3434, %v3779
      %v3793 = vmul.f32 %v3431, %v3777
      %v3794 = vmul.f32 %v3415, %v3780
      %v3795 = vmul.f32 %v3435, %v3779
      %v3796 = vpack.c.bf16 %v3787, %v3784
      %v3797 = vpack.c.bf16 %v3788, %v3785
      %v3798 = vpack.c.bf16 %v3789, %v3786
      %v3799 = vpack.c.bf16 %v3793, %v3790
      %v3800 = vpack.c.bf16 %v3794, %v3791
      %v3801 = vpack.c.bf16 %v3795, %v3792
      %3808 = vrot.lane.b32.xlu0 %v3796, 95
      %v3809 = vpop.permute.xlu0 %3808
      %3810 = vrot.lane.b32.xlu0 %v3797, 95
      %v3811 = vpop.permute.xlu0 %3810
      %3812 = vrot.lane.b32.xlu0 %v3798, 95
      %v3813 = vpop.permute.xlu0 %3812
      %3814 = vrot.lane.b32.xlu0 %v3799, 95
      %v3815 = vpop.permute.xlu0 %3814
      %3816 = vrot.lane.b32.xlu0 %v3800, 95
      %v3817 = vpop.permute.xlu0 %3816
      %3818 = vrot.lane.b32.xlu0 %v3801, 95
      %v3819 = vpop.permute.xlu0 %3818
      %v3820 = vsel %vm3015, %v3809, %v3811
      %v3821 = vsel %vm3015, %v3811, %v3813
      %v3822 = vsel %vm3015, %v3815, %v3817
      %v3823 = vsel %vm3015, %v3817, %v3819
      %3828 = vst [vmem:[#allocation3 + $0xa0] sm:$0xff] %v3820
      %3829 = vst [vmem:[#allocation3 + $0xa8] sm:$0xff] %v3821
      %3830 = vst [vmem:[#allocation3 + $0xb0] sm:$0xff] %v3822
      %3831 = vst [vmem:[#allocation3 + $0xb8] sm:$0xff] %v3823
      %v3832 = vld [vmem:[%s3022] ss:$8 sm:$0x3]
      %v3834 = vlaneseq
      %v3835 = vshrl.u32 %v3834, 7
      %v3836 = vsub.s32 0, %v3835
      %v3837 = vrot.slane %v3832, %v3836
      %v3838 = vlaneseq
      %v3839 = vshrl.u32 %v3838, 7
      %v3840 = vsub.s32 1, %v3839
      %v3841 = vrot.slane %v3832, %v3840
      %3842 = vrot.lane.b32.xlu0 %v3837, 47
      %v3843 = vpop.permute.xlu0 %3842
      %3844 = vrot.lane.b32.xlu0 %v3841, 47
      %v3845 = vpop.permute.xlu0 %3844
      %v3846 = vsel %vm3037, %v3843, %v3845
      %v3850 = vmul.f32 %v3428, %v3843
      %v3851 = vmul.f32 %v3412, %v3846
      %v3852 = vmul.f32 %v3432, %v3845
      %v3853 = vmul.f32 %v3429, %v3843
      %v3854 = vmul.f32 %v3413, %v3846
      %v3855 = vmul.f32 %v3433, %v3845
      %v3856 = vmul.f32 %v3430, %v3843
      %v3857 = vmul.f32 %v3414, %v3846
      %v3858 = vmul.f32 %v3434, %v3845
      %v3859 = vmul.f32 %v3431, %v3843
      %v3860 = vmul.f32 %v3415, %v3846
      %v3861 = vmul.f32 %v3435, %v3845
      %v3862 = vpack.c.bf16 %v3853, %v3850
      %v3863 = vpack.c.bf16 %v3854, %v3851
      %v3864 = vpack.c.bf16 %v3855, %v3852
      %v3865 = vpack.c.bf16 %v3859, %v3856
      %v3866 = vpack.c.bf16 %v3860, %v3857
      %v3867 = vpack.c.bf16 %v3861, %v3858
      %3874 = vrot.lane.b32.xlu0 %v3862, 81
      %v3875 = vpop.permute.xlu0 %3874
      %3876 = vrot.lane.b32.xlu0 %v3863, 81
      %v3877 = vpop.permute.xlu0 %3876
      %3878 = vrot.lane.b32.xlu0 %v3864, 81
      %v3879 = vpop.permute.xlu0 %3878
      %3880 = vrot.lane.b32.xlu0 %v3865, 81
      %v3881 = vpop.permute.xlu0 %3880
      %3882 = vrot.lane.b32.xlu0 %v3866, 81
      %v3883 = vpop.permute.xlu0 %3882
      %3884 = vrot.lane.b32.xlu0 %v3867, 81
      %v3885 = vpop.permute.xlu0 %3884
      %v3886 = vsel %vm3060, %v3875, %v3877
      %v3887 = vsel %vm3060, %v3877, %v3879
      %v3888 = vsel %vm3060, %v3881, %v3883
      %v3889 = vsel %vm3060, %v3883, %v3885
      %3894 = vst [vmem:[#allocation3 + $0xc0] sm:$0xff] %v3886
      %3895 = vst [vmem:[#allocation3 + $0xc8] sm:$0xff] %v3887
      %3896 = vst [vmem:[#allocation3 + $0xd0] sm:$0xff] %v3888
      %3897 = vst [vmem:[#allocation3 + $0xd8] sm:$0xff] %v3889
      %v3898 = vld [vmem:[%s3067] ss:$8 sm:$0x3]
      %v3900 = vlaneseq
      %v3901 = vshrl.u32 %v3900, 7
      %v3902 = vsub.s32 0, %v3901
      %v3903 = vrot.slane %v3898, %v3902
      %v3904 = vlaneseq
      %v3905 = vshrl.u32 %v3904, 7
      %v3906 = vsub.s32 1, %v3905
      %v3907 = vrot.slane %v3898, %v3906
      %3908 = vrot.lane.b32.xlu0 %v3903, 48
      %v3909 = vpop.permute.xlu0 %3908
      %3910 = vrot.lane.b32.xlu0 %v3907, 48
      %v3911 = vpop.permute.xlu0 %3910
      %v3912 = vsel %vm3082, %v3909, %v3911
      %v3916 = vmul.f32 %v3428, %v3909
      %v3917 = vmul.f32 %v3412, %v3912
      %v3918 = vmul.f32 %v3432, %v3911
      %v3919 = vmul.f32 %v3429, %v3909
      %v3920 = vmul.f32 %v3413, %v3912
      %v3921 = vmul.f32 %v3433, %v3911
      %v3922 = vmul.f32 %v3430, %v3909
      %v3923 = vmul.f32 %v3414, %v3912
      %v3924 = vmul.f32 %v3434, %v3911
      %v3925 = vmul.f32 %v3431, %v3909
      %v3926 = vmul.f32 %v3415, %v3912
      %v3927 = vmul.f32 %v3435, %v3911
      %v3928 = vpack.c.bf16 %v3919, %v3916
      %v3929 = vpack.c.bf16 %v3920, %v3917
      %v3930 = vpack.c.bf16 %v3921, %v3918
      %v3931 = vpack.c.bf16 %v3925, %v3922
      %v3932 = vpack.c.bf16 %v3926, %v3923
      %v3933 = vpack.c.bf16 %v3927, %v3924
      %3940 = vrot.lane.b32.xlu0 %v3928, 80
      %v3941 = vpop.permute.xlu0 %3940
      %3942 = vrot.lane.b32.xlu0 %v3929, 80
      %v3943 = vpop.permute.xlu0 %3942
      %3944 = vrot.lane.b32.xlu0 %v3930, 80
      %v3945 = vpop.permute.xlu0 %3944
      %3946 = vrot.lane.b32.xlu0 %v3931, 80
      %v3947 = vpop.permute.xlu0 %3946
      %3948 = vrot.lane.b32.xlu0 %v3932, 80
      %v3949 = vpop.permute.xlu0 %3948
      %3950 = vrot.lane.b32.xlu0 %v3933, 80
      %v3951 = vpop.permute.xlu0 %3950
      %v3952 = vsel %vm3105, %v3941, %v3943
      %v3953 = vsel %vm3105, %v3943, %v3945
      %v3954 = vsel %vm3105, %v3947, %v3949
      %v3955 = vsel %vm3105, %v3949, %v3951
      %3960 = vst [vmem:[#allocation3 + $0xe0] sm:$0xff] %v3952
      %3961 = vst [vmem:[#allocation3 + $0xe8] sm:$0xff] %v3953
      %3962 = vst [vmem:[#allocation3 + $0xf0] sm:$0xff] %v3954
      %3963 = vst [vmem:[#allocation3 + $0xf8] sm:$0xff] %v3955
      %v3964 = vld [vmem:[%s3112] ss:$8 sm:$0x3]
      %v3966 = vlaneseq
      %v3967 = vshrl.u32 %v3966, 7
      %v3968 = vsub.s32 0, %v3967
      %v3969 = vrot.slane %v3964, %v3968
      %v3970 = vlaneseq
      %v3971 = vshrl.u32 %v3970, 7
      %v3972 = vsub.s32 1, %v3971
      %v3973 = vrot.slane %v3964, %v3972
      %3974 = vrot.lane.b32.xlu0 %v3969, 49
      %v3975 = vpop.permute.xlu0 %3974
      %3976 = vrot.lane.b32.xlu0 %v3973, 49
      %v3977 = vpop.permute.xlu0 %3976
      %v3978 = vsel %vm3127, %v3975, %v3977
      %v3982 = vmul.f32 %v3428, %v3975
      %v3983 = vmul.f32 %v3412, %v3978
      %v3984 = vmul.f32 %v3432, %v3977
      %v3985 = vmul.f32 %v3429, %v3975
      %v3986 = vmul.f32 %v3413, %v3978
      %v3987 = vmul.f32 %v3433, %v3977
      %v3988 = vmul.f32 %v3430, %v3975
      %v3989 = vmul.f32 %v3414, %v3978
      %v3990 = vmul.f32 %v3434, %v3977
      %v3991 = vmul.f32 %v3431, %v3975
      %v3992 = vmul.f32 %v3415, %v3978
      %v3993 = vmul.f32 %v3435, %v3977
      %v3994 = vpack.c.bf16 %v3985, %v3982
      %v3995 = vpack.c.bf16 %v3986, %v3983
      %v3996 = vpack.c.bf16 %v3987, %v3984
      %v3997 = vpack.c.bf16 %v3991, %v3988
      %v3998 = vpack.c.bf16 %v3992, %v3989
      %v3999 = vpack.c.bf16 %v3993, %v3990
      %4006 = vrot.lane.b32.xlu0 %v3994, 79
      %v4007 = vpop.permute.xlu0 %4006
      %4008 = vrot.lane.b32.xlu0 %v3995, 79
      %v4009 = vpop.permute.xlu0 %4008
      %4010 = vrot.lane.b32.xlu0 %v3996, 79
      %v4011 = vpop.permute.xlu0 %4010
      %4012 = vrot.lane.b32.xlu0 %v3997, 79
      %v4013 = vpop.permute.xlu0 %4012
      %4014 = vrot.lane.b32.xlu0 %v3998, 79
      %v4015 = vpop.permute.xlu0 %4014
      %4016 = vrot.lane.b32.xlu0 %v3999, 79
      %v4017 = vpop.permute.xlu0 %4016
      %v4018 = vsel %vm3150, %v4007, %v4009
      %v4019 = vsel %vm3150, %v4009, %v4011
      %v4020 = vsel %vm3150, %v4013, %v4015
      %v4021 = vsel %vm3150, %v4015, %v4017
      %4026 = vst [vmem:[#allocation3 + $0x100] sm:$0xff] %v4018
      %4027 = vst [vmem:[#allocation3 + $0x108] sm:$0xff] %v4019
      %4028 = vst [vmem:[#allocation3 + $0x110] sm:$0xff] %v4020
      %4029 = vst [vmem:[#allocation3 + $0x118] sm:$0xff] %v4021
      %v4030 = vld [vmem:[%s15] sm:$0xff]
      %v4031 = vld [vmem:[%s15 + $0x8] sm:$0xf]
      %v4032 = vld [vmem:[%s15 + $0xc] sm:$0xff]
      %v4033 = vld [vmem:[%s15 + $0x14] sm:$0xf]
      %v4034 = vld [vmem:[%s15 + $0x18] sm:$0xff]
      %v4035 = vld [vmem:[%s15 + $0x20] sm:$0xf]
      %v4036 = vld [vmem:[%s15 + $0x24] sm:$0xff]
      %v4037 = vld [vmem:[%s15 + $0x2c] sm:$0xf]
      %v4038 = vld [vmem:[#allocation3] sm:$0xff]
      %v4039 = vld [vmem:[#allocation3 + $0x8] sm:$0xff]
      %v4040 = vld [vmem:[#allocation3 + $0x10] sm:$0xff]
      %v4041 = vld [vmem:[#allocation3 + $0x18] sm:$0xff]
      %v4042 = vld [vmem:[#allocation3 + $0x20] sm:$0xff]
      %v4043 = vld [vmem:[#allocation3 + $0x28] sm:$0xff]
      %v4044 = vld [vmem:[#allocation3 + $0x30] sm:$0xff]
      %v4045 = vld [vmem:[#allocation3 + $0x38] sm:$0xff]
      %v4046 = vld [vmem:[#allocation3 + $0x40] sm:$0xff]
      %v4047 = vld [vmem:[#allocation3 + $0x48] sm:$0xff]
      %v4048 = vld [vmem:[#allocation3 + $0x50] sm:$0xff]
      %v4049 = vld [vmem:[#allocation3 + $0x58] sm:$0xff]
      %v4050 = vld [vmem:[#allocation3 + $0x60] sm:$0xff]
      %v4051 = vld [vmem:[#allocation3 + $0x68] sm:$0xff]
      %v4052 = vld [vmem:[#allocation3 + $0x70] sm:$0xff]
      %v4053 = vld [vmem:[#allocation3 + $0x78] sm:$0xff]
      %v4054 = vld [vmem:[#allocation3 + $0x80] sm:$0xff]
      %v4055 = vld [vmem:[#allocation3 + $0x88] sm:$0xff]
      %v4056 = vld [vmem:[#allocation3 + $0x90] sm:$0xff]
      %v4057 = vld [vmem:[#allocation3 + $0x98] sm:$0xff]
      %v4058 = vld [vmem:[#allocation3 + $0xa0] sm:$0xff]
      %v4059 = vld [vmem:[#allocation3 + $0xa8] sm:$0xff]
      %v4060 = vld [vmem:[#allocation3 + $0xb0] sm:$0xff]
      %v4061 = vld [vmem:[#allocation3 + $0xb8] sm:$0xff]
      %v4062 = vld [vmem:[#allocation3 + $0xc0] sm:$0xff]
      %v4063 = vld [vmem:[#allocation3 + $0xc8] sm:$0xff]
      %v4064 = vld [vmem:[#allocation3 + $0xd0] sm:$0xff]
      %v4065 = vld [vmem:[#allocation3 + $0xd8] sm:$0xff]
      %v4066 = vld [vmem:[#allocation3 + $0xe0] sm:$0xff]
      %v4067 = vld [vmem:[#allocation3 + $0xe8] sm:$0xff]
      %v4068 = vld [vmem:[#allocation3 + $0xf0] sm:$0xff]
      %v4069 = vld [vmem:[#allocation3 + $0xf8] sm:$0xff]
      %v4070 = vld [vmem:[#allocation3 + $0x100] sm:$0xff]
      %v4071 = vld [vmem:[#allocation3 + $0x108] sm:$0xff]
      %v4072 = vld [vmem:[#allocation3 + $0x110] sm:$0xff]
      %v4073 = vld [vmem:[#allocation3 + $0x118] sm:$0xff]
      %v4074 = vld [vmem:[%s14] sm:$0xff]
      %v4075 = vld [vmem:[%s14 + $0x8] sm:$0xff]
      %v4076 = vld [vmem:[%s14 + $0x10] sm:$0xff]
      %v4077 = vld [vmem:[%s14 + $0x18] sm:$0xff]
      %4079 = vset.pattern.permute.xlu0 8
      %4080 = vperm.xlu0 %4079, %v4074
      %v4081 = vpop.permute.xlu0 %4080
      %4084 = vset.pattern.permute.xlu0 8
      %4085 = vperm.xlu0 %4084, %v4075
      %v4086 = vpop.permute.xlu0 %4085
      %4089 = vset.pattern.permute.xlu0 8
      %4090 = vperm.xlu0 %4089, %v4076
      %v4091 = vpop.permute.xlu0 %4090
      %4094 = vset.pattern.permute.xlu0 8
      %4095 = vperm.xlu0 %4094, %v4077
      %v4096 = vpop.permute.xlu0 %4095
      %v4106 = vunpack.c.l.b16 %v4030
      %v4107 = vunpack.c.h.b16 %v4030
      %v4108 = vunpack.c.l.b16 %v4031
      %v4109 = vunpack.c.l.b16 %v4032
      %v4110 = vunpack.c.h.b16 %v4032
      %v4111 = vunpack.c.l.b16 %v4033
      %v4112 = vunpack.c.l.b16 %v4034
      %v4113 = vunpack.c.h.b16 %v4034
      %v4114 = vunpack.c.l.b16 %v4035
      %v4115 = vunpack.c.l.b16 %v4036
      %v4116 = vunpack.c.h.b16 %v4036
      %v4117 = vunpack.c.l.b16 %v4037
      %v4118 = vpack.c.b16 %v4109, %v4106
      %v4119 = vpack.c.b16 %v4110, %v4107
      %v4120 = vpack.c.b16 %v4111, %v4108
      %v4121 = vpack.c.b16 %v4115, %v4112
      %v4122 = vpack.c.b16 %v4116, %v4113
      %v4123 = vpack.c.b16 %v4117, %v4114
      %v4129 = vsel %vm2080, %v4120, 0
      %v4132 = vsel %vm2080, %v4123, 0
      %4134 = vmatprep.subr.bf16.mxu0 %v4039
      %4135 = vmatpush1.bf16.msra.mxu0 %v4038
      %4136 = vmatprep.subr.bf16.mxu0 %v4041
      %4137 = vmatpush1.bf16.msra.mxu0 %v4040
      %4138 = vmatprep.subr.bf16.mxu0 %v4043
      %4139 = vmatpush1.bf16.msra.mxu0 %v4042
      %4140 = vmatprep.subr.bf16.mxu0 %v4045
      %4141 = vmatpush1.bf16.msra.mxu0 %v4044
      %4142 = vmatprep.subr.bf16.mxu0 %v4047
      %4143 = vmatpush1.bf16.msra.mxu0 %v4046
      %4144 = vmatprep.subr.bf16.mxu0 %v4049
      %4145 = vmatpush1.bf16.msra.mxu0 %v4048
      %4146 = vmatprep.subr.bf16.mxu0 %v4051
      %4147 = vmatpush1.bf16.msra.mxu0 %v4050
      %4148 = vmatprep.subr.bf16.mxu0 %v4053
      %4149 = vmatpush1.bf16.msra.mxu0 %v4052
      %4150 = vmatprep.subr.bf16.mxu0 %v4055
      %4151 = vmatpush1.bf16.msra.mxu0 %v4054
      %4152 = vmatprep.subr.bf16.mxu0 %v4057
      %4153 = vmatpush1.bf16.msra.mxu0 %v4056
      %4154 = vmatprep.subr.bf16.mxu0 %v4059
      %4155 = vmatpush1.bf16.msra.mxu0 %v4058
      %4156 = vmatprep.subr.bf16.mxu0 %v4061
      %4157 = vmatpush1.bf16.msra.mxu0 %v4060
      %4158 = vmatprep.subr.bf16.mxu0 %v4063
      %4159 = vmatpush1.bf16.msra.mxu0 %v4062
      %4160 = vmatprep.subr.bf16.mxu0 %v4065
      %4161 = vmatpush1.bf16.msra.mxu0 %v4064
      %4162 = vmatprep.subr.bf16.mxu0 %v4067
      %4163 = vmatpush1.bf16.msra.mxu0 %v4066
      %4164 = vmatprep.subr.bf16.mxu0 %v4069
      %4165 = vmatpush1.bf16.msra.mxu0 %v4068
      %4166 = vmatprep.mubr.bf16.mxu0 %v4119
      %4167 = vmatmul.mubr.bf16.gmra.mrb[0].mxu0 %v4118
      %v4168 = vpop.f32.mrb[0].mxu0
      %v4169 = vadd.f32 %v4081, %v4168
      %v4170 = vpop.f32.mrb[0].mxu0
      %v4171 = vadd.f32 %v4081, %v4170
      %v4172 = vpop.f32.mrb[0].mxu0
      %v4173 = vadd.f32 %v4086, %v4172
      %v4174 = vpop.f32.mrb[0].mxu0
      %v4175 = vadd.f32 %v4086, %v4174
      %4176 = vmatprep.mubr.bf16.mxu0 %v4122
      %4177 = vmatmul.mubr.bf16.gmra.mrb[0].mxu0 %v4121
      %v4178 = vpop.f32.mrb[0].mxu0
      %v4179 = vadd.f32 %v4091, %v4178
      %v4180 = vpop.f32.mrb[0].mxu0
      %v4181 = vadd.f32 %v4091, %v4180
      %v4182 = vpop.f32.mrb[0].mxu0
      %v4183 = vadd.f32 %v4096, %v4182
      %v4184 = vpop.f32.mrb[0].mxu0
      %v4185 = vadd.f32 %v4096, %v4184
      %4186 = vdwg.mxu0
      %4187 = vmatprep.subr.bf16.mxu0 %v4071
      %4188 = vmatpush1.bf16.msra.mxu0 %v4070
      %4189 = vmatprep.subr.bf16.mxu0 %v4073
      %4190 = vmatpush1.bf16.msra.mxu0 %v4072
      %4191 = vmatprep.subr.bf16.mxu0 0
      %4192 = vmatpush1.bf16.msra.mxu0 0
      %4193 = vmatprep.subr.bf16.mxu0 0
      %4194 = vmatpush1.bf16.msra.mxu0 0
      %4195 = vmatprep.subr.bf16.mxu0 0
      %4196 = vmatpush1.bf16.msra.mxu0 0
      %4197 = vmatprep.subr.bf16.mxu0 0
      %4198 = vmatpush1.bf16.msra.mxu0 0
      %4199 = vmatprep.subr.bf16.mxu0 0
      %4200 = vmatpush1.bf16.msra.mxu0 0
      %4201 = vmatprep.subr.bf16.mxu0 0
      %4202 = vmatpush1.bf16.msra.mxu0 0
      %4203 = vmatprep.subr.bf16.mxu0 0
      %4204 = vmatpush1.bf16.msra.mxu0 0
      %4205 = vmatprep.subr.bf16.mxu0 0
      %4206 = vmatpush1.bf16.msra.mxu0 0
      %4207 = vmatprep.subr.bf16.mxu0 0
      %4208 = vmatpush1.bf16.msra.mxu0 0
      %4209 = vmatprep.subr.bf16.mxu0 0
      %4210 = vmatpush1.bf16.msra.mxu0 0
      %4211 = vmatprep.subr.bf16.mxu0 0
      %4212 = vmatpush1.bf16.msra.mxu0 0
      %4213 = vmatprep.subr.bf16.mxu0 0
      %4214 = vmatpush1.bf16.msra.mxu0 0
      %4215 = vmatprep.subr.bf16.mxu0 0
      %4216 = vmatpush1.bf16.msra.mxu0 0
      %4217 = vmatprep.subr.bf16.mxu0 0
      %4218 = vmatpush1.bf16.msra.mxu0 0
      %4219 = vmatprep.mubr.bf16.mxu0 0
      %4220 = vmatmul.mubr.bf16.gmra.mrb[0].mxu0 %v4129
      %v4221 = vpop.f32.mrb[0].mxu0
      %v4222 = vadd.f32 %v4169, %v4221
      %v4223 = vpop.f32.mrb[0].mxu0
      %v4224 = vadd.f32 %v4171, %v4223
      %v4225 = vpop.f32.mrb[0].mxu0
      %v4226 = vadd.f32 %v4173, %v4225
      %v4227 = vpop.f32.mrb[0].mxu0
      %v4228 = vadd.f32 %v4175, %v4227
      %4229 = vmatprep.mubr.bf16.mxu0 0
      %4230 = vmatmul.mubr.bf16.gmra.mrb[0].mxu0 %v4132
      %v4231 = vpop.f32.mrb[0].mxu0
      %v4232 = vadd.f32 %v4179, %v4231
      %v4233 = vpop.f32.mrb[0].mxu0
      %v4234 = vadd.f32 %v4181, %v4233
      %v4235 = vpop.f32.mrb[0].mxu0
      %v4236 = vadd.f32 %v4183, %v4235
      %v4237 = vpop.f32.mrb[0].mxu0
      %v4238 = vadd.f32 %v4185, %v4237
      %4239 = vdwg.mxu0
      %4240 = vst [vmem:[%s521] sm:$0xff] %v4222
      %4241 = vst [vmem:[%s521 + $0x8] sm:$0xff] %v4224
      %4242 = vst [vmem:[%s521 + $0x10] sm:$0xff] %v4226
      %4243 = vst [vmem:[%s521 + $0x18] sm:$0xff] %v4228
      %4244 = vst [vmem:[%s521 + $0x20] sm:$0xff] %v4232
      %4245 = vst [vmem:[%s521 + $0x28] sm:$0xff] %v4234
      %4246 = vst [vmem:[%s521 + $0x30] sm:$0xff] %v4236
      %4247 = vst [vmem:[%s521 + $0x38] sm:$0xff] %v4238
      %p4248 = scmp.lt.s32.totalorder %s27, 1
      %s4249 = scalar_select %p4248, %s27, 1
      %s4250 = smul.addr %s4249, 8
      %s4251 = smul.addr %s4250, 8
      %s4252 = scalar_lea.vmem %s16, %s4251
      // Predicated region
      $region85: #{_lambda_.1} parent=83 // pred_check
        %p4253 = pneg %p386
      $region86: #{_lambda_.1} parent=83 // pred_check_branch
        %4255 = sbr.rel (%p4253) target = $region88
      $region87: #{_lambda_.1} parent=83 // pred_region
        _
      $region88: #{_lambda_.1} parent=83 // pred_fallthru
        _
    $region84: #{_lambda_.1} parent=5 // pred_fallthru
      _
    %p4256 = scmp.le.s32.totalorder 2, %s22
    // Predicated region
    $region89: #{_lambda_.1} parent=5 // pred_check
      %p4257 = pneg %p4256
    $region90: #{_lambda_.1} parent=5 // pred_check_branch
      %4259 = sbr.rel (%p4257) target = $region92
    $region91: #{_lambda_.1} parent=5 // pred_region
      %s4260 = ssub.s32 %s22, 2
      // Predicated region
      $region93: #{_lambda_.1} parent=91 // pred_check
        %p4261 = pneg %p392
      $region94: #{_lambda_.1} parent=91 // pred_check_branch
        %4263 = sbr.rel (%p4261) target = $region96
      $region95: #{_lambda_.1} parent=91 // pred_region
        %p4264 = scmp.lt.s32.totalorder %s28, 1
        %s4265 = scalar_select %p4264, %s28, 1
        %s4266 = smul.addr %s4265, 8
        %s4267 = smul.addr %s4266, 8
        %s4268 = scalar_lea.vmem %s16, %s4267
      $region96: #{_lambda_.1} parent=91 // pred_fallthru
        _
    $region92: #{_lambda_.1} parent=5 // pred_fallthru
      _
  $region6: #{_lambda_.1} parent=0 // loop_footer
    %s26 = sadd.s32 1, %s22
  $region7: #{_lambda_.1} parent=0 // loop_footer_branch
    %21 = sbr.rel target = $region3
  $region8: #{_lambda_.1} parent=0 // loop_exit
    _

</llo_original>
